<compile_context>
chip_gen: v6e
topology: v6e:2x2x1
jax: 0.10.0
libtpu: 0.0.40
codegen_flags: <defaults>
</compile_context>

<pallas_src>
import math
import functools

import numpy as np
import jax
import jax.numpy as jnp
from jax.experimental import pallas as pl
from jax.experimental.pallas import tpu as pltpu

# ---------------- hyper-parameters (small, synthetic) ----------------
B = 2                     # batch
T = 16                    # Audio_ct (time)
CODEC = 8                 # Audio_Codec_Size
ENC = 16                  # Encoder.Size
DIFF = 32                 # Diffusion.Size
FFN = DIFF * 4
STACK = 2                 # Diffusion.WaveNet.Stack
KERNEL = 3                # Diffusion.WaveNet.Kernel_Size
DIL = 2                   # Diffusion.WaveNet.Dilation
PAD = (KERNEL - 1) * DIL // 2
MAX_STEP = 100            # Diffusion.Max_Step
PROMPT_D = 16             # Speech_Prompter.Size
PROMPT_T = 8              # prompt length
EPS = 1e-5
SCAL_N = 8                # per-batch scalar block width


# ---------------- packed-weight layouts (static, used in-kernel) ----------------
def _build_w_layout():
    mats = [
        ('pre_w',     CODEC,            DIFF),
        ('enc_pre_w', ENC,              DIFF),
        ('enc_w1',    DIFF,             FFN),
        ('enc_w2',    FFN,              DIFF),
        ('step_w1r',  DIFF,             FFN),
        ('step_w2',   FFN,              DIFF),
        ('cond_w',    DIFF,             STACK * 2 * DIFF),
        ('wn_tap_w',  STACK * 3 * DIFF, 2 * DIFF),
        ('wn_step_w', DIFF,             STACK * DIFF),
        ('post_w',    DIFF,             CODEC),
    ]
    off, layout = 0, {}
    for name, r, c in mats:
        layout[name] = (off, r, c)
        off += ((r + 15) // 16) * 16          # bf16 sublane-tile aligned row starts
    return layout, ((off + 15) // 16) * 16


def _build_v_layout():
    vecs = [
        ('pre_b', DIFF), ('pre_ln_g', DIFF), ('pre_ln_b', DIFF),
        ('enc_pre_b', DIFF), ('enc_b1', FFN), ('enc_b2', DIFF),
        ('enc_ln_g', DIFF), ('enc_ln_b', DIFF),
        ('step_w1t', FFN), ('step_b1', FFN), ('step_b2', DIFF),
        ('step_ln_g', DIFF), ('step_ln_b', DIFF),
        ('wn_b', STACK * 2 * DIFF), ('wn_step_b', STACK * DIFF),
        ('post_b', CODEC), ('emb_w', DIFF // 2),
    ]
    off, layout = 0, {}
    for name, n in vecs:
        layout[name] = (off, n)
        off += ((n + 127) // 128) * 128       # lane-tile aligned starts
    return layout, off


W_LAYOUT, W_ROWS = _build_w_layout()
V_LAYOUT, V_COLS = _build_v_layout()


# ---------------- shared math helpers (in-kernel and reference) ----------------
def _layernorm(h, gamma, beta):
    mu = jnp.mean(h, axis=-1, keepdims=True)
    var = jnp.mean(jnp.square(h - mu), axis=-1, keepdims=True)
    return (h - mu) * jax.lax.rsqrt(var + EPS) * gamma + beta


def _w(ref, name):
    off, r, c = W_LAYOUT[name]
    return ref[off:off + r, 0:c]              # static slice of the bf16 weight slab


def _wn_tap(ref, layer):
    off, _, c = W_LAYOUT['wn_tap_w']
    r0 = off + layer * 3 * DIFF
    return ref[r0:r0 + 3 * DIFF, 0:c]


def _v(ref, name):
    off, n = V_LAYOUT[name]
    return ref[0:1, off:off + n]               # static slice of the f32 vector slab


def _flatten_tc(x2):
    # (B*T, CODEC) -> (B, T*CODEC) row-major in (t, c); built from static lane
    # concatenations (avoids relying on a sublane->lane merge reshape in Mosaic).
    x3 = x2.reshape(B, T, CODEC)
    return jnp.concatenate([x3[:, t, :] for t in range(T)], axis=-1)


# ---------------- fused Pallas kernel ----------------
def _network_core(resid, scal, feat_ref, noise_ref, enc_ref, w_ref, v_ref, out_ref):
    f32, bf16 = jnp.float32, jnp.bfloat16

    # per-row (B*T) views of the per-batch scalars / the within-batch time index
    scal_rows = jnp.broadcast_to(scal[:, None, :], (B, T, SCAL_N)).reshape(B * T, SCAL_N)
    t_pos = jax.lax.broadcasted_iota(jnp.int32, (B, T, 1), 1).reshape(B * T, 1)
    mask = (t_pos.astype(f32) < scal_rows[:, 5:6]).astype(f32)             # (B*T, 1)

    # ---- q-sample fused (f32): noised = feat*sqrt(acp) + noise*sqrt(1-acp) ----
    feat2 = feat_ref[...].reshape(B * T, CODEC)
    noise2 = noise_ref[...].reshape(B * T, CODEC)
    noised = feat2 * scal_rows[:, 1:2] + noise2 * scal_rows[:, 2:3]        # (B*T, CODEC)

    # ---- diffusion-step FFN + LayerNorm (input: Diffusion_Embedding output) ----
    # emb = [t, sin, cos]; the t-row of step_w1 is applied as a cheap VPU axpy.
    t_col = scal[:, 0:1]                                                   # (B, 1)
    h = jnp.dot(resid.astype(bf16), _w(w_ref, 'step_w1r'), preferred_element_type=f32)
    h = jax.nn.silu(h + t_col * _v(v_ref, 'step_w1t') + _v(v_ref, 'step_b1'))
    h = jnp.dot(h.astype(bf16), _w(w_ref, 'step_w2'), preferred_element_type=f32) \
        + _v(v_ref, 'step_b2')
    step = _layernorm(h + resid, _v(v_ref, 'step_ln_g'), _v(v_ref, 'step_ln_b'))  # (B, DIFF)

    # ---- prenet: Conv1d(k=1) -> LayerNorm -> SiLU ----
    x = jnp.dot(noised.astype(bf16), _w(w_ref, 'pre_w'), preferred_element_type=f32) \
        + _v(v_ref, 'pre_b')
    x = jax.nn.silu(_layernorm(x, _v(v_ref, 'pre_ln_g'), _v(v_ref, 'pre_ln_b')))  # (B*T, DIFF)

    # ---- encoding prenet -> FFN -> residual -> LayerNorm (loop-invariant) ----
    enc2 = enc_ref[...].reshape(B * T, ENC).astype(bf16)
    e0 = jnp.dot(enc2, _w(w_ref, 'enc_pre_w'), preferred_element_type=f32) \
        + _v(v_ref, 'enc_pre_b')
    eh = jax.nn.silu(jnp.dot(e0.astype(bf16), _w(w_ref, 'enc_w1'),
                             preferred_element_type=f32) + _v(v_ref, 'enc_b1'))
    eh = jnp.dot(eh.astype(bf16), _w(w_ref, 'enc_w2'), preferred_element_type=f32) \
        + _v(v_ref, 'enc_b2')
    cond = _layernorm(eh + e0, _v(v_ref, 'enc_ln_g'), _v(v_ref, 'enc_ln_b'))       # (B*T, DIFF)
    # hoisted: ALL layers' conditioning projections in one (B*T,32)@(32,128) matmul
    cond_all = jnp.dot(cond.astype(bf16), _w(w_ref, 'cond_w'),
                       preferred_element_type=f32)                                 # (B*T, STACK*2D)

    # ---- step conditioning for ALL layers in one matmul, expanded to rows once ----
    step_c = jnp.dot(step.astype(bf16), _w(w_ref, 'wn_step_w'),
                     preferred_element_type=f32) + _v(v_ref, 'wn_step_b')          # (B, STACK*D)
    step_rows = jnp.broadcast_to(step_c[:, None, :],
                                 (B, T, STACK * DIFF)).reshape(B * T, STACK * DIFF)

    # ---- WaveNet stack: XLU-roll im2col -> one (B*T,96)@(96,64) bf16 matmul/layer ----
    wn_b = _v(v_ref, 'wn_b')                                # conv_b + cond_b, packed per layer
    skips = jnp.zeros((B * T, DIFF), f32)
    for l in range(STACK):                                  # static unroll (STACK == 2)
        xq = x + step_rows[:, l * DIFF:(l + 1) * DIFF]
        # rolls over the folded (B*T) axis; the t<PAD / t>=T-PAD masks also kill
        # any rows that crossed a batch boundary, so the fold is exact.
        x_m = jnp.where(t_pos >= PAD, pltpu.roll(xq, shift=PAD, axis=0), 0.0)
        x_p = jnp.where(t_pos < T - PAD, pltpu.roll(xq, shift=B * T - PAD, axis=0), 0.0)
        slab = jnp.concatenate([x_m, xq, x_p], axis=-1).astype(bf16)       # (B*T, 3*DIFF)
        acc = (jnp.dot(slab, _wn_tap(w_ref, l), preferred_element_type=f32)
               + cond_all[:, l * 2 * DIFF:(l + 1) * 2 * DIFF]
               + wn_b[:, l * 2 * DIFF:(l + 1) * 2 * DIFF])
        gate = jnp.tanh(acc[:, :DIFF]) * jax.nn.sigmoid(acc[:, DIFF:]) * mask
        x = x + gate                                                       # residual
        skips = skips + gate                                               # skip
    skips = skips * (1.0 / math.sqrt(STACK))

    # ---- postnet: SiLU -> Conv1d(k=1), masked ----
    eps = (jnp.dot(jax.nn.silu(skips).astype(bf16), _w(w_ref, 'post_w'),
                   preferred_element_type=f32) + _v(v_ref, 'post_b')) * mask        # (B*T, CODEC)

    # ---- x0 recovery fused (f32): starts = noised*sqrt(1/acp) - eps*sqrt(1/acp-1) ----
    starts = noised * scal_rows[:, 3:4] - eps * scal_rows[:, 4:5]

    # lane-dense (B, 256) store: [eps | starts], each flattened to 128 lanes
    out_ref[...] = jnp.concatenate([_flatten_tc(eps), _flatten_tc(starts)], axis=-1)


def kernel_trig(scal_ref, feat_ref, noise_ref, enc_ref, w_ref, v_ref, out_ref):
    # Diffusion_Embedding fully in-kernel (sin/cos on the VPU/EUP).
    scal = scal_ref[...]
    arg = scal[:, 0:1] * _v(v_ref, 'emb_w') * (2.0 * math.pi)              # (B, DIFF//2)
    resid = jnp.concatenate([jnp.sin(arg), jnp.cos(arg)], axis=-1)         # (B, DIFF)
    _network_core(resid, scal, feat_ref, noise_ref, enc_ref, w_ref, v_ref, out_ref)


def kernel_premix(sincos_ref, scal_ref, feat_ref, noise_ref, enc_ref, w_ref, v_ref, out_ref):
    # Fallback: the (t-dependent only) sinusoid is fed from the wrapper.
    _network_core(sincos_ref[...], scal_ref[...], feat_ref, noise_ref, enc_ref,
                  w_ref, v_ref, out_ref)


# ---------------- pallas_call wrapper (single fused launch, single grid step) ----
def fused_forward(wslab, vslab, scal, feat, noise, enc, sincos, trig_in_kernel):
    def fullspec(a):
        return pl.BlockSpec(a.shape, lambda i, nd=a.ndim: (0,) * nd)

    if trig_in_kernel:
        kernel, operands = kernel_trig, [scal, feat, noise, enc, wslab, vslab]
    else:
        kernel, operands = kernel_premix, [sincos, scal, feat, noise, enc, wslab, vslab]

    return pl.pallas_call(
        kernel,
        out_shape=jax.ShapeDtypeStruct((B, 2 * T * CODEC), jnp.float32),
        grid=(1,),
        in_specs=[fullspec(a) for a in operands],
        out_specs=pl.BlockSpec((B, 2 * T * CODEC), lambda i: (0, 0)),
        compiler_params=pltpu.CompilerParams(
            dimension_semantics=("arbitrary",),
            vmem_limit_bytes=32 * 1024 * 1024),
    )(*operands)


# ---------------- forward glue ----------------
def sample_noise_and_t(key, shape):
    kn, kt = jax.random.split(key)
    noises = jax.random.normal(kn, shape, jnp.float32)
    t = jax.random.randint(kt, (shape[0],), 0, MAX_STEP)
    return noises, t


def diffusion_forward(p, packed, buffers, trig_in_kernel, features_nct, encodings_nct,
                      lengths, speech_prompts_nct, key):
    # TODO(synk): speech_prompts only feed the LinearAttention/FilM branch, which
    # never runs here (Apply_in_Stack > Stack) and whose class is not provided.
    del speech_prompts_nct
    wslab, vslab = packed

    noises_nct, t = sample_noise_and_t(key, features_nct.shape)
    t_norm = t.astype(jnp.float32) / MAX_STEP
    zeros = jnp.zeros_like(t_norm)
    scal = jnp.stack([t_norm,
                      buffers['sqrt_acp'][t], buffers['sqrt_om_acp'][t],
                      buffers['sqrt_recip_acp'][t], buffers['sqrt_recipm1_acp'][t],
                      lengths.astype(jnp.float32), zeros, zeros], axis=-1)     # (B, 8)

    if trig_in_kernel:
        sincos = None                                       # never built / DMAd
    else:
        arg = t_norm[:, None] * p['emb_w'][None, :] * (2.0 * math.pi)
        sincos = jnp.concatenate([jnp.sin(arg), jnp.cos(arg)], axis=-1)        # (B, DIFF)

    feat = jnp.transpose(features_nct, (0, 2, 1))           # NCT -> NTC (tiny; kept)
    noi = jnp.transpose(noises_nct, (0, 2, 1))
    enc = jnp.transpose(encodings_nct, (0, 2, 1))

    out = fused_forward(wslab, vslab, scal, feat, noi, enc, sincos, trig_in_kernel)
    eps = out[:, :T * CODEC].reshape(B, T, CODEC)
    starts = out[:, T * CODEC:].reshape(B, T, CODEC)
    return (noises_nct,
            jnp.transpose(eps, (0, 2, 1)),
            jnp.transpose(starts, (0, 2, 1)))               # back to NCT


# ---------------- pure-JAX reference (natural weights, unfused, f32) ----------------
def reference_forward(p, feat, noise, enc, lengths, t_norm, coefs):
    sac, som, sr, srm1 = [coefs[:, i][:, None, None] for i in range(4)]
    noised = feat * sac + noise * som                                       # (B,T,CODEC)

    # Diffusion_Embedding (the spec module): cat([t, sin, cos])
    x_t = t_norm[:, None]
    arg = x_t * p['emb_w'][None, :] * (2.0 * math.pi)
    resid = jnp.concatenate([jnp.sin(arg), jnp.cos(arg)], axis=-1)          # (B, DIFF)
    emb = jnp.concatenate([x_t, resid], axis=-1)                            # (B, DIFF+1)

    h = jax.nn.silu(emb @ p['step_w1'] + p['step_b1'])
    h = h @ p['step_w2'] + p['step_b2']
    step = _layernorm(h + resid, p['step_ln_g'], p['step_ln_b'])            # (B, DIFF)

    x = jax.nn.silu(_layernorm(noised @ p['pre_w'] + p['pre_b'],
                               p['pre_ln_g'], p['pre_ln_b']))
    e0 = enc @ p['enc_pre_w'] + p['enc_pre_b']
    eh = jax.nn.silu(e0 @ p['enc_w1'] + p['enc_b1']) @ p['enc_w2'] + p['enc_b2']
    cond = _layernorm(eh + e0, p['enc_ln_g'], p['enc_ln_b'])                # (B,T,DIFF)

    row = jnp.arange(T)[None, :, None]
    mask = (row < lengths[:, None, None]).astype(jnp.float32)               # (B,T,1)

    skips = jnp.zeros_like(x)
    for l in range(STACK):
        xq = x + (step @ p['wn_step_w'][l] + p['wn_step_b'][l])[:, None, :]
        xp = jnp.pad(xq, ((0, 0), (PAD, PAD), (0, 0)))
        acc = sum(xp[:, k * DIL:k * DIL + T, :] @ p['conv_w'][l, k] for k in range(KERNEL))
        acc = acc + p['conv_b'][l] + cond @ p['cond_w'][l] + p['cond_b'][l]
        gate = jnp.tanh(acc[..., :DIFF]) * jax.nn.sigmoid(acc[..., DIFF:]) * mask
        x = x + gate
        skips = skips + gate
    skips = skips / math.sqrt(STACK)
    eps = (jax.nn.silu(skips) @ p['post_w'] + p['post_b']) * mask
    starts = noised * sr - eps * srm1
    return eps, starts, noised


# ---------------- deterministic parameters / packing / buffers ----------------
def make_params(key):
    ks = iter(jax.random.split(key, 40))

    def w(shape):
        fan_in = shape[-2] if len(shape) >= 2 else shape[-1]
        return jax.random.normal(next(ks), shape, jnp.float32) / math.sqrt(fan_in)

    def b(shape):
        return 0.1 * jax.random.normal(next(ks), shape, jnp.float32)

    p = {}
    p['pre_w'] = w((CODEC, DIFF)); p['pre_b'] = b((DIFF,))
    p['pre_ln_g'] = 1.0 + b((DIFF,)); p['pre_ln_b'] = b((DIFF,))
    p['enc_pre_w'] = w((ENC, DIFF)); p['enc_pre_b'] = b((DIFF,))
    p['enc_w1'] = w((DIFF, FFN)); p['enc_b1'] = b((FFN,))
    p['enc_w2'] = w((FFN, DIFF)); p['enc_b2'] = b((DIFF,))
    p['enc_ln_g'] = 1.0 + b((DIFF,)); p['enc_ln_b'] = b((DIFF,))
    p['emb_w'] = jax.random.normal(next(ks), (DIFF // 2,), jnp.float32)   # Diffusion_Embedding
    p['step_w1'] = w((DIFF + 1, FFN)); p['step_b1'] = b((FFN,))
    p['step_w2'] = w((FFN, DIFF)); p['step_b2'] = b((DIFF,))
    p['step_ln_g'] = 1.0 + b((DIFF,)); p['step_ln_b'] = b((DIFF,))
    p['conv_w'] = w((STACK, KERNEL, DIFF, 2 * DIFF)); p['conv_b'] = b((STACK, 2 * DIFF))
    p['cond_w'] = w((STACK, DIFF, 2 * DIFF)); p['cond_b'] = b((STACK, 2 * DIFF))
    p['wn_step_w'] = w((STACK, DIFF, DIFF)); p['wn_step_b'] = b((STACK, DIFF))
    p['post_w'] = w((DIFF, CODEC)); p['post_b'] = b((CODEC,))
    return p


def pack_weights(p):
    """Pack all matrices into one bf16 (W_ROWS,128) slab and all vectors into one
    f32 (1,V_COLS) slab (review item: 1-3 lane-dense operands instead of ~25)."""
    wslab = np.zeros((W_ROWS, 128), np.float32)

    def put_w(name, mat):
        off, r, c = W_LAYOUT[name]
        wslab[off:off + r, :c] = np.asarray(mat, np.float32)

    put_w('pre_w', p['pre_w'])
    put_w('enc_pre_w', p['enc_pre_w'])
    put_w('enc_w1', p['enc_w1'])
    put_w('enc_w2', p['enc_w2'])
    put_w('step_w1r', p['step_w1'][1:])
    put_w('step_w2', p['step_w2'])
    put_w('cond_w', np.concatenate([np.asarray(p['cond_w'][l]) for l in range(STACK)], axis=1))
    put_w('wn_tap_w', np.concatenate(
        [np.concatenate([np.asarray(p['conv_w'][l, k]) for k in range(KERNEL)], axis=0)
         for l in range(STACK)], axis=0))
    put_w('wn_step_w', np.concatenate([np.asarray(p['wn_step_w'][l]) for l in range(STACK)], axis=1))
    put_w('post_w', p['post_w'])

    vslab = np.zeros((1, V_COLS), np.float32)

    def put_v(name, vec):
        off, n = V_LAYOUT[name]
        vslab[0, off:off + n] = np.asarray(vec, np.float32).reshape(-1)

    for name in ('pre_b', 'pre_ln_g', 'pre_ln_b', 'enc_pre_b', 'enc_b1', 'enc_b2',
                 'enc_ln_g', 'enc_ln_b', 'step_b1', 'step_b2', 'step_ln_g',
                 'step_ln_b', 'post_b', 'emb_w'):
        put_v(name, p[name])
    put_v('step_w1t', p['step_w1'][0])
    put_v('wn_b', (np.asarray(p['conv_b']) + np.asarray(p['cond_b'])).reshape(-1))
    put_v('wn_step_b', np.asarray(p['wn_step_b']).reshape(-1))

    return jnp.asarray(wslab, jnp.bfloat16), jnp.asarray(vslab, jnp.float32)


def make_buffers():
    scale = 1000.0 / MAX_STEP
    betas = np.linspace(scale * 1e-4, scale * 0.02, MAX_STEP, dtype=np.float64)
    alphas = 1.0 - betas
    acp = np.cumprod(alphas)
    return {
        'sqrt_acp': jnp.asarray(np.sqrt(acp), jnp.float32),
        'sqrt_om_acp': jnp.asarray(np.sqrt(1.0 - acp), jnp.float32),
        'sqrt_recip_acp': jnp.asarray(np.sqrt(1.0 / acp), jnp.float32),
        'sqrt_recipm1_acp': jnp.asarray(np.sqrt(1.0 / acp - 1.0), jnp.float32),
    }


if __name__ == "__main__":
    key = jax.random.PRNGKey(0)
    kp, kf, ke, kpr, kfwd = jax.random.split(key, 5)

    params = make_params(kp)
    packed = pack_weights(params)
    buffers = make_buffers()

    features = jax.random.normal(kf, (B, CODEC, T), jnp.float32)          # [Batch, Codec_d, Audio_ct]
    encodings = jax.random.normal(ke, (B, ENC, T), jnp.float32)           # [Batch, Enc_d, Audio_ct]
    lengths = jnp.array([T, T - 4], dtype=jnp.int32)                      # [Batch]
    speech_prompts = jax.random.normal(kpr, (B, PROMPT_D, PROMPT_T), jnp.float32)

    outputs = None
    for trig_in_kernel in (True, False):
        try:
            fwd = jax.jit(functools.partial(
                diffusion_forward, params, packed, buffers, trig_in_kernel))
            outputs = fwd(features, encodings, lengths, speech_prompts, kfwd)
            jax.block_until_ready(outputs)
            break
        except Exception:
            # pltpu.LoweringException (sin/cos not lowered by this Mosaic build) or
            # similar: retry once with the wrapper-side sinusoid; re-raise if the
            # fallback also fails so real bugs are not silently masked.
            if not trig_in_kernel:
                raise
            outputs = None
    noises, epsilons, starts = outputs

    # ---- pure-JAX reference check (same RNG draws as inside diffusion_forward) ----
    noises_ref, t_ref = sample_noise_and_t(kfwd, features.shape)
    t_norm = t_ref.astype(jnp.float32) / MAX_STEP
    coefs = jnp.stack([buffers['sqrt_acp'][t_ref], buffers['sqrt_om_acp'][t_ref],
                       buffers['sqrt_recip_acp'][t_ref], buffers['sqrt_recipm1_acp'][t_ref]],
                      axis=-1)
    with jax.default_matmul_precision("highest"):
        eps_ref, starts_ref, noised_ref = reference_forward(
            params,
            jnp.transpose(features, (0, 2, 1)),
            jnp.transpose(noises_ref, (0, 2, 1)),
            jnp.transpose(encodings, (0, 2, 1)),
            lengths, t_norm, coefs)

    eps_btc = jnp.transpose(epsilons, (0, 2, 1))
    starts_btc = jnp.transpose(starts, (0, 2, 1))
    # network output vs. f32 reference (kernel matmuls are bf16)
    np.testing.assert_allclose(np.asarray(eps_btc), np.asarray(eps_ref),
                               rtol=5e-2, atol=5e-2)
    # fused q-sample / x0-recovery plumbing (no bf16 amplification via srm1)
    starts_expect = (noised_ref * coefs[:, 2][:, None, None]
                     - eps_btc * coefs[:, 3][:, None, None])
    np.testing.assert_allclose(np.asarray(starts_btc), np.asarray(starts_expect),
                               rtol=1e-2, atol=1e-2)
    np.testing.assert_allclose(np.asarray(noises), np.asarray(noises_ref),
                               rtol=1e-6, atol=1e-6)

    assert noises.shape == (B, CODEC, T)
    assert epsilons.shape == (B, CODEC, T)
    assert starts.shape == (B, CODEC, T)
    print("KERNEL_OK")
</pallas_src>

<mosaic_0001>
module attributes {stable_mosaic.version = 11 : i64} {
  func.func @kernel_trig(%arg0: i32, %arg1: memref<2x8xf32, #tpu.memory_space<vmem>>, %arg2: memref<2x16x8xf32, #tpu.memory_space<vmem>>, %arg3: memref<2x16x8xf32, #tpu.memory_space<vmem>>, %arg4: memref<2x16x16xf32, #tpu.memory_space<vmem>>, %arg5: memref<640x128xbf16, #tpu.memory_space<vmem>>, %arg6: memref<1x2176xf32, #tpu.memory_space<vmem>>, %arg7: memref<2x256xf32, #tpu.memory_space<vmem>>) attributes {dimension_semantics = [#tpu.dimension_semantics<arbitrary>], iteration_bounds = array<i64: 1>, scalar_prefetch = 0 : i64, scratch_operands = 0 : i64, tpu.core_type = #tpu.core_type<tc>, window_params = [{pipeline_mode = #tpu.pipeline_mode<synchronous>, transform_indices = @transform_0, window_bounds = array<i64: 2, 8>}, {pipeline_mode = #tpu.pipeline_mode<synchronous>, transform_indices = @transform_1, window_bounds = array<i64: 2, 16, 8>}, {pipeline_mode = #tpu.pipeline_mode<synchronous>, transform_indices = @transform_2, window_bounds = array<i64: 2, 16, 8>}, {pipeline_mode = #tpu.pipeline_mode<synchronous>, transform_indices = @transform_3, window_bounds = array<i64: 2, 16, 16>}, {pipeline_mode = #tpu.pipeline_mode<synchronous>, transform_indices = @transform_4, window_bounds = array<i64: 640, 128>}, {pipeline_mode = #tpu.pipeline_mode<synchronous>, transform_indices = @transform_5, window_bounds = array<i64: 1, 2176>}, {pipeline_mode = #tpu.pipeline_mode<synchronous>, transform_indices = @transform_6, window_bounds = array<i64: 2, 256>}]} {
    %c0 = arith.constant 0 : index
    %c0_0 = arith.constant 0 : index
    %0 = vector.load %arg1[%c0, %c0_0] : memref<2x8xf32, #tpu.memory_space<vmem>>, vector<2x8xf32>
    %1 = vector.extract_strided_slice %0 {offsets = [0, 0], sizes = [2, 1], strides = [1, 1]} : vector<2x8xf32> to vector<2x1xf32>
    %c0_1 = arith.constant 0 : index
    %c2048 = arith.constant 2048 : index
    %2 = vector.load %arg6[%c0_1, %c2048] : memref<1x2176xf32, #tpu.memory_space<vmem>>, vector<1x16xf32>
    %3 = vector.broadcast %1 : vector<2x1xf32> to vector<2x16xf32>
    %4 = vector.broadcast %2 : vector<1x16xf32> to vector<2x16xf32>
    %5 = arith.mulf %3, %4 : vector<2x16xf32>
    %cst = arith.constant 6.28318548 : f32
    %6 = vector.broadcast %cst : f32 to vector<2x16xf32>
    %7 = arith.mulf %5, %6 : vector<2x16xf32>
    %8 = math.sin %7 : vector<2x16xf32>
    %9 = math.cos %7 : vector<2x16xf32>
    %10 = tpu.concatenate %8, %9 in 1 : vector<2x16xf32>, vector<2x16xf32> -> vector<2x32xf32>
    %11 = vector.shape_cast %0 : vector<2x8xf32> to vector<2x1x8xf32>
    %12 = vector.shape_cast %11 : vector<2x1x8xf32> to vector<2x1x8xf32>
    %13 = vector.broadcast %12 : vector<2x1x8xf32> to vector<2x16x8xf32>
    %14 = vector.shape_cast %13 : vector<2x16x8xf32> to vector<32x8xf32>
    %15 = tpu.iota {dimensions = array<i32: 1>} : vector<2x16x1xi32>
    %16 = vector.shape_cast %15 : vector<2x16x1xi32> to vector<32x1xi32>
    %17 = arith.sitofp %16 : vector<32x1xi32> to vector<32x1xf32>
    %18 = vector.extract_strided_slice %14 {offsets = [0, 5], sizes = [32, 1], strides = [1, 1]} : vector<32x8xf32> to vector<32x1xf32>
    %19 = arith.cmpf olt, %17, %18 : vector<32x1xf32>
    %20 = arith.extui %19 : vector<32x1xi1> to vector<32x1xi32>
    %21 = arith.sitofp %20 : vector<32x1xi32> to vector<32x1xf32>
    %c0_2 = arith.constant 0 : index
    %c0_3 = arith.constant 0 : index
    %c0_4 = arith.constant 0 : index
    %22 = vector.load %arg2[%c0_2, %c0_3, %c0_4] : memref<2x16x8xf32, #tpu.memory_space<vmem>>, vector<2x16x8xf32>
    %23 = vector.shape_cast %22 : vector<2x16x8xf32> to vector<32x8xf32>
    %c0_5 = arith.constant 0 : index
    %c0_6 = arith.constant 0 : index
    %c0_7 = arith.constant 0 : index
    %24 = vector.load %arg3[%c0_5, %c0_6, %c0_7] : memref<2x16x8xf32, #tpu.memory_space<vmem>>, vector<2x16x8xf32>
    %25 = vector.shape_cast %24 : vector<2x16x8xf32> to vector<32x8xf32>
    %26 = vector.extract_strided_slice %14 {offsets = [0, 1], sizes = [32, 1], strides = [1, 1]} : vector<32x8xf32> to vector<32x1xf32>
    %27 = vector.broadcast %26 : vector<32x1xf32> to vector<32x8xf32>
    %28 = arith.mulf %23, %27 : vector<32x8xf32>
    %29 = vector.extract_strided_slice %14 {offsets = [0, 2], sizes = [32, 1], strides = [1, 1]} : vector<32x8xf32> to vector<32x1xf32>
    %30 = vector.broadcast %29 : vector<32x1xf32> to vector<32x8xf32>
    %31 = arith.mulf %25, %30 : vector<32x8xf32>
    %32 = arith.addf %28, %31 : vector<32x8xf32>
    %33 = vector.extract_strided_slice %0 {offsets = [0, 0], sizes = [2, 1], strides = [1, 1]} : vector<2x8xf32> to vector<2x1xf32>
    %34 = arith.truncf %10 : vector<2x32xf32> to vector<2x32xbf16>
    %c192 = arith.constant 192 : index
    %c0_8 = arith.constant 0 : index
    %35 = vector.load %arg5[%c192, %c0_8] : memref<640x128xbf16, #tpu.memory_space<vmem>>, vector<32x128xbf16>
    %cst_9 = arith.constant dense<0.000000e+00> : vector<2x128xf32>
    %36 = tpu.matmul %34, %35, %cst_9 {dimension_numbers = #tpu.dot_dimension_numbers<[1], [0], [0], [1], [0, 0, 1, 1], [], []>} : vector<2x32xbf16>, vector<32x128xbf16>, vector<2x128xf32> -> vector<2x128xf32>
    %c0_10 = arith.constant 0 : index
    %c1024 = arith.constant 1024 : index
    %37 = vector.load %arg6[%c0_10, %c1024] : memref<1x2176xf32, #tpu.memory_space<vmem>>, vector<1x128xf32>
    %38 = vector.broadcast %33 : vector<2x1xf32> to vector<2x128xf32>
    %39 = vector.broadcast %37 : vector<1x128xf32> to vector<2x128xf32>
    %40 = arith.mulf %38, %39 : vector<2x128xf32>
    %41 = arith.addf %36, %40 : vector<2x128xf32>
    %c0_11 = arith.constant 0 : index
    %c1152 = arith.constant 1152 : index
    %42 = vector.load %arg6[%c0_11, %c1152] : memref<1x2176xf32, #tpu.memory_space<vmem>>, vector<1x128xf32>
    %43 = vector.broadcast %42 : vector<1x128xf32> to vector<2x128xf32>
    %44 = arith.addf %41, %43 : vector<2x128xf32>
    %45 = arith.negf %44 : vector<2x128xf32>
    %46 = math.exp %45 : vector<2x128xf32>
    %cst_12 = arith.constant 1.000000e+00 : f32
    %47 = vector.broadcast %cst_12 : f32 to vector<2x128xf32>
    %48 = arith.addf %47, %46 : vector<2x128xf32>
    %49 = arith.divf %47, %48 : vector<2x128xf32>
    %50 = arith.mulf %44, %49 : vector<2x128xf32>
    %51 = arith.truncf %50 : vector<2x128xf32> to vector<2x128xbf16>
    %c224 = arith.constant 224 : index
    %c0_13 = arith.constant 0 : index
    %52 = vector.load %arg5[%c224, %c0_13] : memref<640x128xbf16, #tpu.memory_space<vmem>>, vector<128x32xbf16>
    %cst_14 = arith.constant dense<0.000000e+00> : vector<2x32xf32>
    %53 = tpu.matmul %51, %52, %cst_14 {dimension_numbers = #tpu.dot_dimension_numbers<[1], [0], [0], [1], [0, 0, 1, 1], [], []>} : vector<2x128xbf16>, vector<128x32xbf16>, vector<2x32xf32> -> vector<2x32xf32>
    %c0_15 = arith.constant 0 : index
    %c1280 = arith.constant 1280 : index
    %54 = vector.load %arg6[%c0_15, %c1280] : memref<1x2176xf32, #tpu.memory_space<vmem>>, vector<1x32xf32>
    %55 = vector.broadcast %54 : vector<1x32xf32> to vector<2x32xf32>
    %56 = arith.addf %53, %55 : vector<2x32xf32>
    %57 = arith.addf %56, %10 : vector<2x32xf32>
    %c0_16 = arith.constant 0 : index
    %c1408 = arith.constant 1408 : index
    %58 = vector.load %arg6[%c0_16, %c1408] : memref<1x2176xf32, #tpu.memory_space<vmem>>, vector<1x32xf32>
    %c0_17 = arith.constant 0 : index
    %c1536 = arith.constant 1536 : index
    %59 = vector.load %arg6[%c0_17, %c1536] : memref<1x2176xf32, #tpu.memory_space<vmem>>, vector<1x32xf32>
    %cst_18 = arith.constant dense<0.000000e+00> : vector<2xf32>
    %60 = vector.multi_reduction <add>, %57, %cst_18 [1] : vector<2x32xf32> to vector<2xf32>
    %61 = vector.shape_cast %60 : vector<2xf32> to vector<2x1xf32>
    %cst_19 = arith.constant 3.200000e+01 : f32
    %62 = vector.broadcast %cst_19 : f32 to vector<2x1xf32>
    %63 = arith.divf %61, %62 : vector<2x1xf32>
    %64 = vector.broadcast %63 : vector<2x1xf32> to vector<2x32xf32>
    %65 = arith.subf %57, %64 : vector<2x32xf32>
    %66 = arith.mulf %65, %65 : vector<2x32xf32>
    %cst_20 = arith.constant dense<0.000000e+00> : vector<2xf32>
    %67 = vector.multi_reduction <add>, %66, %cst_20 [1] : vector<2x32xf32> to vector<2xf32>
    %68 = vector.shape_cast %67 : vector<2xf32> to vector<2x1xf32>
    %cst_21 = arith.constant 3.200000e+01 : f32
    %69 = vector.broadcast %cst_21 : f32 to vector<2x1xf32>
    %70 = arith.divf %68, %69 : vector<2x1xf32>
    %71 = vector.broadcast %63 : vector<2x1xf32> to vector<2x32xf32>
    %72 = arith.subf %57, %71 : vector<2x32xf32>
    %cst_22 = arith.constant 9.99999974E-6 : f32
    %73 = vector.broadcast %cst_22 : f32 to vector<2x1xf32>
    %74 = arith.addf %70, %73 : vector<2x1xf32>
    %75 = math.rsqrt %74 : vector<2x1xf32>
    %76 = vector.broadcast %75 : vector<2x1xf32> to vector<2x32xf32>
    %77 = arith.mulf %72, %76 : vector<2x32xf32>
    %78 = vector.broadcast %58 : vector<1x32xf32> to vector<2x32xf32>
    %79 = arith.mulf %77, %78 : vector<2x32xf32>
    %80 = vector.broadcast %59 : vector<1x32xf32> to vector<2x32xf32>
    %81 = arith.addf %79, %80 : vector<2x32xf32>
    %82 = arith.truncf %32 : vector<32x8xf32> to vector<32x8xbf16>
    %c0_23 = arith.constant 0 : index
    %c0_24 = arith.constant 0 : index
    %83 = vector.load %arg5[%c0_23, %c0_24] : memref<640x128xbf16, #tpu.memory_space<vmem>>, vector<8x32xbf16>
    %cst_25 = arith.constant dense<0.000000e+00> : vector<32x32xf32>
    %84 = tpu.matmul %82, %83, %cst_25 {dimension_numbers = #tpu.dot_dimension_numbers<[1], [0], [0], [1], [0, 0, 1, 1], [], []>} : vector<32x8xbf16>, vector<8x32xbf16>, vector<32x32xf32> -> vector<32x32xf32>
    %c0_26 = arith.constant 0 : index
    %c0_27 = arith.constant 0 : index
    %85 = vector.load %arg6[%c0_26, %c0_27] : memref<1x2176xf32, #tpu.memory_space<vmem>>, vector<1x32xf32>
    %86 = vector.broadcast %85 : vector<1x32xf32> to vector<32x32xf32>
    %87 = arith.addf %84, %86 : vector<32x32xf32>
    %c0_28 = arith.constant 0 : index
    %c128 = arith.constant 128 : index
    %88 = vector.load %arg6[%c0_28, %c128] : memref<1x2176xf32, #tpu.memory_space<vmem>>, vector<1x32xf32>
    %c0_29 = arith.constant 0 : index
    %c256 = arith.constant 256 : index
    %89 = vector.load %arg6[%c0_29, %c256] : memref<1x2176xf32, #tpu.memory_space<vmem>>, vector<1x32xf32>
    %cst_30 = arith.constant dense<0.000000e+00> : vector<32xf32>
    %90 = vector.multi_reduction <add>, %87, %cst_30 [1] : vector<32x32xf32> to vector<32xf32>
    %91 = vector.shape_cast %90 : vector<32xf32> to vector<32x1xf32>
    %cst_31 = arith.constant 3.200000e+01 : f32
    %92 = vector.broadcast %cst_31 : f32 to vector<32x1xf32>
    %93 = arith.divf %91, %92 : vector<32x1xf32>
    %94 = vector.broadcast %93 : vector<32x1xf32> to vector<32x32xf32>
    %95 = arith.subf %87, %94 : vector<32x32xf32>
    %96 = arith.mulf %95, %95 : vector<32x32xf32>
    %cst_32 = arith.constant dense<0.000000e+00> : vector<32xf32>
    %97 = vector.multi_reduction <add>, %96, %cst_32 [1] : vector<32x32xf32> to vector<32xf32>
    %98 = vector.shape_cast %97 : vector<32xf32> to vector<32x1xf32>
    %cst_33 = arith.constant 3.200000e+01 : f32
    %99 = vector.broadcast %cst_33 : f32 to vector<32x1xf32>
    %100 = arith.divf %98, %99 : vector<32x1xf32>
    %101 = vector.broadcast %93 : vector<32x1xf32> to vector<32x32xf32>
    %102 = arith.subf %87, %101 : vector<32x32xf32>
    %cst_34 = arith.constant 9.99999974E-6 : f32
    %103 = vector.broadcast %cst_34 : f32 to vector<32x1xf32>
    %104 = arith.addf %100, %103 : vector<32x1xf32>
    %105 = math.rsqrt %104 : vector<32x1xf32>
    %106 = vector.broadcast %105 : vector<32x1xf32> to vector<32x32xf32>
    %107 = arith.mulf %102, %106 : vector<32x32xf32>
    %108 = vector.broadcast %88 : vector<1x32xf32> to vector<32x32xf32>
    %109 = arith.mulf %107, %108 : vector<32x32xf32>
    %110 = vector.broadcast %89 : vector<1x32xf32> to vector<32x32xf32>
    %111 = arith.addf %109, %110 : vector<32x32xf32>
    %112 = arith.negf %111 : vector<32x32xf32>
    %113 = math.exp %112 : vector<32x32xf32>
    %cst_35 = arith.constant 1.000000e+00 : f32
    %114 = vector.broadcast %cst_35 : f32 to vector<32x32xf32>
    %115 = arith.addf %114, %113 : vector<32x32xf32>
    %116 = arith.divf %114, %115 : vector<32x32xf32>
    %117 = arith.mulf %111, %116 : vector<32x32xf32>
    %c0_36 = arith.constant 0 : index
    %c0_37 = arith.constant 0 : index
    %c0_38 = arith.constant 0 : index
    %118 = vector.load %arg4[%c0_36, %c0_37, %c0_38] : memref<2x16x16xf32, #tpu.memory_space<vmem>>, vector<2x16x16xf32>
    %119 = vector.shape_cast %118 : vector<2x16x16xf32> to vector<32x16xf32>
    %120 = arith.truncf %119 : vector<32x16xf32> to vector<32x16xbf16>
    %c16 = arith.constant 16 : index
    %c0_39 = arith.constant 0 : index
    %121 = vector.load %arg5[%c16, %c0_39] : memref<640x128xbf16, #tpu.memory_space<vmem>>, vector<16x32xbf16>
    %cst_40 = arith.constant dense<0.000000e+00> : vector<32x32xf32>
    %122 = tpu.matmul %120, %121, %cst_40 {dimension_numbers = #tpu.dot_dimension_numbers<[1], [0], [0], [1], [0, 0, 1, 1], [], []>} : vector<32x16xbf16>, vector<16x32xbf16>, vector<32x32xf32> -> vector<32x32xf32>
    %c0_41 = arith.constant 0 : index
    %c384 = arith.constant 384 : index
    %123 = vector.load %arg6[%c0_41, %c384] : memref<1x2176xf32, #tpu.memory_space<vmem>>, vector<1x32xf32>
    %124 = vector.broadcast %123 : vector<1x32xf32> to vector<32x32xf32>
    %125 = arith.addf %122, %124 : vector<32x32xf32>
    %126 = arith.truncf %125 : vector<32x32xf32> to vector<32x32xbf16>
    %c32 = arith.constant 32 : index
    %c0_42 = arith.constant 0 : index
    %127 = vector.load %arg5[%c32, %c0_42] : memref<640x128xbf16, #tpu.memory_space<vmem>>, vector<32x128xbf16>
    %cst_43 = arith.constant dense<0.000000e+00> : vector<32x128xf32>
    %128 = tpu.matmul %126, %127, %cst_43 {dimension_numbers = #tpu.dot_dimension_numbers<[1], [0], [0], [1], [0, 0, 1, 1], [], []>} : vector<32x32xbf16>, vector<32x128xbf16>, vector<32x128xf32> -> vector<32x128xf32>
    %c0_44 = arith.constant 0 : index
    %c512 = arith.constant 512 : index
    %129 = vector.load %arg6[%c0_44, %c512] : memref<1x2176xf32, #tpu.memory_space<vmem>>, vector<1x128xf32>
    %130 = vector.broadcast %129 : vector<1x128xf32> to vector<32x128xf32>
    %131 = arith.addf %128, %130 : vector<32x128xf32>
    %132 = arith.negf %131 : vector<32x128xf32>
    %133 = math.exp %132 : vector<32x128xf32>
    %cst_45 = arith.constant 1.000000e+00 : f32
    %134 = vector.broadcast %cst_45 : f32 to vector<32x128xf32>
    %135 = arith.addf %134, %133 : vector<32x128xf32>
    %136 = arith.divf %134, %135 : vector<32x128xf32>
    %137 = arith.mulf %131, %136 : vector<32x128xf32>
    %138 = arith.truncf %137 : vector<32x128xf32> to vector<32x128xbf16>
    %c64 = arith.constant 64 : index
    %c0_46 = arith.constant 0 : index
    %139 = vector.load %arg5[%c64, %c0_46] : memref<640x128xbf16, #tpu.memory_space<vmem>>, vector<128x32xbf16>
    %cst_47 = arith.constant dense<0.000000e+00> : vector<32x32xf32>
    %140 = tpu.matmul %138, %139, %cst_47 {dimension_numbers = #tpu.dot_dimension_numbers<[1], [0], [0], [1], [0, 0, 1, 1], [], []>} : vector<32x128xbf16>, vector<128x32xbf16>, vector<32x32xf32> -> vector<32x32xf32>
    %c0_48 = arith.constant 0 : index
    %c640 = arith.constant 640 : index
    %141 = vector.load %arg6[%c0_48, %c640] : memref<1x2176xf32, #tpu.memory_space<vmem>>, vector<1x32xf32>
    %142 = vector.broadcast %141 : vector<1x32xf32> to vector<32x32xf32>
    %143 = arith.addf %140, %142 : vector<32x32xf32>
    %144 = arith.addf %143, %125 : vector<32x32xf32>
    %c0_49 = arith.constant 0 : index
    %c768 = arith.constant 768 : index
    %145 = vector.load %arg6[%c0_49, %c768] : memref<1x2176xf32, #tpu.memory_space<vmem>>, vector<1x32xf32>
    %c0_50 = arith.constant 0 : index
    %c896 = arith.constant 896 : index
    %146 = vector.load %arg6[%c0_50, %c896] : memref<1x2176xf32, #tpu.memory_space<vmem>>, vector<1x32xf32>
    %cst_51 = arith.constant dense<0.000000e+00> : vector<32xf32>
    %147 = vector.multi_reduction <add>, %144, %cst_51 [1] : vector<32x32xf32> to vector<32xf32>
    %148 = vector.shape_cast %147 : vector<32xf32> to vector<32x1xf32>
    %cst_52 = arith.constant 3.200000e+01 : f32
    %149 = vector.broadcast %cst_52 : f32 to vector<32x1xf32>
    %150 = arith.divf %148, %149 : vector<32x1xf32>
    %151 = vector.broadcast %150 : vector<32x1xf32> to vector<32x32xf32>
    %152 = arith.subf %144, %151 : vector<32x32xf32>
    %153 = arith.mulf %152, %152 : vector<32x32xf32>
    %cst_53 = arith.constant dense<0.000000e+00> : vector<32xf32>
    %154 = vector.multi_reduction <add>, %153, %cst_53 [1] : vector<32x32xf32> to vector<32xf32>
    %155 = vector.shape_cast %154 : vector<32xf32> to vector<32x1xf32>
    %cst_54 = arith.constant 3.200000e+01 : f32
    %156 = vector.broadcast %cst_54 : f32 to vector<32x1xf32>
    %157 = arith.divf %155, %156 : vector<32x1xf32>
    %158 = vector.broadcast %150 : vector<32x1xf32> to vector<32x32xf32>
    %159 = arith.subf %144, %158 : vector<32x32xf32>
    %cst_55 = arith.constant 9.99999974E-6 : f32
    %160 = vector.broadcast %cst_55 : f32 to vector<32x1xf32>
    %161 = arith.addf %157, %160 : vector<32x1xf32>
    %162 = math.rsqrt %161 : vector<32x1xf32>
    %163 = vector.broadcast %162 : vector<32x1xf32> to vector<32x32xf32>
    %164 = arith.mulf %159, %163 : vector<32x32xf32>
    %165 = vector.broadcast %145 : vector<1x32xf32> to vector<32x32xf32>
    %166 = arith.mulf %164, %165 : vector<32x32xf32>
    %167 = vector.broadcast %146 : vector<1x32xf32> to vector<32x32xf32>
    %168 = arith.addf %166, %167 : vector<32x32xf32>
    %169 = arith.truncf %168 : vector<32x32xf32> to vector<32x32xbf16>
    %c352 = arith.constant 352 : index
    %c0_56 = arith.constant 0 : index
    %170 = vector.load %arg5[%c352, %c0_56] : memref<640x128xbf16, #tpu.memory_space<vmem>>, vector<32x128xbf16>
    %cst_57 = arith.constant dense<0.000000e+00> : vector<32x128xf32>
    %171 = tpu.matmul %169, %170, %cst_57 {dimension_numbers = #tpu.dot_dimension_numbers<[1], [0], [0], [1], [0, 0, 1, 1], [], []>} : vector<32x32xbf16>, vector<32x128xbf16>, vector<32x128xf32> -> vector<32x128xf32>
    %172 = arith.truncf %81 : vector<2x32xf32> to vector<2x32xbf16>
    %c576 = arith.constant 576 : index
    %c0_58 = arith.constant 0 : index
    %173 = vector.load %arg5[%c576, %c0_58] : memref<640x128xbf16, #tpu.memory_space<vmem>>, vector<32x64xbf16>
    %cst_59 = arith.constant dense<0.000000e+00> : vector<2x64xf32>
    %174 = tpu.matmul %172, %173, %cst_59 {dimension_numbers = #tpu.dot_dimension_numbers<[1], [0], [0], [1], [0, 0, 1, 1], [], []>} : vector<2x32xbf16>, vector<32x64xbf16>, vector<2x64xf32> -> vector<2x64xf32>
    %c0_60 = arith.constant 0 : index
    %c1792 = arith.constant 1792 : index
    %175 = vector.load %arg6[%c0_60, %c1792] : memref<1x2176xf32, #tpu.memory_space<vmem>>, vector<1x64xf32>
    %176 = vector.broadcast %175 : vector<1x64xf32> to vector<2x64xf32>
    %177 = arith.addf %174, %176 : vector<2x64xf32>
    %178 = vector.shape_cast %177 : vector<2x64xf32> to vector<2x1x64xf32>
    %179 = vector.shape_cast %178 : vector<2x1x64xf32> to vector<2x1x64xf32>
    %180 = vector.broadcast %179 : vector<2x1x64xf32> to vector<2x16x64xf32>
    %181 = vector.shape_cast %180 : vector<2x16x64xf32> to vector<32x64xf32>
    %c0_61 = arith.constant 0 : index
    %c1664 = arith.constant 1664 : index
    %182 = vector.load %arg6[%c0_61, %c1664] : memref<1x2176xf32, #tpu.memory_space<vmem>>, vector<1x128xf32>
    %cst_62 = arith.constant 0.000000e+00 : f32
    %183 = vector.broadcast %cst_62 : f32 to vector<32x32xf32>
    %184 = vector.extract_strided_slice %181 {offsets = [0, 0], sizes = [32, 32], strides = [1, 1]} : vector<32x64xf32> to vector<32x32xf32>
    %185 = arith.addf %117, %184 : vector<32x32xf32>
    %c2_i32 = arith.constant 2 : i32
    %186 = vector.broadcast %c2_i32 : i32 to vector<32x1xi32>
    %187 = arith.cmpi sge, %16, %186 : vector<32x1xi32>
    %c2_i32_63 = arith.constant 2 : i32
    %188 = tpu.dynamic_rotate %185 by %c2_i32_63 dim 0 : vector<32x32xf32>, i32 -> vector<32x32xf32>
    %cst_64 = arith.constant 0.000000e+00 : f32
    %189 = vector.shape_cast %187 : vector<32x1xi1> to vector<32x1xi1>
    %190 = vector.broadcast %189 : vector<32x1xi1> to vector<32x32xi1>
    %191 = vector.broadcast %cst_64 : f32 to vector<32x32xf32>
    %192 = arith.select %190, %188, %191 : vector<32x32xi1>, vector<32x32xf32>
    %c14_i32 = arith.constant 14 : i32
    %193 = vector.broadcast %c14_i32 : i32 to vector<32x1xi32>
    %194 = arith.cmpi slt, %16, %193 : vector<32x1xi32>
    %c30_i32 = arith.constant 30 : i32
    %195 = tpu.dynamic_rotate %185 by %c30_i32 dim 0 : vector<32x32xf32>, i32 -> vector<32x32xf32>
    %cst_65 = arith.constant 0.000000e+00 : f32
    %196 = vector.shape_cast %194 : vector<32x1xi1> to vector<32x1xi1>
    %197 = vector.broadcast %196 : vector<32x1xi1> to vector<32x32xi1>
    %198 = vector.broadcast %cst_65 : f32 to vector<32x32xf32>
    %199 = arith.select %197, %195, %198 : vector<32x32xi1>, vector<32x32xf32>
    %200 = tpu.concatenate %192, %185, %199 in 1 : vector<32x32xf32>, vector<32x32xf32>, vector<32x32xf32> -> vector<32x96xf32>
    %201 = arith.truncf %200 : vector<32x96xf32> to vector<32x96xbf16>
    %c384_66 = arith.constant 384 : index
    %c0_67 = arith.constant 0 : index
    %202 = vector.load %arg5[%c384_66, %c0_67] : memref<640x128xbf16, #tpu.memory_space<vmem>>, vector<96x64xbf16>
    %cst_68 = arith.constant dense<0.000000e+00> : vector<32x64xf32>
    %203 = tpu.matmul %201, %202, %cst_68 {dimension_numbers = #tpu.dot_dimension_numbers<[1], [0], [0], [1], [0, 0, 1, 1], [], []>} : vector<32x96xbf16>, vector<96x64xbf16>, vector<32x64xf32> -> vector<32x64xf32>
    %204 = vector.extract_strided_slice %171 {offsets = [0, 0], sizes = [32, 64], strides = [1, 1]} : vector<32x128xf32> to vector<32x64xf32>
    %205 = arith.addf %203, %204 : vector<32x64xf32>
    %206 = vector.extract_strided_slice %182 {offsets = [0, 0], sizes = [1, 64], strides = [1, 1]} : vector<1x128xf32> to vector<1x64xf32>
    %207 = vector.broadcast %206 : vector<1x64xf32> to vector<32x64xf32>
    %208 = arith.addf %205, %207 : vector<32x64xf32>
    %209 = vector.extract_strided_slice %208 {offsets = [0, 0], sizes = [32, 32], strides = [1, 1]} : vector<32x64xf32> to vector<32x32xf32>
    %210 = math.tanh %209 : vector<32x32xf32>
    %211 = vector.extract_strided_slice %208 {offsets = [0, 32], sizes = [32, 32], strides = [1, 1]} : vector<32x64xf32> to vector<32x32xf32>
    %212 = arith.negf %211 : vector<32x32xf32>
    %213 = math.exp %212 : vector<32x32xf32>
    %cst_69 = arith.constant 1.000000e+00 : f32
    %214 = vector.broadcast %cst_69 : f32 to vector<32x32xf32>
    %215 = arith.addf %214, %213 : vector<32x32xf32>
    %216 = arith.divf %214, %215 : vector<32x32xf32>
    %217 = arith.mulf %210, %216 : vector<32x32xf32>
    %218 = vector.broadcast %21 : vector<32x1xf32> to vector<32x32xf32>
    %219 = arith.mulf %217, %218 : vector<32x32xf32>
    %220 = arith.addf %117, %219 : vector<32x32xf32>
    %221 = arith.addf %183, %219 : vector<32x32xf32>
    %222 = vector.extract_strided_slice %181 {offsets = [0, 32], sizes = [32, 32], strides = [1, 1]} : vector<32x64xf32> to vector<32x32xf32>
    %223 = arith.addf %220, %222 : vector<32x32xf32>
    %c2_i32_70 = arith.constant 2 : i32
    %224 = vector.broadcast %c2_i32_70 : i32 to vector<32x1xi32>
    %225 = arith.cmpi sge, %16, %224 : vector<32x1xi32>
    %c2_i32_71 = arith.constant 2 : i32
    %226 = tpu.dynamic_rotate %223 by %c2_i32_71 dim 0 : vector<32x32xf32>, i32 -> vector<32x32xf32>
    %cst_72 = arith.constant 0.000000e+00 : f32
    %227 = vector.shape_cast %225 : vector<32x1xi1> to vector<32x1xi1>
    %228 = vector.broadcast %227 : vector<32x1xi1> to vector<32x32xi1>
    %229 = vector.broadcast %cst_72 : f32 to vector<32x32xf32>
    %230 = arith.select %228, %226, %229 : vector<32x32xi1>, vector<32x32xf32>
    %c14_i32_73 = arith.constant 14 : i32
    %231 = vector.broadcast %c14_i32_73 : i32 to vector<32x1xi32>
    %232 = arith.cmpi slt, %16, %231 : vector<32x1xi32>
    %c30_i32_74 = arith.constant 30 : i32
    %233 = tpu.dynamic_rotate %223 by %c30_i32_74 dim 0 : vector<32x32xf32>, i32 -> vector<32x32xf32>
    %cst_75 = arith.constant 0.000000e+00 : f32
    %234 = vector.shape_cast %232 : vector<32x1xi1> to vector<32x1xi1>
    %235 = vector.broadcast %234 : vector<32x1xi1> to vector<32x32xi1>
    %236 = vector.broadcast %cst_75 : f32 to vector<32x32xf32>
    %237 = arith.select %235, %233, %236 : vector<32x32xi1>, vector<32x32xf32>
    %238 = tpu.concatenate %230, %223, %237 in 1 : vector<32x32xf32>, vector<32x32xf32>, vector<32x32xf32> -> vector<32x96xf32>
    %239 = arith.truncf %238 : vector<32x96xf32> to vector<32x96xbf16>
    %c480 = arith.constant 480 : index
    %c0_76 = arith.constant 0 : index
    %240 = vector.load %arg5[%c480, %c0_76] : memref<640x128xbf16, #tpu.memory_space<vmem>>, vector<96x64xbf16>
    %cst_77 = arith.constant dense<0.000000e+00> : vector<32x64xf32>
    %241 = tpu.matmul %239, %240, %cst_77 {dimension_numbers = #tpu.dot_dimension_numbers<[1], [0], [0], [1], [0, 0, 1, 1], [], []>} : vector<32x96xbf16>, vector<96x64xbf16>, vector<32x64xf32> -> vector<32x64xf32>
    %242 = vector.extract_strided_slice %171 {offsets = [0, 64], sizes = [32, 64], strides = [1, 1]} : vector<32x128xf32> to vector<32x64xf32>
    %243 = arith.addf %241, %242 : vector<32x64xf32>
    %244 = vector.extract_strided_slice %182 {offsets = [0, 64], sizes = [1, 64], strides = [1, 1]} : vector<1x128xf32> to vector<1x64xf32>
    %245 = vector.broadcast %244 : vector<1x64xf32> to vector<32x64xf32>
    %246 = arith.addf %243, %245 : vector<32x64xf32>
    %247 = vector.extract_strided_slice %246 {offsets = [0, 0], sizes = [32, 32], strides = [1, 1]} : vector<32x64xf32> to vector<32x32xf32>
    %248 = math.tanh %247 : vector<32x32xf32>
    %249 = vector.extract_strided_slice %246 {offsets = [0, 32], sizes = [32, 32], strides = [1, 1]} : vector<32x64xf32> to vector<32x32xf32>
    %250 = arith.negf %249 : vector<32x32xf32>
    %251 = math.exp %250 : vector<32x32xf32>
    %cst_78 = arith.constant 1.000000e+00 : f32
    %252 = vector.broadcast %cst_78 : f32 to vector<32x32xf32>
    %253 = arith.addf %252, %251 : vector<32x32xf32>
    %254 = arith.divf %252, %253 : vector<32x32xf32>
    %255 = arith.mulf %248, %254 : vector<32x32xf32>
    %256 = vector.broadcast %21 : vector<32x1xf32> to vector<32x32xf32>
    %257 = arith.mulf %255, %256 : vector<32x32xf32>
    %258 = arith.addf %221, %257 : vector<32x32xf32>
    %cst_79 = arith.constant 0.707106769 : f32
    %259 = vector.broadcast %cst_79 : f32 to vector<32x32xf32>
    %260 = arith.mulf %258, %259 : vector<32x32xf32>
    %261 = arith.negf %260 : vector<32x32xf32>
    %262 = math.exp %261 : vector<32x32xf32>
    %cst_80 = arith.constant 1.000000e+00 : f32
    %263 = vector.broadcast %cst_80 : f32 to vector<32x32xf32>
    %264 = arith.addf %263, %262 : vector<32x32xf32>
    %265 = arith.divf %263, %264 : vector<32x32xf32>
    %266 = arith.mulf %260, %265 : vector<32x32xf32>
    %267 = arith.truncf %266 : vector<32x32xf32> to vector<32x32xbf16>
    %c608 = arith.constant 608 : index
    %c0_81 = arith.constant 0 : index
    %268 = vector.load %arg5[%c608, %c0_81] : memref<640x128xbf16, #tpu.memory_space<vmem>>, vector<32x8xbf16>
    %cst_82 = arith.constant dense<0.000000e+00> : vector<32x8xf32>
    %269 = tpu.matmul %267, %268, %cst_82 {dimension_numbers = #tpu.dot_dimension_numbers<[1], [0], [0], [1], [0, 0, 1, 1], [], []>} : vector<32x32xbf16>, vector<32x8xbf16>, vector<32x8xf32> -> vector<32x8xf32>
    %c0_83 = arith.constant 0 : index
    %c1920 = arith.constant 1920 : index
    %270 = vector.load %arg6[%c0_83, %c1920] : memref<1x2176xf32, #tpu.memory_space<vmem>>, vector<1x8xf32>
    %271 = vector.broadcast %270 : vector<1x8xf32> to vector<32x8xf32>
    %272 = arith.addf %269, %271 : vector<32x8xf32>
    %273 = vector.broadcast %21 : vector<32x1xf32> to vector<32x8xf32>
    %274 = arith.mulf %272, %273 : vector<32x8xf32>
    %275 = vector.extract_strided_slice %14 {offsets = [0, 3], sizes = [32, 1], strides = [1, 1]} : vector<32x8xf32> to vector<32x1xf32>
    %276 = vector.broadcast %275 : vector<32x1xf32> to vector<32x8xf32>
    %277 = arith.mulf %32, %276 : vector<32x8xf32>
    %278 = vector.extract_strided_slice %14 {offsets = [0, 4], sizes = [32, 1], strides = [1, 1]} : vector<32x8xf32> to vector<32x1xf32>
    %279 = vector.broadcast %278 : vector<32x1xf32> to vector<32x8xf32>
    %280 = arith.mulf %274, %279 : vector<32x8xf32>
    %281 = arith.subf %277, %280 : vector<32x8xf32>
    %282 = vector.shape_cast %274 : vector<32x8xf32> to vector<2x16x8xf32>
    %283 = vector.extract_strided_slice %282 {offsets = [0, 0, 0], sizes = [2, 1, 8], strides = [1, 1, 1]} : vector<2x16x8xf32> to vector<2x1x8xf32>
    %284 = vector.shape_cast %283 : vector<2x1x8xf32> to vector<2x8xf32>
    %285 = vector.extract_strided_slice %282 {offsets = [0, 1, 0], sizes = [2, 1, 8], strides = [1, 1, 1]} : vector<2x16x8xf32> to vector<2x1x8xf32>
    %286 = vector.shape_cast %285 : vector<2x1x8xf32> to vector<2x8xf32>
    %287 = vector.extract_strided_slice %282 {offsets = [0, 2, 0], sizes = [2, 1, 8], strides = [1, 1, 1]} : vector<2x16x8xf32> to vector<2x1x8xf32>
    %288 = vector.shape_cast %287 : vector<2x1x8xf32> to vector<2x8xf32>
    %289 = vector.extract_strided_slice %282 {offsets = [0, 3, 0], sizes = [2, 1, 8], strides = [1, 1, 1]} : vector<2x16x8xf32> to vector<2x1x8xf32>
    %290 = vector.shape_cast %289 : vector<2x1x8xf32> to vector<2x8xf32>
    %291 = vector.extract_strided_slice %282 {offsets = [0, 4, 0], sizes = [2, 1, 8], strides = [1, 1, 1]} : vector<2x16x8xf32> to vector<2x1x8xf32>
    %292 = vector.shape_cast %291 : vector<2x1x8xf32> to vector<2x8xf32>
    %293 = vector.extract_strided_slice %282 {offsets = [0, 5, 0], sizes = [2, 1, 8], strides = [1, 1, 1]} : vector<2x16x8xf32> to vector<2x1x8xf32>
    %294 = vector.shape_cast %293 : vector<2x1x8xf32> to vector<2x8xf32>
    %295 = vector.extract_strided_slice %282 {offsets = [0, 6, 0], sizes = [2, 1, 8], strides = [1, 1, 1]} : vector<2x16x8xf32> to vector<2x1x8xf32>
    %296 = vector.shape_cast %295 : vector<2x1x8xf32> to vector<2x8xf32>
    %297 = vector.extract_strided_slice %282 {offsets = [0, 7, 0], sizes = [2, 1, 8], strides = [1, 1, 1]} : vector<2x16x8xf32> to vector<2x1x8xf32>
    %298 = vector.shape_cast %297 : vector<2x1x8xf32> to vector<2x8xf32>
    %299 = vector.extract_strided_slice %282 {offsets = [0, 8, 0], sizes = [2, 1, 8], strides = [1, 1, 1]} : vector<2x16x8xf32> to vector<2x1x8xf32>
    %300 = vector.shape_cast %299 : vector<2x1x8xf32> to vector<2x8xf32>
    %301 = vector.extract_strided_slice %282 {offsets = [0, 9, 0], sizes = [2, 1, 8], strides = [1, 1, 1]} : vector<2x16x8xf32> to vector<2x1x8xf32>
    %302 = vector.shape_cast %301 : vector<2x1x8xf32> to vector<2x8xf32>
    %303 = vector.extract_strided_slice %282 {offsets = [0, 10, 0], sizes = [2, 1, 8], strides = [1, 1, 1]} : vector<2x16x8xf32> to vector<2x1x8xf32>
    %304 = vector.shape_cast %303 : vector<2x1x8xf32> to vector<2x8xf32>
    %305 = vector.extract_strided_slice %282 {offsets = [0, 11, 0], sizes = [2, 1, 8], strides = [1, 1, 1]} : vector<2x16x8xf32> to vector<2x1x8xf32>
    %306 = vector.shape_cast %305 : vector<2x1x8xf32> to vector<2x8xf32>
    %307 = vector.extract_strided_slice %282 {offsets = [0, 12, 0], sizes = [2, 1, 8], strides = [1, 1, 1]} : vector<2x16x8xf32> to vector<2x1x8xf32>
    %308 = vector.shape_cast %307 : vector<2x1x8xf32> to vector<2x8xf32>
    %309 = vector.extract_strided_slice %282 {offsets = [0, 13, 0], sizes = [2, 1, 8], strides = [1, 1, 1]} : vector<2x16x8xf32> to vector<2x1x8xf32>
    %310 = vector.shape_cast %309 : vector<2x1x8xf32> to vector<2x8xf32>
    %311 = vector.extract_strided_slice %282 {offsets = [0, 14, 0], sizes = [2, 1, 8], strides = [1, 1, 1]} : vector<2x16x8xf32> to vector<2x1x8xf32>
    %312 = vector.shape_cast %311 : vector<2x1x8xf32> to vector<2x8xf32>
    %313 = vector.extract_strided_slice %282 {offsets = [0, 15, 0], sizes = [2, 1, 8], strides = [1, 1, 1]} : vector<2x16x8xf32> to vector<2x1x8xf32>
    %314 = vector.shape_cast %313 : vector<2x1x8xf32> to vector<2x8xf32>
    %315 = tpu.concatenate %284, %286, %288, %290, %292, %294, %296, %298, %300, %302, %304, %306, %308, %310, %312, %314 in 1 : vector<2x8xf32>, vector<2x8xf32>, vector<2x8xf32>, vector<2x8xf32>, vector<2x8xf32>, vector<2x8xf32>, vector<2x8xf32>, vector<2x8xf32>, vector<2x8xf32>, vector<2x8xf32>, vector<2x8xf32>, vector<2x8xf32>, vector<2x8xf32>, vector<2x8xf32>, vector<2x8xf32>, vector<2x8xf32> -> vector<2x128xf32>
    %316 = vector.shape_cast %281 : vector<32x8xf32> to vector<2x16x8xf32>
    %317 = vector.extract_strided_slice %316 {offsets = [0, 0, 0], sizes = [2, 1, 8], strides = [1, 1, 1]} : vector<2x16x8xf32> to vector<2x1x8xf32>
    %318 = vector.shape_cast %317 : vector<2x1x8xf32> to vector<2x8xf32>
    %319 = vector.extract_strided_slice %316 {offsets = [0, 1, 0], sizes = [2, 1, 8], strides = [1, 1, 1]} : vector<2x16x8xf32> to vector<2x1x8xf32>
    %320 = vector.shape_cast %319 : vector<2x1x8xf32> to vector<2x8xf32>
    %321 = vector.extract_strided_slice %316 {offsets = [0, 2, 0], sizes = [2, 1, 8], strides = [1, 1, 1]} : vector<2x16x8xf32> to vector<2x1x8xf32>
    %322 = vector.shape_cast %321 : vector<2x1x8xf32> to vector<2x8xf32>
    %323 = vector.extract_strided_slice %316 {offsets = [0, 3, 0], sizes = [2, 1, 8], strides = [1, 1, 1]} : vector<2x16x8xf32> to vector<2x1x8xf32>
    %324 = vector.shape_cast %323 : vector<2x1x8xf32> to vector<2x8xf32>
    %325 = vector.extract_strided_slice %316 {offsets = [0, 4, 0], sizes = [2, 1, 8], strides = [1, 1, 1]} : vector<2x16x8xf32> to vector<2x1x8xf32>
    %326 = vector.shape_cast %325 : vector<2x1x8xf32> to vector<2x8xf32>
    %327 = vector.extract_strided_slice %316 {offsets = [0, 5, 0], sizes = [2, 1, 8], strides = [1, 1, 1]} : vector<2x16x8xf32> to vector<2x1x8xf32>
    %328 = vector.shape_cast %327 : vector<2x1x8xf32> to vector<2x8xf32>
    %329 = vector.extract_strided_slice %316 {offsets = [0, 6, 0], sizes = [2, 1, 8], strides = [1, 1, 1]} : vector<2x16x8xf32> to vector<2x1x8xf32>
    %330 = vector.shape_cast %329 : vector<2x1x8xf32> to vector<2x8xf32>
    %331 = vector.extract_strided_slice %316 {offsets = [0, 7, 0], sizes = [2, 1, 8], strides = [1, 1, 1]} : vector<2x16x8xf32> to vector<2x1x8xf32>
    %332 = vector.shape_cast %331 : vector<2x1x8xf32> to vector<2x8xf32>
    %333 = vector.extract_strided_slice %316 {offsets = [0, 8, 0], sizes = [2, 1, 8], strides = [1, 1, 1]} : vector<2x16x8xf32> to vector<2x1x8xf32>
    %334 = vector.shape_cast %333 : vector<2x1x8xf32> to vector<2x8xf32>
    %335 = vector.extract_strided_slice %316 {offsets = [0, 9, 0], sizes = [2, 1, 8], strides = [1, 1, 1]} : vector<2x16x8xf32> to vector<2x1x8xf32>
    %336 = vector.shape_cast %335 : vector<2x1x8xf32> to vector<2x8xf32>
    %337 = vector.extract_strided_slice %316 {offsets = [0, 10, 0], sizes = [2, 1, 8], strides = [1, 1, 1]} : vector<2x16x8xf32> to vector<2x1x8xf32>
    %338 = vector.shape_cast %337 : vector<2x1x8xf32> to vector<2x8xf32>
    %339 = vector.extract_strided_slice %316 {offsets = [0, 11, 0], sizes = [2, 1, 8], strides = [1, 1, 1]} : vector<2x16x8xf32> to vector<2x1x8xf32>
    %340 = vector.shape_cast %339 : vector<2x1x8xf32> to vector<2x8xf32>
    %341 = vector.extract_strided_slice %316 {offsets = [0, 12, 0], sizes = [2, 1, 8], strides = [1, 1, 1]} : vector<2x16x8xf32> to vector<2x1x8xf32>
    %342 = vector.shape_cast %341 : vector<2x1x8xf32> to vector<2x8xf32>
    %343 = vector.extract_strided_slice %316 {offsets = [0, 13, 0], sizes = [2, 1, 8], strides = [1, 1, 1]} : vector<2x16x8xf32> to vector<2x1x8xf32>
    %344 = vector.shape_cast %343 : vector<2x1x8xf32> to vector<2x8xf32>
    %345 = vector.extract_strided_slice %316 {offsets = [0, 14, 0], sizes = [2, 1, 8], strides = [1, 1, 1]} : vector<2x16x8xf32> to vector<2x1x8xf32>
    %346 = vector.shape_cast %345 : vector<2x1x8xf32> to vector<2x8xf32>
    %347 = vector.extract_strided_slice %316 {offsets = [0, 15, 0], sizes = [2, 1, 8], strides = [1, 1, 1]} : vector<2x16x8xf32> to vector<2x1x8xf32>
    %348 = vector.shape_cast %347 : vector<2x1x8xf32> to vector<2x8xf32>
    %349 = tpu.concatenate %318, %320, %322, %324, %326, %328, %330, %332, %334, %336, %338, %340, %342, %344, %346, %348 in 1 : vector<2x8xf32>, vector<2x8xf32>, vector<2x8xf32>, vector<2x8xf32>, vector<2x8xf32>, vector<2x8xf32>, vector<2x8xf32>, vector<2x8xf32>, vector<2x8xf32>, vector<2x8xf32>, vector<2x8xf32>, vector<2x8xf32>, vector<2x8xf32>, vector<2x8xf32>, vector<2x8xf32>, vector<2x8xf32> -> vector<2x128xf32>
    %350 = tpu.concatenate %315, %349 in 1 : vector<2x128xf32>, vector<2x128xf32> -> vector<2x256xf32>
    %c0_84 = arith.constant 0 : index
    %c0_85 = arith.constant 0 : index
    %351 = vector.load %arg7[%c0_84, %c0_85] : memref<2x256xf32, #tpu.memory_space<vmem>>, vector<2x256xf32>
    tpu.vector_store %arg7[%c0_84, %c0_85], %350 {strides = array<i32>} : memref<2x256xf32, #tpu.memory_space<vmem>>, vector<2x256xf32>,
    return
  }
  func.func @transform_0(%arg0: i32) -> (i32, i32) {
    %c0_i32 = arith.constant 0 : i32
    %c0_i32_0 = arith.constant 0 : i32
    %c0_i32_1 = arith.constant 0 : i32
    return %c0_i32, %c0_i32_0 : i32, i32
  }
  func.func @transform_1(%arg0: i32) -> (i32, i32, i32) {
    %c0_i32 = arith.constant 0 : i32
    %c0_i32_0 = arith.constant 0 : i32
    %c0_i32_1 = arith.constant 0 : i32
    %c0_i32_2 = arith.constant 0 : i32
    return %c0_i32, %c0_i32_0, %c0_i32_1 : i32, i32, i32
  }
  func.func @transform_2(%arg0: i32) -> (i32, i32, i32) {
    %c0_i32 = arith.constant 0 : i32
    %c0_i32_0 = arith.constant 0 : i32
    %c0_i32_1 = arith.constant 0 : i32
    %c0_i32_2 = arith.constant 0 : i32
    return %c0_i32, %c0_i32_0, %c0_i32_1 : i32, i32, i32
  }
  func.func @transform_3(%arg0: i32) -> (i32, i32, i32) {
    %c0_i32 = arith.constant 0 : i32
    %c0_i32_0 = arith.constant 0 : i32
    %c0_i32_1 = arith.constant 0 : i32
    %c0_i32_2 = arith.constant 0 : i32
    return %c0_i32, %c0_i32_0, %c0_i32_1 : i32, i32, i32
  }
  func.func @transform_4(%arg0: i32) -> (i32, i32) {
    %c0_i32 = arith.constant 0 : i32
    %c0_i32_0 = arith.constant 0 : i32
    %c0_i32_1 = arith.constant 0 : i32
    return %c0_i32, %c0_i32_0 : i32, i32
  }
  func.func @transform_5(%arg0: i32) -> (i32, i32) {
    %c0_i32 = arith.constant 0 : i32
    %c0_i32_0 = arith.constant 0 : i32
    %c0_i32_1 = arith.constant 0 : i32
    return %c0_i32, %c0_i32_0 : i32, i32
  }
  func.func @transform_6(%arg0: i32) -> (i32, i32) {
    %c0_i32 = arith.constant 0 : i32
    %c0_i32_0 = arith.constant 0 : i32
    %c0_i32_1 = arith.constant 0 : i32
    return %c0_i32, %c0_i32_0 : i32, i32
  }
}

module attributes {stable_mosaic.version = 11 : i64} {
  func.func @kernel_premix(%arg0: i32, %arg1: memref<2x32xf32, #tpu.memory_space<vmem>>, %arg2: memref<2x8xf32, #tpu.memory_space<vmem>>, %arg3: memref<2x16x8xf32, #tpu.memory_space<vmem>>, %arg4: memref<2x16x8xf32, #tpu.memory_space<vmem>>, %arg5: memref<2x16x16xf32, #tpu.memory_space<vmem>>, %arg6: memref<640x128xbf16, #tpu.memory_space<vmem>>, %arg7: memref<1x2176xf32, #tpu.memory_space<vmem>>, %arg8: memref<2x256xf32, #tpu.memory_space<vmem>>) attributes {dimension_semantics = [#tpu.dimension_semantics<arbitrary>], iteration_bounds = array<i64: 1>, scalar_prefetch = 0 : i64, scratch_operands = 0 : i64, tpu.core_type = #tpu.core_type<tc>, window_params = [{pipeline_mode = #tpu.pipeline_mode<synchronous>, transform_indices = @transform_0, window_bounds = array<i64: 2, 32>}, {pipeline_mode = #tpu.pipeline_mode<synchronous>, transform_indices = @transform_1, window_bounds = array<i64: 2, 8>}, {pipeline_mode = #tpu.pipeline_mode<synchronous>, transform_indices = @transform_2, window_bounds = array<i64: 2, 16, 8>}, {pipeline_mode = #tpu.pipeline_mode<synchronous>, transform_indices = @transform_3, window_bounds = array<i64: 2, 16, 8>}, {pipeline_mode = #tpu.pipeline_mode<synchronous>, transform_indices = @transform_4, window_bounds = array<i64: 2, 16, 16>}, {pipeline_mode = #tpu.pipeline_mode<synchronous>, transform_indices = @transform_5, window_bounds = array<i64: 640, 128>}, {pipeline_mode = #tpu.pipeline_mode<synchronous>, transform_indices = @transform_6, window_bounds = array<i64: 1, 2176>}, {pipeline_mode = #tpu.pipeline_mode<synchronous>, transform_indices = @transform_7, window_bounds = array<i64: 2, 256>}]} {
    %c0 = arith.constant 0 : index
    %c0_0 = arith.constant 0 : index
    %0 = vector.load %arg1[%c0, %c0_0] : memref<2x32xf32, #tpu.memory_space<vmem>>, vector<2x32xf32>
    %c0_1 = arith.constant 0 : index
    %c0_2 = arith.constant 0 : index
    %1 = vector.load %arg2[%c0_1, %c0_2] : memref<2x8xf32, #tpu.memory_space<vmem>>, vector<2x8xf32>
    %2 = vector.shape_cast %1 : vector<2x8xf32> to vector<2x1x8xf32>
    %3 = vector.shape_cast %2 : vector<2x1x8xf32> to vector<2x1x8xf32>
    %4 = vector.broadcast %3 : vector<2x1x8xf32> to vector<2x16x8xf32>
    %5 = vector.shape_cast %4 : vector<2x16x8xf32> to vector<32x8xf32>
    %6 = tpu.iota {dimensions = array<i32: 1>} : vector<2x16x1xi32>
    %7 = vector.shape_cast %6 : vector<2x16x1xi32> to vector<32x1xi32>
    %8 = arith.sitofp %7 : vector<32x1xi32> to vector<32x1xf32>
    %9 = vector.extract_strided_slice %5 {offsets = [0, 5], sizes = [32, 1], strides = [1, 1]} : vector<32x8xf32> to vector<32x1xf32>
    %10 = arith.cmpf olt, %8, %9 : vector<32x1xf32>
    %11 = arith.extui %10 : vector<32x1xi1> to vector<32x1xi32>
    %12 = arith.sitofp %11 : vector<32x1xi32> to vector<32x1xf32>
    %c0_3 = arith.constant 0 : index
    %c0_4 = arith.constant 0 : index
    %c0_5 = arith.constant 0 : index
    %13 = vector.load %arg3[%c0_3, %c0_4, %c0_5] : memref<2x16x8xf32, #tpu.memory_space<vmem>>, vector<2x16x8xf32>
    %14 = vector.shape_cast %13 : vector<2x16x8xf32> to vector<32x8xf32>
    %c0_6 = arith.constant 0 : index
    %c0_7 = arith.constant 0 : index
    %c0_8 = arith.constant 0 : index
    %15 = vector.load %arg4[%c0_6, %c0_7, %c0_8] : memref<2x16x8xf32, #tpu.memory_space<vmem>>, vector<2x16x8xf32>
    %16 = vector.shape_cast %15 : vector<2x16x8xf32> to vector<32x8xf32>
    %17 = vector.extract_strided_slice %5 {offsets = [0, 1], sizes = [32, 1], strides = [1, 1]} : vector<32x8xf32> to vector<32x1xf32>
    %18 = vector.broadcast %17 : vector<32x1xf32> to vector<32x8xf32>
    %19 = arith.mulf %14, %18 : vector<32x8xf32>
    %20 = vector.extract_strided_slice %5 {offsets = [0, 2], sizes = [32, 1], strides = [1, 1]} : vector<32x8xf32> to vector<32x1xf32>
    %21 = vector.broadcast %20 : vector<32x1xf32> to vector<32x8xf32>
    %22 = arith.mulf %16, %21 : vector<32x8xf32>
    %23 = arith.addf %19, %22 : vector<32x8xf32>
    %24 = vector.extract_strided_slice %1 {offsets = [0, 0], sizes = [2, 1], strides = [1, 1]} : vector<2x8xf32> to vector<2x1xf32>
    %25 = arith.truncf %0 : vector<2x32xf32> to vector<2x32xbf16>
    %c192 = arith.constant 192 : index
    %c0_9 = arith.constant 0 : index
    %26 = vector.load %arg6[%c192, %c0_9] : memref<640x128xbf16, #tpu.memory_space<vmem>>, vector<32x128xbf16>
    %cst = arith.constant dense<0.000000e+00> : vector<2x128xf32>
    %27 = tpu.matmul %25, %26, %cst {dimension_numbers = #tpu.dot_dimension_numbers<[1], [0], [0], [1], [0, 0, 1, 1], [], []>} : vector<2x32xbf16>, vector<32x128xbf16>, vector<2x128xf32> -> vector<2x128xf32>
    %c0_10 = arith.constant 0 : index
    %c1024 = arith.constant 1024 : index
    %28 = vector.load %arg7[%c0_10, %c1024] : memref<1x2176xf32, #tpu.memory_space<vmem>>, vector<1x128xf32>
    %29 = vector.broadcast %24 : vector<2x1xf32> to vector<2x128xf32>
    %30 = vector.broadcast %28 : vector<1x128xf32> to vector<2x128xf32>
    %31 = arith.mulf %29, %30 : vector<2x128xf32>
    %32 = arith.addf %27, %31 : vector<2x128xf32>
    %c0_11 = arith.constant 0 : index
    %c1152 = arith.constant 1152 : index
    %33 = vector.load %arg7[%c0_11, %c1152] : memref<1x2176xf32, #tpu.memory_space<vmem>>, vector<1x128xf32>
    %34 = vector.broadcast %33 : vector<1x128xf32> to vector<2x128xf32>
    %35 = arith.addf %32, %34 : vector<2x128xf32>
    %36 = arith.negf %35 : vector<2x128xf32>
    %37 = math.exp %36 : vector<2x128xf32>
    %cst_12 = arith.constant 1.000000e+00 : f32
    %38 = vector.broadcast %cst_12 : f32 to vector<2x128xf32>
    %39 = arith.addf %38, %37 : vector<2x128xf32>
    %40 = arith.divf %38, %39 : vector<2x128xf32>
    %41 = arith.mulf %35, %40 : vector<2x128xf32>
    %42 = arith.truncf %41 : vector<2x128xf32> to vector<2x128xbf16>
    %c224 = arith.constant 224 : index
    %c0_13 = arith.constant 0 : index
    %43 = vector.load %arg6[%c224, %c0_13] : memref<640x128xbf16, #tpu.memory_space<vmem>>, vector<128x32xbf16>
    %cst_14 = arith.constant dense<0.000000e+00> : vector<2x32xf32>
    %44 = tpu.matmul %42, %43, %cst_14 {dimension_numbers = #tpu.dot_dimension_numbers<[1], [0], [0], [1], [0, 0, 1, 1], [], []>} : vector<2x128xbf16>, vector<128x32xbf16>, vector<2x32xf32> -> vector<2x32xf32>
    %c0_15 = arith.constant 0 : index
    %c1280 = arith.constant 1280 : index
    %45 = vector.load %arg7[%c0_15, %c1280] : memref<1x2176xf32, #tpu.memory_space<vmem>>, vector<1x32xf32>
    %46 = vector.broadcast %45 : vector<1x32xf32> to vector<2x32xf32>
    %47 = arith.addf %44, %46 : vector<2x32xf32>
    %48 = arith.addf %47, %0 : vector<2x32xf32>
    %c0_16 = arith.constant 0 : index
    %c1408 = arith.constant 1408 : index
    %49 = vector.load %arg7[%c0_16, %c1408] : memref<1x2176xf32, #tpu.memory_space<vmem>>, vector<1x32xf32>
    %c0_17 = arith.constant 0 : index
    %c1536 = arith.constant 1536 : index
    %50 = vector.load %arg7[%c0_17, %c1536] : memref<1x2176xf32, #tpu.memory_space<vmem>>, vector<1x32xf32>
    %cst_18 = arith.constant dense<0.000000e+00> : vector<2xf32>
    %51 = vector.multi_reduction <add>, %48, %cst_18 [1] : vector<2x32xf32> to vector<2xf32>
    %52 = vector.shape_cast %51 : vector<2xf32> to vector<2x1xf32>
    %cst_19 = arith.constant 3.200000e+01 : f32
    %53 = vector.broadcast %cst_19 : f32 to vector<2x1xf32>
    %54 = arith.divf %52, %53 : vector<2x1xf32>
    %55 = vector.broadcast %54 : vector<2x1xf32> to vector<2x32xf32>
    %56 = arith.subf %48, %55 : vector<2x32xf32>
    %57 = arith.mulf %56, %56 : vector<2x32xf32>
    %cst_20 = arith.constant dense<0.000000e+00> : vector<2xf32>
    %58 = vector.multi_reduction <add>, %57, %cst_20 [1] : vector<2x32xf32> to vector<2xf32>
    %59 = vector.shape_cast %58 : vector<2xf32> to vector<2x1xf32>
    %cst_21 = arith.constant 3.200000e+01 : f32
    %60 = vector.broadcast %cst_21 : f32 to vector<2x1xf32>
    %61 = arith.divf %59, %60 : vector<2x1xf32>
    %62 = vector.broadcast %54 : vector<2x1xf32> to vector<2x32xf32>
    %63 = arith.subf %48, %62 : vector<2x32xf32>
    %cst_22 = arith.constant 9.99999974E-6 : f32
    %64 = vector.broadcast %cst_22 : f32 to vector<2x1xf32>
    %65 = arith.addf %61, %64 : vector<2x1xf32>
    %66 = math.rsqrt %65 : vector<2x1xf32>
    %67 = vector.broadcast %66 : vector<2x1xf32> to vector<2x32xf32>
    %68 = arith.mulf %63, %67 : vector<2x32xf32>
    %69 = vector.broadcast %49 : vector<1x32xf32> to vector<2x32xf32>
    %70 = arith.mulf %68, %69 : vector<2x32xf32>
    %71 = vector.broadcast %50 : vector<1x32xf32> to vector<2x32xf32>
    %72 = arith.addf %70, %71 : vector<2x32xf32>
    %73 = arith.truncf %23 : vector<32x8xf32> to vector<32x8xbf16>
    %c0_23 = arith.constant 0 : index
    %c0_24 = arith.constant 0 : index
    %74 = vector.load %arg6[%c0_23, %c0_24] : memref<640x128xbf16, #tpu.memory_space<vmem>>, vector<8x32xbf16>
    %cst_25 = arith.constant dense<0.000000e+00> : vector<32x32xf32>
    %75 = tpu.matmul %73, %74, %cst_25 {dimension_numbers = #tpu.dot_dimension_numbers<[1], [0], [0], [1], [0, 0, 1, 1], [], []>} : vector<32x8xbf16>, vector<8x32xbf16>, vector<32x32xf32> -> vector<32x32xf32>
    %c0_26 = arith.constant 0 : index
    %c0_27 = arith.constant 0 : index
    %76 = vector.load %arg7[%c0_26, %c0_27] : memref<1x2176xf32, #tpu.memory_space<vmem>>, vector<1x32xf32>
    %77 = vector.broadcast %76 : vector<1x32xf32> to vector<32x32xf32>
    %78 = arith.addf %75, %77 : vector<32x32xf32>
    %c0_28 = arith.constant 0 : index
    %c128 = arith.constant 128 : index
    %79 = vector.load %arg7[%c0_28, %c128] : memref<1x2176xf32, #tpu.memory_space<vmem>>, vector<1x32xf32>
    %c0_29 = arith.constant 0 : index
    %c256 = arith.constant 256 : index
    %80 = vector.load %arg7[%c0_29, %c256] : memref<1x2176xf32, #tpu.memory_space<vmem>>, vector<1x32xf32>
    %cst_30 = arith.constant dense<0.000000e+00> : vector<32xf32>
    %81 = vector.multi_reduction <add>, %78, %cst_30 [1] : vector<32x32xf32> to vector<32xf32>
    %82 = vector.shape_cast %81 : vector<32xf32> to vector<32x1xf32>
    %cst_31 = arith.constant 3.200000e+01 : f32
    %83 = vector.broadcast %cst_31 : f32 to vector<32x1xf32>
    %84 = arith.divf %82, %83 : vector<32x1xf32>
    %85 = vector.broadcast %84 : vector<32x1xf32> to vector<32x32xf32>
    %86 = arith.subf %78, %85 : vector<32x32xf32>
    %87 = arith.mulf %86, %86 : vector<32x32xf32>
    %cst_32 = arith.constant dense<0.000000e+00> : vector<32xf32>
    %88 = vector.multi_reduction <add>, %87, %cst_32 [1] : vector<32x32xf32> to vector<32xf32>
    %89 = vector.shape_cast %88 : vector<32xf32> to vector<32x1xf32>
    %cst_33 = arith.constant 3.200000e+01 : f32
    %90 = vector.broadcast %cst_33 : f32 to vector<32x1xf32>
    %91 = arith.divf %89, %90 : vector<32x1xf32>
    %92 = vector.broadcast %84 : vector<32x1xf32> to vector<32x32xf32>
    %93 = arith.subf %78, %92 : vector<32x32xf32>
    %cst_34 = arith.constant 9.99999974E-6 : f32
    %94 = vector.broadcast %cst_34 : f32 to vector<32x1xf32>
    %95 = arith.addf %91, %94 : vector<32x1xf32>
    %96 = math.rsqrt %95 : vector<32x1xf32>
    %97 = vector.broadcast %96 : vector<32x1xf32> to vector<32x32xf32>
    %98 = arith.mulf %93, %97 : vector<32x32xf32>
    %99 = vector.broadcast %79 : vector<1x32xf32> to vector<32x32xf32>
    %100 = arith.mulf %98, %99 : vector<32x32xf32>
    %101 = vector.broadcast %80 : vector<1x32xf32> to vector<32x32xf32>
    %102 = arith.addf %100, %101 : vector<32x32xf32>
    %103 = arith.negf %102 : vector<32x32xf32>
    %104 = math.exp %103 : vector<32x32xf32>
    %cst_35 = arith.constant 1.000000e+00 : f32
    %105 = vector.broadcast %cst_35 : f32 to vector<32x32xf32>
    %106 = arith.addf %105, %104 : vector<32x32xf32>
    %107 = arith.divf %105, %106 : vector<32x32xf32>
    %108 = arith.mulf %102, %107 : vector<32x32xf32>
    %c0_36 = arith.constant 0 : index
    %c0_37 = arith.constant 0 : index
    %c0_38 = arith.constant 0 : index
    %109 = vector.load %arg5[%c0_36, %c0_37, %c0_38] : memref<2x16x16xf32, #tpu.memory_space<vmem>>, vector<2x16x16xf32>
    %110 = vector.shape_cast %109 : vector<2x16x16xf32> to vector<32x16xf32>
    %111 = arith.truncf %110 : vector<32x16xf32> to vector<32x16xbf16>
    %c16 = arith.constant 16 : index
    %c0_39 = arith.constant 0 : index
    %112 = vector.load %arg6[%c16, %c0_39] : memref<640x128xbf16, #tpu.memory_space<vmem>>, vector<16x32xbf16>
    %cst_40 = arith.constant dense<0.000000e+00> : vector<32x32xf32>
    %113 = tpu.matmul %111, %112, %cst_40 {dimension_numbers = #tpu.dot_dimension_numbers<[1], [0], [0], [1], [0, 0, 1, 1], [], []>} : vector<32x16xbf16>, vector<16x32xbf16>, vector<32x32xf32> -> vector<32x32xf32>
    %c0_41 = arith.constant 0 : index
    %c384 = arith.constant 384 : index
    %114 = vector.load %arg7[%c0_41, %c384] : memref<1x2176xf32, #tpu.memory_space<vmem>>, vector<1x32xf32>
    %115 = vector.broadcast %114 : vector<1x32xf32> to vector<32x32xf32>
    %116 = arith.addf %113, %115 : vector<32x32xf32>
    %117 = arith.truncf %116 : vector<32x32xf32> to vector<32x32xbf16>
    %c32 = arith.constant 32 : index
    %c0_42 = arith.constant 0 : index
    %118 = vector.load %arg6[%c32, %c0_42] : memref<640x128xbf16, #tpu.memory_space<vmem>>, vector<32x128xbf16>
    %cst_43 = arith.constant dense<0.000000e+00> : vector<32x128xf32>
    %119 = tpu.matmul %117, %118, %cst_43 {dimension_numbers = #tpu.dot_dimension_numbers<[1], [0], [0], [1], [0, 0, 1, 1], [], []>} : vector<32x32xbf16>, vector<32x128xbf16>, vector<32x128xf32> -> vector<32x128xf32>
    %c0_44 = arith.constant 0 : index
    %c512 = arith.constant 512 : index
    %120 = vector.load %arg7[%c0_44, %c512] : memref<1x2176xf32, #tpu.memory_space<vmem>>, vector<1x128xf32>
    %121 = vector.broadcast %120 : vector<1x128xf32> to vector<32x128xf32>
    %122 = arith.addf %119, %121 : vector<32x128xf32>
    %123 = arith.negf %122 : vector<32x128xf32>
    %124 = math.exp %123 : vector<32x128xf32>
    %cst_45 = arith.constant 1.000000e+00 : f32
    %125 = vector.broadcast %cst_45 : f32 to vector<32x128xf32>
    %126 = arith.addf %125, %124 : vector<32x128xf32>
    %127 = arith.divf %125, %126 : vector<32x128xf32>
    %128 = arith.mulf %122, %127 : vector<32x128xf32>
    %129 = arith.truncf %128 : vector<32x128xf32> to vector<32x128xbf16>
    %c64 = arith.constant 64 : index
    %c0_46 = arith.constant 0 : index
    %130 = vector.load %arg6[%c64, %c0_46] : memref<640x128xbf16, #tpu.memory_space<vmem>>, vector<128x32xbf16>
    %cst_47 = arith.constant dense<0.000000e+00> : vector<32x32xf32>
    %131 = tpu.matmul %129, %130, %cst_47 {dimension_numbers = #tpu.dot_dimension_numbers<[1], [0], [0], [1], [0, 0, 1, 1], [], []>} : vector<32x128xbf16>, vector<128x32xbf16>, vector<32x32xf32> -> vector<32x32xf32>
    %c0_48 = arith.constant 0 : index
    %c640 = arith.constant 640 : index
    %132 = vector.load %arg7[%c0_48, %c640] : memref<1x2176xf32, #tpu.memory_space<vmem>>, vector<1x32xf32>
    %133 = vector.broadcast %132 : vector<1x32xf32> to vector<32x32xf32>
    %134 = arith.addf %131, %133 : vector<32x32xf32>
    %135 = arith.addf %134, %116 : vector<32x32xf32>
    %c0_49 = arith.constant 0 : index
    %c768 = arith.constant 768 : index
    %136 = vector.load %arg7[%c0_49, %c768] : memref<1x2176xf32, #tpu.memory_space<vmem>>, vector<1x32xf32>
    %c0_50 = arith.constant 0 : index
    %c896 = arith.constant 896 : index
    %137 = vector.load %arg7[%c0_50, %c896] : memref<1x2176xf32, #tpu.memory_space<vmem>>, vector<1x32xf32>
    %cst_51 = arith.constant dense<0.000000e+00> : vector<32xf32>
    %138 = vector.multi_reduction <add>, %135, %cst_51 [1] : vector<32x32xf32> to vector<32xf32>
    %139 = vector.shape_cast %138 : vector<32xf32> to vector<32x1xf32>
    %cst_52 = arith.constant 3.200000e+01 : f32
    %140 = vector.broadcast %cst_52 : f32 to vector<32x1xf32>
    %141 = arith.divf %139, %140 : vector<32x1xf32>
    %142 = vector.broadcast %141 : vector<32x1xf32> to vector<32x32xf32>
    %143 = arith.subf %135, %142 : vector<32x32xf32>
    %144 = arith.mulf %143, %143 : vector<32x32xf32>
    %cst_53 = arith.constant dense<0.000000e+00> : vector<32xf32>
    %145 = vector.multi_reduction <add>, %144, %cst_53 [1] : vector<32x32xf32> to vector<32xf32>
    %146 = vector.shape_cast %145 : vector<32xf32> to vector<32x1xf32>
    %cst_54 = arith.constant 3.200000e+01 : f32
    %147 = vector.broadcast %cst_54 : f32 to vector<32x1xf32>
    %148 = arith.divf %146, %147 : vector<32x1xf32>
    %149 = vector.broadcast %141 : vector<32x1xf32> to vector<32x32xf32>
    %150 = arith.subf %135, %149 : vector<32x32xf32>
    %cst_55 = arith.constant 9.99999974E-6 : f32
    %151 = vector.broadcast %cst_55 : f32 to vector<32x1xf32>
    %152 = arith.addf %148, %151 : vector<32x1xf32>
    %153 = math.rsqrt %152 : vector<32x1xf32>
    %154 = vector.broadcast %153 : vector<32x1xf32> to vector<32x32xf32>
    %155 = arith.mulf %150, %154 : vector<32x32xf32>
    %156 = vector.broadcast %136 : vector<1x32xf32> to vector<32x32xf32>
    %157 = arith.mulf %155, %156 : vector<32x32xf32>
    %158 = vector.broadcast %137 : vector<1x32xf32> to vector<32x32xf32>
    %159 = arith.addf %157, %158 : vector<32x32xf32>
    %160 = arith.truncf %159 : vector<32x32xf32> to vector<32x32xbf16>
    %c352 = arith.constant 352 : index
    %c0_56 = arith.constant 0 : index
    %161 = vector.load %arg6[%c352, %c0_56] : memref<640x128xbf16, #tpu.memory_space<vmem>>, vector<32x128xbf16>
    %cst_57 = arith.constant dense<0.000000e+00> : vector<32x128xf32>
    %162 = tpu.matmul %160, %161, %cst_57 {dimension_numbers = #tpu.dot_dimension_numbers<[1], [0], [0], [1], [0, 0, 1, 1], [], []>} : vector<32x32xbf16>, vector<32x128xbf16>, vector<32x128xf32> -> vector<32x128xf32>
    %163 = arith.truncf %72 : vector<2x32xf32> to vector<2x32xbf16>
    %c576 = arith.constant 576 : index
    %c0_58 = arith.constant 0 : index
    %164 = vector.load %arg6[%c576, %c0_58] : memref<640x128xbf16, #tpu.memory_space<vmem>>, vector<32x64xbf16>
    %cst_59 = arith.constant dense<0.000000e+00> : vector<2x64xf32>
    %165 = tpu.matmul %163, %164, %cst_59 {dimension_numbers = #tpu.dot_dimension_numbers<[1], [0], [0], [1], [0, 0, 1, 1], [], []>} : vector<2x32xbf16>, vector<32x64xbf16>, vector<2x64xf32> -> vector<2x64xf32>
    %c0_60 = arith.constant 0 : index
    %c1792 = arith.constant 1792 : index
    %166 = vector.load %arg7[%c0_60, %c1792] : memref<1x2176xf32, #tpu.memory_space<vmem>>, vector<1x64xf32>
    %167 = vector.broadcast %166 : vector<1x64xf32> to vector<2x64xf32>
    %168 = arith.addf %165, %167 : vector<2x64xf32>
    %169 = vector.shape_cast %168 : vector<2x64xf32> to vector<2x1x64xf32>
    %170 = vector.shape_cast %169 : vector<2x1x64xf32> to vector<2x1x64xf32>
    %171 = vector.broadcast %170 : vector<2x1x64xf32> to vector<2x16x64xf32>
    %172 = vector.shape_cast %171 : vector<2x16x64xf32> to vector<32x64xf32>
    %c0_61 = arith.constant 0 : index
    %c1664 = arith.constant 1664 : index
    %173 = vector.load %arg7[%c0_61, %c1664] : memref<1x2176xf32, #tpu.memory_space<vmem>>, vector<1x128xf32>
    %cst_62 = arith.constant 0.000000e+00 : f32
    %174 = vector.broadcast %cst_62 : f32 to vector<32x32xf32>
    %175 = vector.extract_strided_slice %172 {offsets = [0, 0], sizes = [32, 32], strides = [1, 1]} : vector<32x64xf32> to vector<32x32xf32>
    %176 = arith.addf %108, %175 : vector<32x32xf32>
    %c2_i32 = arith.constant 2 : i32
    %177 = vector.broadcast %c2_i32 : i32 to vector<32x1xi32>
    %178 = arith.cmpi sge, %7, %177 : vector<32x1xi32>
    %c2_i32_63 = arith.constant 2 : i32
    %179 = tpu.dynamic_rotate %176 by %c2_i32_63 dim 0 : vector<32x32xf32>, i32 -> vector<32x32xf32>
    %cst_64 = arith.constant 0.000000e+00 : f32
    %180 = vector.shape_cast %178 : vector<32x1xi1> to vector<32x1xi1>
    %181 = vector.broadcast %180 : vector<32x1xi1> to vector<32x32xi1>
    %182 = vector.broadcast %cst_64 : f32 to vector<32x32xf32>
    %183 = arith.select %181, %179, %182 : vector<32x32xi1>, vector<32x32xf32>
    %c14_i32 = arith.constant 14 : i32
    %184 = vector.broadcast %c14_i32 : i32 to vector<32x1xi32>
    %185 = arith.cmpi slt, %7, %184 : vector<32x1xi32>
    %c30_i32 = arith.constant 30 : i32
    %186 = tpu.dynamic_rotate %176 by %c30_i32 dim 0 : vector<32x32xf32>, i32 -> vector<32x32xf32>
    %cst_65 = arith.constant 0.000000e+00 : f32
    %187 = vector.shape_cast %185 : vector<32x1xi1> to vector<32x1xi1>
    %188 = vector.broadcast %187 : vector<32x1xi1> to vector<32x32xi1>
    %189 = vector.broadcast %cst_65 : f32 to vector<32x32xf32>
    %190 = arith.select %188, %186, %189 : vector<32x32xi1>, vector<32x32xf32>
    %191 = tpu.concatenate %183, %176, %190 in 1 : vector<32x32xf32>, vector<32x32xf32>, vector<32x32xf32> -> vector<32x96xf32>
    %192 = arith.truncf %191 : vector<32x96xf32> to vector<32x96xbf16>
    %c384_66 = arith.constant 384 : index
    %c0_67 = arith.constant 0 : index
    %193 = vector.load %arg6[%c384_66, %c0_67] : memref<640x128xbf16, #tpu.memory_space<vmem>>, vector<96x64xbf16>
    %cst_68 = arith.constant dense<0.000000e+00> : vector<32x64xf32>
    %194 = tpu.matmul %192, %193, %cst_68 {dimension_numbers = #tpu.dot_dimension_numbers<[1], [0], [0], [1], [0, 0, 1, 1], [], []>} : vector<32x96xbf16>, vector<96x64xbf16>, vector<32x64xf32> -> vector<32x64xf32>
    %195 = vector.extract_strided_slice %162 {offsets = [0, 0], sizes = [32, 64], strides = [1, 1]} : vector<32x128xf32> to vector<32x64xf32>
    %196 = arith.addf %194, %195 : vector<32x64xf32>
    %197 = vector.extract_strided_slice %173 {offsets = [0, 0], sizes = [1, 64], strides = [1, 1]} : vector<1x128xf32> to vector<1x64xf32>
    %198 = vector.broadcast %197 : vector<1x64xf32> to vector<32x64xf32>
    %199 = arith.addf %196, %198 : vector<32x64xf32>
    %200 = vector.extract_strided_slice %199 {offsets = [0, 0], sizes = [32, 32], strides = [1, 1]} : vector<32x64xf32> to vector<32x32xf32>
    %201 = math.tanh %200 : vector<32x32xf32>
    %202 = vector.extract_strided_slice %199 {offsets = [0, 32], sizes = [32, 32], strides = [1, 1]} : vector<32x64xf32> to vector<32x32xf32>
    %203 = arith.negf %202 : vector<32x32xf32>
    %204 = math.exp %203 : vector<32x32xf32>
    %cst_69 = arith.constant 1.000000e+00 : f32
    %205 = vector.broadcast %cst_69 : f32 to vector<32x32xf32>
    %206 = arith.addf %205, %204 : vector<32x32xf32>
    %207 = arith.divf %205, %206 : vector<32x32xf32>
    %208 = arith.mulf %201, %207 : vector<32x32xf32>
    %209 = vector.broadcast %12 : vector<32x1xf32> to vector<32x32xf32>
    %210 = arith.mulf %208, %209 : vector<32x32xf32>
    %211 = arith.addf %108, %210 : vector<32x32xf32>
    %212 = arith.addf %174, %210 : vector<32x32xf32>
    %213 = vector.extract_strided_slice %172 {offsets = [0, 32], sizes = [32, 32], strides = [1, 1]} : vector<32x64xf32> to vector<32x32xf32>
    %214 = arith.addf %211, %213 : vector<32x32xf32>
    %c2_i32_70 = arith.constant 2 : i32
    %215 = vector.broadcast %c2_i32_70 : i32 to vector<32x1xi32>
    %216 = arith.cmpi sge, %7, %215 : vector<32x1xi32>
    %c2_i32_71 = arith.constant 2 : i32
    %217 = tpu.dynamic_rotate %214 by %c2_i32_71 dim 0 : vector<32x32xf32>, i32 -> vector<32x32xf32>
    %cst_72 = arith.constant 0.000000e+00 : f32
    %218 = vector.shape_cast %216 : vector<32x1xi1> to vector<32x1xi1>
    %219 = vector.broadcast %218 : vector<32x1xi1> to vector<32x32xi1>
    %220 = vector.broadcast %cst_72 : f32 to vector<32x32xf32>
    %221 = arith.select %219, %217, %220 : vector<32x32xi1>, vector<32x32xf32>
    %c14_i32_73 = arith.constant 14 : i32
    %222 = vector.broadcast %c14_i32_73 : i32 to vector<32x1xi32>
    %223 = arith.cmpi slt, %7, %222 : vector<32x1xi32>
    %c30_i32_74 = arith.constant 30 : i32
    %224 = tpu.dynamic_rotate %214 by %c30_i32_74 dim 0 : vector<32x32xf32>, i32 -> vector<32x32xf32>
    %cst_75 = arith.constant 0.000000e+00 : f32
    %225 = vector.shape_cast %223 : vector<32x1xi1> to vector<32x1xi1>
    %226 = vector.broadcast %225 : vector<32x1xi1> to vector<32x32xi1>
    %227 = vector.broadcast %cst_75 : f32 to vector<32x32xf32>
    %228 = arith.select %226, %224, %227 : vector<32x32xi1>, vector<32x32xf32>
    %229 = tpu.concatenate %221, %214, %228 in 1 : vector<32x32xf32>, vector<32x32xf32>, vector<32x32xf32> -> vector<32x96xf32>
    %230 = arith.truncf %229 : vector<32x96xf32> to vector<32x96xbf16>
    %c480 = arith.constant 480 : index
    %c0_76 = arith.constant 0 : index
    %231 = vector.load %arg6[%c480, %c0_76] : memref<640x128xbf16, #tpu.memory_space<vmem>>, vector<96x64xbf16>
    %cst_77 = arith.constant dense<0.000000e+00> : vector<32x64xf32>
    %232 = tpu.matmul %230, %231, %cst_77 {dimension_numbers = #tpu.dot_dimension_numbers<[1], [0], [0], [1], [0, 0, 1, 1], [], []>} : vector<32x96xbf16>, vector<96x64xbf16>, vector<32x64xf32> -> vector<32x64xf32>
    %233 = vector.extract_strided_slice %162 {offsets = [0, 64], sizes = [32, 64], strides = [1, 1]} : vector<32x128xf32> to vector<32x64xf32>
    %234 = arith.addf %232, %233 : vector<32x64xf32>
    %235 = vector.extract_strided_slice %173 {offsets = [0, 64], sizes = [1, 64], strides = [1, 1]} : vector<1x128xf32> to vector<1x64xf32>
    %236 = vector.broadcast %235 : vector<1x64xf32> to vector<32x64xf32>
    %237 = arith.addf %234, %236 : vector<32x64xf32>
    %238 = vector.extract_strided_slice %237 {offsets = [0, 0], sizes = [32, 32], strides = [1, 1]} : vector<32x64xf32> to vector<32x32xf32>
    %239 = math.tanh %238 : vector<32x32xf32>
    %240 = vector.extract_strided_slice %237 {offsets = [0, 32], sizes = [32, 32], strides = [1, 1]} : vector<32x64xf32> to vector<32x32xf32>
    %241 = arith.negf %240 : vector<32x32xf32>
    %242 = math.exp %241 : vector<32x32xf32>
    %cst_78 = arith.constant 1.000000e+00 : f32
    %243 = vector.broadcast %cst_78 : f32 to vector<32x32xf32>
    %244 = arith.addf %243, %242 : vector<32x32xf32>
    %245 = arith.divf %243, %244 : vector<32x32xf32>
    %246 = arith.mulf %239, %245 : vector<32x32xf32>
    %247 = vector.broadcast %12 : vector<32x1xf32> to vector<32x32xf32>
    %248 = arith.mulf %246, %247 : vector<32x32xf32>
    %249 = arith.addf %212, %248 : vector<32x32xf32>
    %cst_79 = arith.constant 0.707106769 : f32
    %250 = vector.broadcast %cst_79 : f32 to vector<32x32xf32>
    %251 = arith.mulf %249, %250 : vector<32x32xf32>
    %252 = arith.negf %251 : vector<32x32xf32>
    %253 = math.exp %252 : vector<32x32xf32>
    %cst_80 = arith.constant 1.000000e+00 : f32
    %254 = vector.broadcast %cst_80 : f32 to vector<32x32xf32>
    %255 = arith.addf %254, %253 : vector<32x32xf32>
    %256 = arith.divf %254, %255 : vector<32x32xf32>
    %257 = arith.mulf %251, %256 : vector<32x32xf32>
    %258 = arith.truncf %257 : vector<32x32xf32> to vector<32x32xbf16>
    %c608 = arith.constant 608 : index
    %c0_81 = arith.constant 0 : index
    %259 = vector.load %arg6[%c608, %c0_81] : memref<640x128xbf16, #tpu.memory_space<vmem>>, vector<32x8xbf16>
    %cst_82 = arith.constant dense<0.000000e+00> : vector<32x8xf32>
    %260 = tpu.matmul %258, %259, %cst_82 {dimension_numbers = #tpu.dot_dimension_numbers<[1], [0], [0], [1], [0, 0, 1, 1], [], []>} : vector<32x32xbf16>, vector<32x8xbf16>, vector<32x8xf32> -> vector<32x8xf32>
    %c0_83 = arith.constant 0 : index
    %c1920 = arith.constant 1920 : index
    %261 = vector.load %arg7[%c0_83, %c1920] : memref<1x2176xf32, #tpu.memory_space<vmem>>, vector<1x8xf32>
    %262 = vector.broadcast %261 : vector<1x8xf32> to vector<32x8xf32>
    %263 = arith.addf %260, %262 : vector<32x8xf32>
    %264 = vector.broadcast %12 : vector<32x1xf32> to vector<32x8xf32>
    %265 = arith.mulf %263, %264 : vector<32x8xf32>
    %266 = vector.extract_strided_slice %5 {offsets = [0, 3], sizes = [32, 1], strides = [1, 1]} : vector<32x8xf32> to vector<32x1xf32>
    %267 = vector.broadcast %266 : vector<32x1xf32> to vector<32x8xf32>
    %268 = arith.mulf %23, %267 : vector<32x8xf32>
    %269 = vector.extract_strided_slice %5 {offsets = [0, 4], sizes = [32, 1], strides = [1, 1]} : vector<32x8xf32> to vector<32x1xf32>
    %270 = vector.broadcast %269 : vector<32x1xf32> to vector<32x8xf32>
    %271 = arith.mulf %265, %270 : vector<32x8xf32>
    %272 = arith.subf %268, %271 : vector<32x8xf32>
    %273 = vector.shape_cast %265 : vector<32x8xf32> to vector<2x16x8xf32>
    %274 = vector.extract_strided_slice %273 {offsets = [0, 0, 0], sizes = [2, 1, 8], strides = [1, 1, 1]} : vector<2x16x8xf32> to vector<2x1x8xf32>
    %275 = vector.shape_cast %274 : vector<2x1x8xf32> to vector<2x8xf32>
    %276 = vector.extract_strided_slice %273 {offsets = [0, 1, 0], sizes = [2, 1, 8], strides = [1, 1, 1]} : vector<2x16x8xf32> to vector<2x1x8xf32>
    %277 = vector.shape_cast %276 : vector<2x1x8xf32> to vector<2x8xf32>
    %278 = vector.extract_strided_slice %273 {offsets = [0, 2, 0], sizes = [2, 1, 8], strides = [1, 1, 1]} : vector<2x16x8xf32> to vector<2x1x8xf32>
    %279 = vector.shape_cast %278 : vector<2x1x8xf32> to vector<2x8xf32>
    %280 = vector.extract_strided_slice %273 {offsets = [0, 3, 0], sizes = [2, 1, 8], strides = [1, 1, 1]} : vector<2x16x8xf32> to vector<2x1x8xf32>
    %281 = vector.shape_cast %280 : vector<2x1x8xf32> to vector<2x8xf32>
    %282 = vector.extract_strided_slice %273 {offsets = [0, 4, 0], sizes = [2, 1, 8], strides = [1, 1, 1]} : vector<2x16x8xf32> to vector<2x1x8xf32>
    %283 = vector.shape_cast %282 : vector<2x1x8xf32> to vector<2x8xf32>
    %284 = vector.extract_strided_slice %273 {offsets = [0, 5, 0], sizes = [2, 1, 8], strides = [1, 1, 1]} : vector<2x16x8xf32> to vector<2x1x8xf32>
    %285 = vector.shape_cast %284 : vector<2x1x8xf32> to vector<2x8xf32>
    %286 = vector.extract_strided_slice %273 {offsets = [0, 6, 0], sizes = [2, 1, 8], strides = [1, 1, 1]} : vector<2x16x8xf32> to vector<2x1x8xf32>
    %287 = vector.shape_cast %286 : vector<2x1x8xf32> to vector<2x8xf32>
    %288 = vector.extract_strided_slice %273 {offsets = [0, 7, 0], sizes = [2, 1, 8], strides = [1, 1, 1]} : vector<2x16x8xf32> to vector<2x1x8xf32>
    %289 = vector.shape_cast %288 : vector<2x1x8xf32> to vector<2x8xf32>
    %290 = vector.extract_strided_slice %273 {offsets = [0, 8, 0], sizes = [2, 1, 8], strides = [1, 1, 1]} : vector<2x16x8xf32> to vector<2x1x8xf32>
    %291 = vector.shape_cast %290 : vector<2x1x8xf32> to vector<2x8xf32>
    %292 = vector.extract_strided_slice %273 {offsets = [0, 9, 0], sizes = [2, 1, 8], strides = [1, 1, 1]} : vector<2x16x8xf32> to vector<2x1x8xf32>
    %293 = vector.shape_cast %292 : vector<2x1x8xf32> to vector<2x8xf32>
    %294 = vector.extract_strided_slice %273 {offsets = [0, 10, 0], sizes = [2, 1, 8], strides = [1, 1, 1]} : vector<2x16x8xf32> to vector<2x1x8xf32>
    %295 = vector.shape_cast %294 : vector<2x1x8xf32> to vector<2x8xf32>
    %296 = vector.extract_strided_slice %273 {offsets = [0, 11, 0], sizes = [2, 1, 8], strides = [1, 1, 1]} : vector<2x16x8xf32> to vector<2x1x8xf32>
    %297 = vector.shape_cast %296 : vector<2x1x8xf32> to vector<2x8xf32>
    %298 = vector.extract_strided_slice %273 {offsets = [0, 12, 0], sizes = [2, 1, 8], strides = [1, 1, 1]} : vector<2x16x8xf32> to vector<2x1x8xf32>
    %299 = vector.shape_cast %298 : vector<2x1x8xf32> to vector<2x8xf32>
    %300 = vector.extract_strided_slice %273 {offsets = [0, 13, 0], sizes = [2, 1, 8], strides = [1, 1, 1]} : vector<2x16x8xf32> to vector<2x1x8xf32>
    %301 = vector.shape_cast %300 : vector<2x1x8xf32> to vector<2x8xf32>
    %302 = vector.extract_strided_slice %273 {offsets = [0, 14, 0], sizes = [2, 1, 8], strides = [1, 1, 1]} : vector<2x16x8xf32> to vector<2x1x8xf32>
    %303 = vector.shape_cast %302 : vector<2x1x8xf32> to vector<2x8xf32>
    %304 = vector.extract_strided_slice %273 {offsets = [0, 15, 0], sizes = [2, 1, 8], strides = [1, 1, 1]} : vector<2x16x8xf32> to vector<2x1x8xf32>
    %305 = vector.shape_cast %304 : vector<2x1x8xf32> to vector<2x8xf32>
    %306 = tpu.concatenate %275, %277, %279, %281, %283, %285, %287, %289, %291, %293, %295, %297, %299, %301, %303, %305 in 1 : vector<2x8xf32>, vector<2x8xf32>, vector<2x8xf32>, vector<2x8xf32>, vector<2x8xf32>, vector<2x8xf32>, vector<2x8xf32>, vector<2x8xf32>, vector<2x8xf32>, vector<2x8xf32>, vector<2x8xf32>, vector<2x8xf32>, vector<2x8xf32>, vector<2x8xf32>, vector<2x8xf32>, vector<2x8xf32> -> vector<2x128xf32>
    %307 = vector.shape_cast %272 : vector<32x8xf32> to vector<2x16x8xf32>
    %308 = vector.extract_strided_slice %307 {offsets = [0, 0, 0], sizes = [2, 1, 8], strides = [1, 1, 1]} : vector<2x16x8xf32> to vector<2x1x8xf32>
    %309 = vector.shape_cast %308 : vector<2x1x8xf32> to vector<2x8xf32>
    %310 = vector.extract_strided_slice %307 {offsets = [0, 1, 0], sizes = [2, 1, 8], strides = [1, 1, 1]} : vector<2x16x8xf32> to vector<2x1x8xf32>
    %311 = vector.shape_cast %310 : vector<2x1x8xf32> to vector<2x8xf32>
    %312 = vector.extract_strided_slice %307 {offsets = [0, 2, 0], sizes = [2, 1, 8], strides = [1, 1, 1]} : vector<2x16x8xf32> to vector<2x1x8xf32>
    %313 = vector.shape_cast %312 : vector<2x1x8xf32> to vector<2x8xf32>
    %314 = vector.extract_strided_slice %307 {offsets = [0, 3, 0], sizes = [2, 1, 8], strides = [1, 1, 1]} : vector<2x16x8xf32> to vector<2x1x8xf32>
    %315 = vector.shape_cast %314 : vector<2x1x8xf32> to vector<2x8xf32>
    %316 = vector.extract_strided_slice %307 {offsets = [0, 4, 0], sizes = [2, 1, 8], strides = [1, 1, 1]} : vector<2x16x8xf32> to vector<2x1x8xf32>
    %317 = vector.shape_cast %316 : vector<2x1x8xf32> to vector<2x8xf32>
    %318 = vector.extract_strided_slice %307 {offsets = [0, 5, 0], sizes = [2, 1, 8], strides = [1, 1, 1]} : vector<2x16x8xf32> to vector<2x1x8xf32>
    %319 = vector.shape_cast %318 : vector<2x1x8xf32> to vector<2x8xf32>
    %320 = vector.extract_strided_slice %307 {offsets = [0, 6, 0], sizes = [2, 1, 8], strides = [1, 1, 1]} : vector<2x16x8xf32> to vector<2x1x8xf32>
    %321 = vector.shape_cast %320 : vector<2x1x8xf32> to vector<2x8xf32>
    %322 = vector.extract_strided_slice %307 {offsets = [0, 7, 0], sizes = [2, 1, 8], strides = [1, 1, 1]} : vector<2x16x8xf32> to vector<2x1x8xf32>
    %323 = vector.shape_cast %322 : vector<2x1x8xf32> to vector<2x8xf32>
    %324 = vector.extract_strided_slice %307 {offsets = [0, 8, 0], sizes = [2, 1, 8], strides = [1, 1, 1]} : vector<2x16x8xf32> to vector<2x1x8xf32>
    %325 = vector.shape_cast %324 : vector<2x1x8xf32> to vector<2x8xf32>
    %326 = vector.extract_strided_slice %307 {offsets = [0, 9, 0], sizes = [2, 1, 8], strides = [1, 1, 1]} : vector<2x16x8xf32> to vector<2x1x8xf32>
    %327 = vector.shape_cast %326 : vector<2x1x8xf32> to vector<2x8xf32>
    %328 = vector.extract_strided_slice %307 {offsets = [0, 10, 0], sizes = [2, 1, 8], strides = [1, 1, 1]} : vector<2x16x8xf32> to vector<2x1x8xf32>
    %329 = vector.shape_cast %328 : vector<2x1x8xf32> to vector<2x8xf32>
    %330 = vector.extract_strided_slice %307 {offsets = [0, 11, 0], sizes = [2, 1, 8], strides = [1, 1, 1]} : vector<2x16x8xf32> to vector<2x1x8xf32>
    %331 = vector.shape_cast %330 : vector<2x1x8xf32> to vector<2x8xf32>
    %332 = vector.extract_strided_slice %307 {offsets = [0, 12, 0], sizes = [2, 1, 8], strides = [1, 1, 1]} : vector<2x16x8xf32> to vector<2x1x8xf32>
    %333 = vector.shape_cast %332 : vector<2x1x8xf32> to vector<2x8xf32>
    %334 = vector.extract_strided_slice %307 {offsets = [0, 13, 0], sizes = [2, 1, 8], strides = [1, 1, 1]} : vector<2x16x8xf32> to vector<2x1x8xf32>
    %335 = vector.shape_cast %334 : vector<2x1x8xf32> to vector<2x8xf32>
    %336 = vector.extract_strided_slice %307 {offsets = [0, 14, 0], sizes = [2, 1, 8], strides = [1, 1, 1]} : vector<2x16x8xf32> to vector<2x1x8xf32>
    %337 = vector.shape_cast %336 : vector<2x1x8xf32> to vector<2x8xf32>
    %338 = vector.extract_strided_slice %307 {offsets = [0, 15, 0], sizes = [2, 1, 8], strides = [1, 1, 1]} : vector<2x16x8xf32> to vector<2x1x8xf32>
    %339 = vector.shape_cast %338 : vector<2x1x8xf32> to vector<2x8xf32>
    %340 = tpu.concatenate %309, %311, %313, %315, %317, %319, %321, %323, %325, %327, %329, %331, %333, %335, %337, %339 in 1 : vector<2x8xf32>, vector<2x8xf32>, vector<2x8xf32>, vector<2x8xf32>, vector<2x8xf32>, vector<2x8xf32>, vector<2x8xf32>, vector<2x8xf32>, vector<2x8xf32>, vector<2x8xf32>, vector<2x8xf32>, vector<2x8xf32>, vector<2x8xf32>, vector<2x8xf32>, vector<2x8xf32>, vector<2x8xf32> -> vector<2x128xf32>
    %341 = tpu.concatenate %306, %340 in 1 : vector<2x128xf32>, vector<2x128xf32> -> vector<2x256xf32>
    %c0_84 = arith.constant 0 : index
    %c0_85 = arith.constant 0 : index
    %342 = vector.load %arg8[%c0_84, %c0_85] : memref<2x256xf32, #tpu.memory_space<vmem>>, vector<2x256xf32>
    tpu.vector_store %arg8[%c0_84, %c0_85], %341 {strides = array<i32>} : memref<2x256xf32, #tpu.memory_space<vmem>>, vector<2x256xf32>,
    return
  }
  func.func @transform_0(%arg0: i32) -> (i32, i32) {
    %c0_i32 = arith.constant 0 : i32
    %c0_i32_0 = arith.constant 0 : i32
    %c0_i32_1 = arith.constant 0 : i32
    return %c0_i32, %c0_i32_0 : i32, i32
  }
  func.func @transform_1(%arg0: i32) -> (i32, i32) {
    %c0_i32 = arith.constant 0 : i32
    %c0_i32_0 = arith.constant 0 : i32
    %c0_i32_1 = arith.constant 0 : i32
    return %c0_i32, %c0_i32_0 : i32, i32
  }
  func.func @transform_2(%arg0: i32) -> (i32, i32, i32) {
    %c0_i32 = arith.constant 0 : i32
    %c0_i32_0 = arith.constant 0 : i32
    %c0_i32_1 = arith.constant 0 : i32
    %c0_i32_2 = arith.constant 0 : i32
    return %c0_i32, %c0_i32_0, %c0_i32_1 : i32, i32, i32
  }
  func.func @transform_3(%arg0: i32) -> (i32, i32, i32) {
    %c0_i32 = arith.constant 0 : i32
    %c0_i32_0 = arith.constant 0 : i32
    %c0_i32_1 = arith.constant 0 : i32
    %c0_i32_2 = arith.constant 0 : i32
    return %c0_i32, %c0_i32_0, %c0_i32_1 : i32, i32, i32
  }
  func.func @transform_4(%arg0: i32) -> (i32, i32, i32) {
    %c0_i32 = arith.constant 0 : i32
    %c0_i32_0 = arith.constant 0 : i32
    %c0_i32_1 = arith.constant 0 : i32
    %c0_i32_2 = arith.constant 0 : i32
    return %c0_i32, %c0_i32_0, %c0_i32_1 : i32, i32, i32
  }
  func.func @transform_5(%arg0: i32) -> (i32, i32) {
    %c0_i32 = arith.constant 0 : i32
    %c0_i32_0 = arith.constant 0 : i32
    %c0_i32_1 = arith.constant 0 : i32
    return %c0_i32, %c0_i32_0 : i32, i32
  }
  func.func @transform_6(%arg0: i32) -> (i32, i32) {
    %c0_i32 = arith.constant 0 : i32
    %c0_i32_0 = arith.constant 0 : i32
    %c0_i32_1 = arith.constant 0 : i32
    return %c0_i32, %c0_i32_0 : i32, i32
  }
  func.func @transform_7(%arg0: i32) -> (i32, i32) {
    %c0_i32 = arith.constant 0 : i32
    %c0_i32_0 = arith.constant 0 : i32
    %c0_i32_1 = arith.constant 0 : i32
    return %c0_i32, %c0_i32_0 : i32, i32
  }
}

</mosaic_0001>

<llo_original>
// kernel: diffusion_forward.1
$region0: #{diffusion_forward.1}
  #allocation0 [shape = 'u32[]', space=smem, size = 0x4, offset = 0x4, fixed_abs, tag = 'smem constant byte address 0x4 - core index']
  #allocation1 [shape = 'u32[144,128]{1,0:T(1,128)}', space=vmem, size = 0x12000, scoped, tag = 'internal scratch']
  %s0 = inlined_call_operand.vmem [shape: f32[2,8], index: 0, kind: input, shape index: {}]
  %s1 = inlined_call_operand.vmem [shape: f32[2,16,8], index: 1, kind: input, shape index: {}]
  %s2 = inlined_call_operand.vmem [shape: f32[2,16,8], index: 2, kind: input, shape index: {}]
  %s3 = inlined_call_operand.vmem [shape: f32[2,16,16], index: 3, kind: input, shape index: {}]
  %s4 = inlined_call_operand.vmem [shape: bf16[640,128], index: 4, kind: input, shape index: {}]
  %s5 = inlined_call_operand.vmem [shape: f32[1,2176], index: 5, kind: input, shape index: {}]
  %s6 = inlined_call_operand.vmem [shape: f32[2,256], index: 6, kind: output, shape index: {}]
  %s7 = sld [smem:[#allocation0]]
  $region34: #{diffusion_forward.1} parent=0
    _
  %s9 = ssub.s32 1, %s7
  %s10 = scalar_select 0, %s9, %s7
  // Predicated region
  $region2: #{diffusion_forward.1} parent=0 // pred_check
    _
  $region3: #{diffusion_forward.1} parent=0 // pred_check_branch
    %12 = sbr.rel (0) target = $region5
  $region4: #{diffusion_forward.1} parent=0 // pred_region
    _
  $region5: #{diffusion_forward.1} parent=0 // pred_fallthru
    _
  // Predicated region
  $region6: #{diffusion_forward.1} parent=0 // pred_check
    _
  $region7: #{diffusion_forward.1} parent=0 // pred_check_branch
    %14 = sbr.rel (0) target = $region9
  $region8: #{diffusion_forward.1} parent=0 // pred_region
    _
  $region9: #{diffusion_forward.1} parent=0 // pred_fallthru
    _
  // Predicated region
  $region10: #{diffusion_forward.1} parent=0 // pred_check
    _
  $region11: #{diffusion_forward.1} parent=0 // pred_check_branch
    %16 = sbr.rel (0) target = $region13
  $region12: #{diffusion_forward.1} parent=0 // pred_region
    _
  $region13: #{diffusion_forward.1} parent=0 // pred_fallthru
    _
  // Predicated region
  $region14: #{diffusion_forward.1} parent=0 // pred_check
    _
  $region15: #{diffusion_forward.1} parent=0 // pred_check_branch
    %18 = sbr.rel (0) target = $region17
  $region16: #{diffusion_forward.1} parent=0 // pred_region
    _
  $region17: #{diffusion_forward.1} parent=0 // pred_fallthru
    _
  // Predicated region
  $region18: #{diffusion_forward.1} parent=0 // pred_check
    _
  $region19: #{diffusion_forward.1} parent=0 // pred_check_branch
    %20 = sbr.rel (0) target = $region21
  $region20: #{diffusion_forward.1} parent=0 // pred_region
    _
  $region21: #{diffusion_forward.1} parent=0 // pred_fallthru
    _
  // Predicated region
  $region22: #{diffusion_forward.1} parent=0 // pred_check
    _
  $region23: #{diffusion_forward.1} parent=0 // pred_check_branch
    %22 = sbr.rel (0) target = $region25
  $region24: #{diffusion_forward.1} parent=0 // pred_region
    _
  $region25: #{diffusion_forward.1} parent=0 // pred_fallthru
    _
  %v24 = vld [vmem:[%s0] sm:$0x3]
  %v25 = vld [vmem:[%s5 + $0x10] sm:$0x1]
  %27 = vset.pattern.permute.xlu0 0
  %28 = vperm.xlu0 %27, %v24
  %v29 = vpop.permute.xlu0 %28
  %v32 = vlaneseq
  %v33 = vshrl.u32 %v32, 7
  %v34 = vsub.s32 0, %v33
  %v35 = vrot.slane %v25, %v34
  %v37 = vmul.f32 %v29, %v35
  %v38 = vmul.f32 %v37, 6.2831855
  %v39 = vand.u32 2147483647, %v38
  %vm40 = vcmp.le.f32.partialorder %v39, 0.7853982
  %vm41 = vcmp.lt.s32.totalorder %v38, 0
  %v42 = vand.u32 %v38, 2139095040
  %v43 = vshrl.u32 %v42, 23
  %v44 = vsub.s32 %v43, 127
  %v45 = vand.u32 2147483647, %v38
  %v46 = vand.u32 %v45, 8388607
  %v47 = vor.u32 %v46, 8388608
  %v48 = vsub.s32 0, %v47
  %v49 = vadd.s32 %v44, 1
  %vm50 = vcmp.gt.s32.totalorder %v49, 0
  %v51 = vsel %vm50, %v49, 0
  %v52 = vshrl.u32 %v51, 5
  %v53 = vand.u32 %v51, 31
  %v54 = vsub.s32 32, %v53
  %v55 = vshrl.u32 683565275, %v54
  %v56 = vshll.u32 683565275, %v53
  %v57 = vshrl.u32 2475754826, %v54
  %v58 = vor.u32 %v56, %v57
  %v59 = vshll.u32 2475754826, %v53
  %v60 = vshrl.u32 2131351028, %v54
  %v61 = vor.u32 %v59, %v60
  %v62 = vshll.u32 2131351028, %v53
  %v63 = vshrl.u32 2102212464, %v54
  %v64 = vor.u32 %v62, %v63
  %v65 = vshll.u32 2102212464, %v53
  %v66 = vshrl.u32 920167782, %v54
  %v67 = vor.u32 %v65, %v66
  %v68 = vshll.u32 920167782, %v53
  %v69 = vshrl.u32 1326507024, %v54
  %v70 = vor.u32 %v68, %v69
  %vm71 = vcmp.lt.s32.totalorder %v52, 1
  %vm72 = vcmp.lt.s32.totalorder %v52, 2
  %vm73 = vcmp.lt.s32.totalorder %v52, 3
  %vm74 = vcmp.lt.s32.totalorder %v52, 4
  %v75 = vsel %vm71, %v55, %v58
  %v76 = vsel %vm74, %v64, 2102212464
  %v77 = vsel %vm73, %v61, %v76
  %v78 = vsel %vm72, %v75, %v77
  %v79 = vsel %vm71, %v58, %v61
  %v80 = vsel %vm74, %v67, 920167782
  %v81 = vsel %vm73, %v64, %v80
  %v82 = vsel %vm72, %v79, %v81
  %v83 = vsel %vm71, %v61, %v64
  %v84 = vsel %vm74, %v70, 1326507024
  %v85 = vsel %vm73, %v67, %v84
  %v86 = vsel %vm72, %v83, %v85
  %v87 = vshll.u32 %v47, 8
  %v88 = vmul.u32.u64.compose %v87, %v86
  %v89 = vextract.low.u32 %v88
  %v90 = vextract.high.u32 %v88
  %v91 = vmul.u32.u64.compose %v87, %v82
  %v92 = vextract.low.u32 %v91
  %v93 = vextract.high.u32 %v91
  %v94 = vmul.u32 %v87, %v78
  %v95 = vadd.s32 %v90, %v92
  %vm96 = vc.u32 %v90, %v92
  %v97 = vadd.s32 %v93, 1
  %v98 = vsel %vm96, %v97, %v93
  %v99 = vadd.s32 %v94, %v98
  %v100 = vadd.s32 %v99, 536870912
  %v101 = vshrl.u32 %v100, 30
  %v102 = vshll.u32 %v101, 30
  %v103 = vsub.s32 %v99, %v102
  %vm104 = vcmp.lt.s32.totalorder %v103, 0
  %v105 = vsub.s32 0, %v103
  %v106 = vsel %vm104, %v105, %v103
  %v107 = vclz %v106
  %v108 = vsub.s32 %v107, 2
  %vm109 = vcmp.gt.s32.totalorder 0, %v108
  %v110 = vsel %vm109, 0, %v108
  %v111 = vsub.s32 32, %v110
  %v112 = vshll.u32 %v103, %v110
  %v113 = vshrl.u32 %v95, %v111
  %v114 = vor.u32 %v112, %v113
  %v115 = vsub.s32 4294967266, %v110
  %v116 = vadd.s32 %v115, 127
  %v117 = vshll.u32 %v116, 23
  %v118 = vor.u32 4788187, %v117
  %v119 = vand.u32 2147483647, %v118
  %v121 = vcvt.s32.f32 %v114
  %v122 = vmul.f32 %v121, %v119
  %v123 = vxor.u32 %v122, 2147483648
  %v124 = vsel %vm41, %v123, %v122
  %v125 = vsub.s32 4, %v101
  %v126 = vsel %vm41, %v125, %v101
  %v127 = vsel %vm40, %v38, %v124
  %v128 = vsel %vm40, 0, %v126
  %v129 = vcosq.f32.pop %v127
  %v130 = vsinq.f32.pop %v127
  %vm131 = vweird.f32 %v38
  %v132 = vadd.s32 %v128, 3
  %v133 = vand.u32 %v132, 3
  %vm134 = vcmp.lt.s32.totalorder %v133, 2
  %vm135 = vcmp.eq.s32.totalorder %v133, 0
  %v136 = vxor.u32 %v130, 2147483648
  %v137 = vsel %vm135, %v129, %v136
  %vm138 = vcmp.eq.s32.totalorder %v133, 2
  %v139 = vxor.u32 %v129, 2147483648
  %v140 = vsel %vm138, %v139, %v130
  %v141 = vsel %vm134, %v137, %v140
  %v142 = vsel %vm131, nan, %v141
  %v143 = vand.u32 2147483647, %v38
  %vm144 = vcmp.le.f32.partialorder %v143, 0.7853982
  %vm145 = vcmp.lt.s32.totalorder %v38, 0
  %v146 = vand.u32 %v38, 2139095040
  %v147 = vshrl.u32 %v146, 23
  %v148 = vsub.s32 %v147, 127
  %v149 = vand.u32 2147483647, %v38
  %v150 = vand.u32 %v149, 8388607
  %v151 = vor.u32 %v150, 8388608
  %v152 = vsub.s32 0, %v151
  %v153 = vadd.s32 %v148, 1
  %vm154 = vcmp.gt.s32.totalorder %v153, 0
  %v155 = vsel %vm154, %v153, 0
  %v156 = vshrl.u32 %v155, 5
  %v157 = vand.u32 %v155, 31
  %v158 = vsub.s32 32, %v157
  %v159 = vshrl.u32 683565275, %v158
  %v160 = vshll.u32 683565275, %v157
  %v161 = vshrl.u32 2475754826, %v158
  %v162 = vor.u32 %v160, %v161
  %v163 = vshll.u32 2475754826, %v157
  %v164 = vshrl.u32 2131351028, %v158
  %v165 = vor.u32 %v163, %v164
  %v166 = vshll.u32 2131351028, %v157
  %v167 = vshrl.u32 2102212464, %v158
  %v168 = vor.u32 %v166, %v167
  %v169 = vshll.u32 2102212464, %v157
  %v170 = vshrl.u32 920167782, %v158
  %v171 = vor.u32 %v169, %v170
  %v172 = vshll.u32 920167782, %v157
  %v173 = vshrl.u32 1326507024, %v158
  %v174 = vor.u32 %v172, %v173
  %vm175 = vcmp.lt.s32.totalorder %v156, 1
  %vm176 = vcmp.lt.s32.totalorder %v156, 2
  %vm177 = vcmp.lt.s32.totalorder %v156, 3
  %vm178 = vcmp.lt.s32.totalorder %v156, 4
  %v179 = vsel %vm175, %v159, %v162
  %v180 = vsel %vm178, %v168, 2102212464
  %v181 = vsel %vm177, %v165, %v180
  %v182 = vsel %vm176, %v179, %v181
  %v183 = vsel %vm175, %v162, %v165
  %v184 = vsel %vm178, %v171, 920167782
  %v185 = vsel %vm177, %v168, %v184
  %v186 = vsel %vm176, %v183, %v185
  %v187 = vsel %vm175, %v165, %v168
  %v188 = vsel %vm178, %v174, 1326507024
  %v189 = vsel %vm177, %v171, %v188
  %v190 = vsel %vm176, %v187, %v189
  %v191 = vshll.u32 %v151, 8
  %v192 = vmul.u32.u64.compose %v191, %v190
  %v193 = vextract.low.u32 %v192
  %v194 = vextract.high.u32 %v192
  %v195 = vmul.u32.u64.compose %v191, %v186
  %v196 = vextract.low.u32 %v195
  %v197 = vextract.high.u32 %v195
  %v198 = vmul.u32 %v191, %v182
  %v199 = vadd.s32 %v194, %v196
  %vm200 = vc.u32 %v194, %v196
  %v201 = vadd.s32 %v197, 1
  %v202 = vsel %vm200, %v201, %v197
  %v203 = vadd.s32 %v198, %v202
  %v204 = vadd.s32 %v203, 536870912
  %v205 = vshrl.u32 %v204, 30
  %v206 = vshll.u32 %v205, 30
  %v207 = vsub.s32 %v203, %v206
  %vm208 = vcmp.lt.s32.totalorder %v207, 0
  %v209 = vsub.s32 0, %v207
  %v210 = vsel %vm208, %v209, %v207
  %v211 = vclz %v210
  %v212 = vsub.s32 %v211, 2
  %vm213 = vcmp.gt.s32.totalorder 0, %v212
  %v214 = vsel %vm213, 0, %v212
  %v215 = vsub.s32 32, %v214
  %v216 = vshll.u32 %v207, %v214
  %v217 = vshrl.u32 %v199, %v215
  %v218 = vor.u32 %v216, %v217
  %v219 = vsub.s32 4294967266, %v214
  %v220 = vadd.s32 %v219, 127
  %v221 = vshll.u32 %v220, 23
  %v222 = vor.u32 4788187, %v221
  %v223 = vand.u32 2147483647, %v222
  %v225 = vcvt.s32.f32 %v218
  %v226 = vmul.f32 %v225, %v223
  %v227 = vxor.u32 %v226, 2147483648
  %v228 = vsel %vm145, %v227, %v226
  %v229 = vsub.s32 4, %v205
  %v230 = vsel %vm145, %v229, %v205
  %v231 = vsel %vm144, %v38, %v228
  %v232 = vsel %vm144, 0, %v230
  %v233 = vcosq.f32.pop %v231
  %v234 = vsinq.f32.pop %v231
  %vm235 = vweird.f32 %v38
  %v236 = vand.u32 %v232, 3
  %vm237 = vcmp.lt.s32.totalorder %v236, 2
  %vm238 = vcmp.eq.s32.totalorder %v236, 0
  %v239 = vxor.u32 %v234, 2147483648
  %v240 = vsel %vm238, %v233, %v239
  %vm241 = vcmp.eq.s32.totalorder %v236, 2
  %v242 = vxor.u32 %v233, 2147483648
  %v243 = vsel %vm241, %v242, %v234
  %v244 = vsel %vm237, %v240, %v243
  %v245 = vsel %vm235, nan, %v244
  %247 = vrot.lane.b32.xlu0 %v245, 16
  %v248 = vpop.permute.xlu0 %247
  %vm250 = vcmask 130048
  %v251 = vsel %vm250, %v142, %v248
  %v253 = vunpack.c.l.s4 1966171168
  %v254 = vunpack.c.0.s8 %v253
  %v255 = vlaneseq
  %v256 = vshrl.u32 %v255, 7
  %v257 = vsub.s32 %v254, %v256
  %v258 = vrot.slane %v24, %v257
  %v259 = vcombine.high %v258, %v258
  %v261 = vunpack.c.l.s4 1966171168
  %v262 = vunpack.c.0.s8 %v261
  %v263 = vlaneseq
  %v264 = vshrl.u32 %v263, 7
  %v265 = vsub.s32 %v262, %v264
  %v266 = vrot.slane %v258, %v265
  %v268 = vunpack.c.l.s4 1966171168
  %v269 = vunpack.c.0.s8 %v268
  %v270 = vlaneseq
  %v271 = vshrl.u32 %v270, 7
  %v272 = vsub.s32 %v269, %v271
  %v273 = vrot.slane %v259, %v272
  %v274 = vlaneseq
  %v275 = vshrl.u32 %v274, 7
  %v276 = vsub.s32 0, %v275
  %v277 = vrot.slane %v266, %v276
  %v278 = vlaneseq
  %v279 = vshrl.u32 %v278, 7
  %v280 = vsub.s32 0, %v279
  %v281 = vrot.slane %v273, %v280
  %v284 = vlaneseq
  %v285 = vshrl.u32 %v284, 7
  %v286 = vadd.s32 %v285, 8
  %v287 = vcvt.s32.f32 %v285
  %v288 = vcvt.s32.f32 %v286
  %vm289 = vcmp.lt.f32.partialorder %v287, %v277
  %vm290 = vcmp.lt.f32.partialorder %v288, %v277
  %vm291 = vcmp.lt.f32.partialorder %v287, %v281
  %vm292 = vcmp.lt.f32.partialorder %v288, %v281
  %v293 = vsel %vm289, 1, 0
  %v294 = vsel %vm290, 1, 0
  %v295 = vsel %vm291, 1, 0
  %v296 = vsel %vm292, 1, 0
  %v297 = vcvt.s32.f32 %v293
  %v298 = vcvt.s32.f32 %v294
  %v299 = vcvt.s32.f32 %v295
  %v300 = vcvt.s32.f32 %v296
  %v301 = vld [vmem:[%s1] sm:$0xff]
  %v302 = vld [vmem:[%s1 + $0x8] sm:$0xff]
  %v303 = vld [vmem:[%s1 + $0x10] sm:$0xff]
  %v304 = vld [vmem:[%s1 + $0x18] sm:$0xff]
  %v305 = vld [vmem:[%s2] sm:$0xff]
  %v306 = vld [vmem:[%s2 + $0x8] sm:$0xff]
  %v307 = vld [vmem:[%s2 + $0x10] sm:$0xff]
  %v308 = vld [vmem:[%s2 + $0x18] sm:$0xff]
  %309 = vset.pattern.permute.xlu0 1
  %310 = vperm.xlu0 %309, %v277
  %v311 = vpop.permute.xlu0 %310
  %313 = vset.pattern.permute.xlu0 1
  %314 = vperm.xlu0 %313, %v281
  %v315 = vpop.permute.xlu0 %314
  %v317 = vmul.f32 %v301, %v311
  %v318 = vmul.f32 %v302, %v311
  %v319 = vmul.f32 %v303, %v315
  %v320 = vmul.f32 %v304, %v315
  %321 = vset.pattern.permute.xlu0 2
  %322 = vperm.xlu0 %321, %v277
  %v323 = vpop.permute.xlu0 %322
  %325 = vset.pattern.permute.xlu0 2
  %326 = vperm.xlu0 %325, %v281
  %v327 = vpop.permute.xlu0 %326
  %v329 = vmul.f32 %v305, %v323
  %v330 = vmul.f32 %v306, %v323
  %v331 = vmul.f32 %v307, %v327
  %v332 = vmul.f32 %v308, %v327
  %v333 = vadd.f32 %v317, %v329
  %v334 = vadd.f32 %v318, %v330
  %v335 = vadd.f32 %v319, %v331
  %v336 = vadd.f32 %v320, %v332
  %v337 = vpack.c.bf16 %v251, %v251
  %v338 = vld [vmem:[%s4 + $0x60] sm:$0xf]
  %v339 = vld [vmem:[%s4 + $0x64] sm:$0xf]
  %v340 = vld [vmem:[%s4 + $0x68] sm:$0xf]
  %v341 = vld [vmem:[%s4 + $0x6c] sm:$0xf]
  %v342 = vld [vmem:[%s5 + $0x8] sm:$0x1]
  %v344 = vlaneseq
  %v345 = vshrl.u32 %v344, 7
  %v346 = vsub.s32 0, %v345
  %v347 = vrot.slane %v342, %v346
  %v349 = vmul.f32 %v29, %v347
  %v354 = vunpack.c.l.b16 %v338
  %v355 = vunpack.c.l.b16 %v339
  %v356 = vunpack.c.l.b16 %v340
  %v357 = vunpack.c.l.b16 %v341
  %v358 = vpack.c.b16 %v355, %v354
  %v359 = vpack.c.b16 %v357, %v356
  %vm362 = vcmask 261120
  %v364 = vsel %vm362, %v337, 0
  %366 = vmatprep.subr.bf16.mxu0 0
  %367 = vmatpush1.bf16.msra.mxu0 0
  %368 = vmatprep.subr.bf16.mxu0 0
  %369 = vmatpush1.bf16.msra.mxu0 0
  %370 = vmatprep.subr.bf16.mxu0 0
  %371 = vmatpush1.bf16.msra.mxu0 0
  %372 = vmatprep.subr.bf16.mxu0 0
  %373 = vmatpush1.bf16.msra.mxu0 0
  %374 = vmatprep.subr.bf16.mxu0 0
  %375 = vmatpush1.bf16.msra.mxu0 0
  %376 = vmatprep.subr.bf16.mxu0 0
  %377 = vmatpush1.bf16.msra.mxu0 0
  %378 = vmatprep.subr.bf16.mxu0 0
  %379 = vmatpush1.bf16.msra.mxu0 %v359
  %380 = vmatprep.subr.bf16.mxu0 0
  %381 = vmatpush1.bf16.msra.mxu0 %v358
  %382 = vmatprep.subr.bf16.mxu0 0
  %383 = vmatpush2.bf16.msra.mxu0 0
  %384 = vmatprep.subr.bf16.mxu0 0
  %385 = vmatpush2.bf16.msra.mxu0 0
  %386 = vmatprep.subr.bf16.mxu0 0
  %387 = vmatpush2.bf16.msra.mxu0 0
  %388 = vmatprep.subr.bf16.mxu0 0
  %389 = vmatpush2.bf16.msra.mxu0 0
  %390 = vmatprep.subr.bf16.mxu0 0
  %391 = vmatpush2.bf16.msra.mxu0 0
  %392 = vmatprep.subr.bf16.mxu0 0
  %393 = vmatpush2.bf16.msra.mxu0 0
  %394 = vmatprep.subr.bf16.mxu0 0
  %395 = vmatpush2.bf16.msra.mxu0 0
  %396 = vmatprep.subr.bf16.mxu0 0
  %397 = vmatpush2.bf16.msra.mxu0 0
  %398 = vmatprep.mubr.bf16.mxu0 0
  %399 = vmatmul.mubr.bf16.gmra.mxu0 %v364
  %v400 = vpop.f32.mrf.mxu0
  %v401 = vadd.f32 %v349, %v400
  %v402 = vpop.f32.mrf.mxu0
  %v403 = vpop.f32.mrf.mxu0
  %v404 = vpop.f32.mrf.mxu0
  %405 = vdwg.mxu0
  %v406 = vld [vmem:[%s5 + $0x9] sm:$0x1]
  %v408 = vlaneseq
  %v409 = vshrl.u32 %v408, 7
  %v410 = vsub.s32 0, %v409
  %v411 = vrot.slane %v406, %v410
  %v413 = vadd.f32 %v401, %v411
  %v414 = vxor.u32 %v413, 2147483648
  %v415 = vmul.f32 %v414, 1.442695
  %v416 = vpow.pop %v415
  %v417 = vadd.f32 %v416, 1.0
  %v418 = vrcp.pop %v417
  %v419 = vmul.f32 1.0, %v418
  %v420 = vmul.f32 %v413, %v419
  %v421 = vpack.c.bf16 %v420, %v420
  %v422 = vld [vmem:[%s4 + $0x70] sm:$0xf]
  %v423 = vld [vmem:[%s4 + $0x74] sm:$0xf]
  %v424 = vld [vmem:[%s4 + $0x78] sm:$0xf]
  %v425 = vld [vmem:[%s4 + $0x7c] sm:$0xf]
  %v426 = vld [vmem:[%s4 + $0x80] sm:$0xf]
  %v427 = vld [vmem:[%s4 + $0x84] sm:$0xf]
  %v428 = vld [vmem:[%s4 + $0x88] sm:$0xf]
  %v429 = vld [vmem:[%s4 + $0x8c] sm:$0xf]
  %v430 = vld [vmem:[%s4 + $0x90] sm:$0xf]
  %v431 = vld [vmem:[%s4 + $0x94] sm:$0xf]
  %v432 = vld [vmem:[%s4 + $0x98] sm:$0xf]
  %v433 = vld [vmem:[%s4 + $0x9c] sm:$0xf]
  %v434 = vld [vmem:[%s4 + $0xa0] sm:$0xf]
  %v435 = vld [vmem:[%s4 + $0xa4] sm:$0xf]
  %v436 = vld [vmem:[%s4 + $0xa8] sm:$0xf]
  %v437 = vld [vmem:[%s4 + $0xac] sm:$0xf]
  %v438 = vld [vmem:[%s5 + $0xa] sm:$0x1]
  %v440 = vlaneseq
  %v441 = vshrl.u32 %v440, 7
  %v442 = vsub.s32 0, %v441
  %v443 = vrot.slane %v438, %v442
  %v461 = vunpack.c.l.b16 %v422
  %v462 = vunpack.c.l.b16 %v423
  %v463 = vunpack.c.l.b16 %v424
  %v464 = vunpack.c.l.b16 %v425
  %v465 = vunpack.c.l.b16 %v426
  %v466 = vunpack.c.l.b16 %v427
  %v467 = vunpack.c.l.b16 %v428
  %v468 = vunpack.c.l.b16 %v429
  %v469 = vunpack.c.l.b16 %v430
  %v470 = vunpack.c.l.b16 %v431
  %v471 = vunpack.c.l.b16 %v432
  %v472 = vunpack.c.l.b16 %v433
  %v473 = vunpack.c.l.b16 %v434
  %v474 = vunpack.c.l.b16 %v435
  %v475 = vunpack.c.l.b16 %v436
  %v476 = vunpack.c.l.b16 %v437
  %v477 = vpack.c.b16 %v462, %v461
  %v478 = vpack.c.b16 %v464, %v463
  %v479 = vpack.c.b16 %v466, %v465
  %v480 = vpack.c.b16 %v468, %v467
  %v481 = vpack.c.b16 %v470, %v469
  %v482 = vpack.c.b16 %v472, %v471
  %v483 = vpack.c.b16 %v474, %v473
  %v484 = vpack.c.b16 %v476, %v475
  %493 = vmatprep.subr.bf16.mxu0 0
  %494 = vmatpush1.bf16.msra.mxu0 %v484
  %495 = vmatprep.subr.bf16.mxu0 0
  %496 = vmatpush1.bf16.msra.mxu0 %v483
  %497 = vmatprep.subr.bf16.mxu0 0
  %498 = vmatpush1.bf16.msra.mxu0 %v482
  %499 = vmatprep.subr.bf16.mxu0 0
  %500 = vmatpush1.bf16.msra.mxu0 %v481
  %501 = vmatprep.subr.bf16.mxu0 0
  %502 = vmatpush1.bf16.msra.mxu0 %v480
  %503 = vmatprep.subr.bf16.mxu0 0
  %504 = vmatpush1.bf16.msra.mxu0 %v479
  %505 = vmatprep.subr.bf16.mxu0 0
  %506 = vmatpush1.bf16.msra.mxu0 %v478
  %507 = vmatprep.subr.bf16.mxu0 0
  %508 = vmatpush1.bf16.msra.mxu0 %v477
  %509 = vmatprep.subr.bf16.mxu0 0
  %510 = vmatpush2.bf16.msra.mxu0 0
  %511 = vmatprep.subr.bf16.mxu0 0
  %512 = vmatpush2.bf16.msra.mxu0 0
  %513 = vmatprep.subr.bf16.mxu0 0
  %514 = vmatpush2.bf16.msra.mxu0 0
  %515 = vmatprep.subr.bf16.mxu0 0
  %516 = vmatpush2.bf16.msra.mxu0 0
  %517 = vmatprep.subr.bf16.mxu0 0
  %518 = vmatpush2.bf16.msra.mxu0 0
  %519 = vmatprep.subr.bf16.mxu0 0
  %520 = vmatpush2.bf16.msra.mxu0 0
  %521 = vmatprep.subr.bf16.mxu0 0
  %522 = vmatpush2.bf16.msra.mxu0 0
  %523 = vmatprep.subr.bf16.mxu0 0
  %524 = vmatpush2.bf16.msra.mxu0 0
  %525 = vmatprep.mubr.bf16.mxu0 0
  %526 = vmatmul.mubr.bf16.gmra.mxu0 %v421
  %v527 = vpop.f32.mrf.mxu0
  %v528 = vadd.f32 %v443, %v527
  %v529 = vpop.f32.mrf.mxu0
  %v530 = vpop.f32.mrf.mxu0
  %v531 = vpop.f32.mrf.mxu0
  %532 = vdwg.mxu0
  %v533 = vadd.f32 %v528, %v251
  %v534 = vld [vmem:[%s5 + $0xb] sm:$0x1]
  %v535 = vld [vmem:[%s5 + $0xc] sm:$0x1]
  %vm536 = vcmask 254976
  %v537 = vsel %vm536, %v533, 0.0
  %538 = vadd.xlane.f32.xlu0 %v537
  %v539 = vpop.xlane.xlu0 %538
  %v540 = vrcp.pop 32.0
  %v541 = vmul.f32 %v539, %v540
  %v542 = vsub.f32 %v533, %v541
  %v543 = vmul.f32 %v542, %v542
  %v544 = vsel %vm536, %v543, 0.0
  %545 = vadd.xlane.f32.xlu0 %v544
  %v546 = vpop.xlane.xlu0 %545
  %v547 = vmul.f32 %v546, %v540
  %v548 = vadd.f32 %v547, 1e-05
  %v549 = vrsqrt.pop %v548
  %v550 = vmul.f32 %v542, %v549
  %v552 = vlaneseq
  %v553 = vshrl.u32 %v552, 7
  %v554 = vsub.s32 0, %v553
  %v555 = vrot.slane %v534, %v554
  %v557 = vmul.f32 %v550, %v555
  %v559 = vlaneseq
  %v560 = vshrl.u32 %v559, 7
  %v561 = vsub.s32 0, %v560
  %v562 = vrot.slane %v535, %v561
  %v564 = vadd.f32 %v557, %v562
  %v565 = vpack.c.bf16 %v334, %v333
  %v566 = vpack.c.bf16 %v336, %v335
  %v567 = vld [vmem:[%s4] sm:$0xf]
  %v568 = vld [vmem:[%s5] sm:$0x1]
  %v570 = vlaneseq
  %v571 = vshrl.u32 %v570, 7
  %v572 = vsub.s32 0, %v571
  %v573 = vrot.slane %v568, %v572
  %vm575 = vcmask 64512
  %v577 = vsel %vm575, %v565, 0
  %v580 = vsel %vm575, %v566, 0
  %vm582 = vcmask 1043456
  %v584 = vsel %vm582, %v567, 0
  %586 = vmatprep.subr.bf16.mxu0 0
  %587 = vmatpush1.bf16.msra.mxu0 0
  %588 = vmatprep.subr.bf16.mxu0 0
  %589 = vmatpush1.bf16.msra.mxu0 0
  %590 = vmatprep.subr.bf16.mxu0 0
  %591 = vmatpush1.bf16.msra.mxu0 0
  %592 = vmatprep.subr.bf16.mxu0 0
  %593 = vmatpush1.bf16.msra.mxu0 0
  %594 = vmatprep.subr.bf16.mxu0 0
  %595 = vmatpush1.bf16.msra.mxu0 0
  %596 = vmatprep.subr.bf16.mxu0 0
  %597 = vmatpush1.bf16.msra.mxu0 0
  %598 = vmatprep.subr.bf16.mxu0 0
  %599 = vmatpush1.bf16.msra.mxu0 0
  %600 = vmatprep.subr.bf16.mxu0 0
  %601 = vmatpush1.bf16.msra.mxu0 %v584
  %602 = vmatprep.subr.bf16.mxu0 0
  %603 = vmatpush2.bf16.msra.mxu0 0
  %604 = vmatprep.subr.bf16.mxu0 0
  %605 = vmatpush2.bf16.msra.mxu0 0
  %606 = vmatprep.subr.bf16.mxu0 0
  %607 = vmatpush2.bf16.msra.mxu0 0
  %608 = vmatprep.subr.bf16.mxu0 0
  %609 = vmatpush2.bf16.msra.mxu0 0
  %610 = vmatprep.subr.bf16.mxu0 0
  %611 = vmatpush2.bf16.msra.mxu0 0
  %612 = vmatprep.subr.bf16.mxu0 0
  %613 = vmatpush2.bf16.msra.mxu0 0
  %614 = vmatprep.subr.bf16.mxu0 0
  %615 = vmatpush2.bf16.msra.mxu0 0
  %616 = vmatprep.subr.bf16.mxu0 0
  %617 = vmatpush2.bf16.msra.mxu0 0
  %618 = vmatprep.mubr.bf16.mxu0 0
  %619 = vmatmul.mubr.bf16.gmra.mxu0 %v577
  %v620 = vpop.f32.mrf.mxu0
  %v621 = vadd.f32 %v573, %v620
  %v622 = vpop.f32.mrf.mxu0
  %v623 = vpop.f32.mrf.mxu0
  %v624 = vadd.f32 %v573, %v623
  %v625 = vpop.f32.mrf.mxu0
  %626 = vmatprep.mubr.bf16.mxu0 0
  %627 = vmatmul.mubr.bf16.gmra.mxu0 %v580
  %v628 = vpop.f32.mrf.mxu0
  %v629 = vadd.f32 %v573, %v628
  %v630 = vpop.f32.mrf.mxu0
  %v631 = vpop.f32.mrf.mxu0
  %v632 = vadd.f32 %v573, %v631
  %v633 = vpop.f32.mrf.mxu0
  %634 = vdwg.mxu0
  %v635 = vld [vmem:[%s5 + $0x1] sm:$0x1]
  %v636 = vld [vmem:[%s5 + $0x2] sm:$0x1]
  %v637 = vsel %vm362, %v621, 0.0
  %638 = vadd.xlane.f32.xlu0 %v637
  %v639 = vpop.xlane.xlu0 %638
  %v640 = vsel %vm362, %v624, 0.0
  %641 = vadd.xlane.f32.xlu0 %v640
  %v642 = vpop.xlane.xlu0 %641
  %v643 = vsel %vm362, %v629, 0.0
  %644 = vadd.xlane.f32.xlu0 %v643
  %v645 = vpop.xlane.xlu0 %644
  %v646 = vsel %vm362, %v632, 0.0
  %647 = vadd.xlane.f32.xlu0 %v646
  %v648 = vpop.xlane.xlu0 %647
  %v649 = vmul.f32 %v639, %v540
  %v650 = vmul.f32 %v642, %v540
  %v651 = vmul.f32 %v645, %v540
  %v652 = vmul.f32 %v648, %v540
  %v653 = vsub.f32 %v621, %v649
  %v654 = vsub.f32 %v624, %v650
  %v655 = vsub.f32 %v629, %v651
  %v656 = vsub.f32 %v632, %v652
  %v657 = vmul.f32 %v653, %v653
  %v658 = vmul.f32 %v654, %v654
  %v659 = vmul.f32 %v655, %v655
  %v660 = vmul.f32 %v656, %v656
  %v661 = vsel %vm362, %v657, 0.0
  %662 = vadd.xlane.f32.xlu0 %v661
  %v663 = vpop.xlane.xlu0 %662
  %v664 = vsel %vm362, %v658, 0.0
  %665 = vadd.xlane.f32.xlu0 %v664
  %v666 = vpop.xlane.xlu0 %665
  %v667 = vsel %vm362, %v659, 0.0
  %668 = vadd.xlane.f32.xlu0 %v667
  %v669 = vpop.xlane.xlu0 %668
  %v670 = vsel %vm362, %v660, 0.0
  %671 = vadd.xlane.f32.xlu0 %v670
  %v672 = vpop.xlane.xlu0 %671
  %v673 = vmul.f32 %v663, %v540
  %v674 = vmul.f32 %v666, %v540
  %v675 = vmul.f32 %v669, %v540
  %v676 = vmul.f32 %v672, %v540
  %v677 = vadd.f32 %v673, 1e-05
  %v678 = vadd.f32 %v674, 1e-05
  %v679 = vadd.f32 %v675, 1e-05
  %v680 = vadd.f32 %v676, 1e-05
  %v681 = vrsqrt.pop %v677
  %v682 = vrsqrt.pop %v678
  %v683 = vrsqrt.pop %v679
  %v684 = vrsqrt.pop %v680
  %v685 = vmul.f32 %v653, %v681
  %v686 = vmul.f32 %v654, %v682
  %v687 = vmul.f32 %v655, %v683
  %v688 = vmul.f32 %v656, %v684
  %v690 = vlaneseq
  %v691 = vshrl.u32 %v690, 7
  %v692 = vsub.s32 0, %v691
  %v693 = vrot.slane %v635, %v692
  %v695 = vmul.f32 %v685, %v693
  %v696 = vmul.f32 %v686, %v693
  %v697 = vmul.f32 %v687, %v693
  %v698 = vmul.f32 %v688, %v693
  %v700 = vlaneseq
  %v701 = vshrl.u32 %v700, 7
  %v702 = vsub.s32 0, %v701
  %v703 = vrot.slane %v636, %v702
  %v705 = vadd.f32 %v695, %v703
  %v706 = vadd.f32 %v696, %v703
  %v707 = vadd.f32 %v697, %v703
  %v708 = vadd.f32 %v698, %v703
  %v709 = vxor.u32 %v705, 2147483648
  %v710 = vxor.u32 %v706, 2147483648
  %v711 = vxor.u32 %v707, 2147483648
  %v712 = vxor.u32 %v708, 2147483648
  %v713 = vmul.f32 %v709, 1.442695
  %v714 = vpow.pop %v713
  %v715 = vmul.f32 %v710, 1.442695
  %v716 = vpow.pop %v715
  %v717 = vmul.f32 %v711, 1.442695
  %v718 = vpow.pop %v717
  %v719 = vmul.f32 %v712, 1.442695
  %v720 = vpow.pop %v719
  %v721 = vadd.f32 %v714, 1.0
  %v722 = vadd.f32 %v716, 1.0
  %v723 = vadd.f32 %v718, 1.0
  %v724 = vadd.f32 %v720, 1.0
  %v725 = vrcp.pop %v721
  %v726 = vmul.f32 1.0, %v725
  %v727 = vrcp.pop %v722
  %v728 = vmul.f32 1.0, %v727
  %v729 = vrcp.pop %v723
  %v730 = vmul.f32 1.0, %v729
  %v731 = vrcp.pop %v724
  %v732 = vmul.f32 1.0, %v731
  %v733 = vmul.f32 %v705, %v726
  %v734 = vmul.f32 %v706, %v728
  %v735 = vmul.f32 %v707, %v730
  %v736 = vmul.f32 %v708, %v732
  %v737 = vld [vmem:[%s3] sm:$0xff]
  %v738 = vld [vmem:[%s3 + $0x8] sm:$0xff]
  %v739 = vld [vmem:[%s3 + $0x10] sm:$0xff]
  %v740 = vld [vmem:[%s3 + $0x18] sm:$0xff]
  %v741 = vpack.c.bf16 %v738, %v737
  %v742 = vpack.c.bf16 %v740, %v739
  %v743 = vld [vmem:[%s4 + $0x8] sm:$0xf]
  %v744 = vld [vmem:[%s4 + $0xc] sm:$0xf]
  %v745 = vld [vmem:[%s5 + $0x3] sm:$0x1]
  %v747 = vlaneseq
  %v748 = vshrl.u32 %v747, 7
  %v749 = vsub.s32 0, %v748
  %v750 = vrot.slane %v745, %v749
  %v754 = vunpack.c.l.b16 %v743
  %v755 = vunpack.c.l.b16 %v744
  %v756 = vpack.c.b16 %v755, %v754
  %v759 = vsel %vm250, %v741, 0
  %v762 = vsel %vm250, %v742, 0
  %764 = vmatprep.subr.bf16.mxu0 0
  %765 = vmatpush1.bf16.msra.mxu0 0
  %766 = vmatprep.subr.bf16.mxu0 0
  %767 = vmatpush1.bf16.msra.mxu0 0
  %768 = vmatprep.subr.bf16.mxu0 0
  %769 = vmatpush1.bf16.msra.mxu0 0
  %770 = vmatprep.subr.bf16.mxu0 0
  %771 = vmatpush1.bf16.msra.mxu0 0
  %772 = vmatprep.subr.bf16.mxu0 0
  %773 = vmatpush1.bf16.msra.mxu0 0
  %774 = vmatprep.subr.bf16.mxu0 0
  %775 = vmatpush1.bf16.msra.mxu0 0
  %776 = vmatprep.subr.bf16.mxu0 0
  %777 = vmatpush1.bf16.msra.mxu0 0
  %778 = vmatprep.subr.bf16.mxu0 0
  %779 = vmatpush1.bf16.msra.mxu0 %v756
  %780 = vmatprep.subr.bf16.mxu0 0
  %781 = vmatpush2.bf16.msra.mxu0 0
  %782 = vmatprep.subr.bf16.mxu0 0
  %783 = vmatpush2.bf16.msra.mxu0 0
  %784 = vmatprep.subr.bf16.mxu0 0
  %785 = vmatpush2.bf16.msra.mxu0 0
  %786 = vmatprep.subr.bf16.mxu0 0
  %787 = vmatpush2.bf16.msra.mxu0 0
  %788 = vmatprep.subr.bf16.mxu0 0
  %789 = vmatpush2.bf16.msra.mxu0 0
  %790 = vmatprep.subr.bf16.mxu0 0
  %791 = vmatpush2.bf16.msra.mxu0 0
  %792 = vmatprep.subr.bf16.mxu0 0
  %793 = vmatpush2.bf16.msra.mxu0 0
  %794 = vmatprep.subr.bf16.mxu0 0
  %795 = vmatpush2.bf16.msra.mxu0 0
  %796 = vmatprep.mubr.bf16.mxu0 0
  %797 = vmatmul.mubr.bf16.gmra.mxu0 %v759
  %v798 = vpop.f32.mrf.mxu0
  %v799 = vadd.f32 %v750, %v798
  %v800 = vpop.f32.mrf.mxu0
  %v801 = vpop.f32.mrf.mxu0
  %v802 = vadd.f32 %v750, %v801
  %v803 = vpop.f32.mrf.mxu0
  %804 = vmatprep.mubr.bf16.mxu0 0
  %805 = vmatmul.mubr.bf16.gmra.mxu0 %v762
  %v806 = vpop.f32.mrf.mxu0
  %v807 = vadd.f32 %v750, %v806
  %v808 = vpop.f32.mrf.mxu0
  %v809 = vpop.f32.mrf.mxu0
  %v810 = vadd.f32 %v750, %v809
  %v811 = vpop.f32.mrf.mxu0
  %812 = vdwg.mxu0
  %v813 = vpack.c.bf16 %v802, %v799
  %v814 = vpack.c.bf16 %v810, %v807
  %v815 = vld [vmem:[%s4 + $0x10] sm:$0xf]
  %v816 = vld [vmem:[%s4 + $0x14] sm:$0xf]
  %v817 = vld [vmem:[%s4 + $0x18] sm:$0xf]
  %v818 = vld [vmem:[%s4 + $0x1c] sm:$0xf]
  %v819 = vld [vmem:[%s5 + $0x4] sm:$0x1]
  %v821 = vlaneseq
  %v822 = vshrl.u32 %v821, 7
  %v823 = vsub.s32 0, %v822
  %v824 = vrot.slane %v819, %v823
  %v830 = vunpack.c.l.b16 %v815
  %v831 = vunpack.c.l.b16 %v816
  %v832 = vunpack.c.l.b16 %v817
  %v833 = vunpack.c.l.b16 %v818
  %v834 = vpack.c.b16 %v831, %v830
  %v835 = vpack.c.b16 %v833, %v832
  %v839 = vsel %vm362, %v813, 0
  %v842 = vsel %vm362, %v814, 0
  %844 = vmatprep.subr.bf16.mxu0 0
  %845 = vmatpush1.bf16.msra.mxu0 0
  %846 = vmatprep.subr.bf16.mxu0 0
  %847 = vmatpush1.bf16.msra.mxu0 0
  %848 = vmatprep.subr.bf16.mxu0 0
  %849 = vmatpush1.bf16.msra.mxu0 0
  %850 = vmatprep.subr.bf16.mxu0 0
  %851 = vmatpush1.bf16.msra.mxu0 0
  %852 = vmatprep.subr.bf16.mxu0 0
  %853 = vmatpush1.bf16.msra.mxu0 0
  %854 = vmatprep.subr.bf16.mxu0 0
  %855 = vmatpush1.bf16.msra.mxu0 0
  %856 = vmatprep.subr.bf16.mxu0 0
  %857 = vmatpush1.bf16.msra.mxu0 %v835
  %858 = vmatprep.subr.bf16.mxu0 0
  %859 = vmatpush1.bf16.msra.mxu0 %v834
  %860 = vmatprep.subr.bf16.mxu0 0
  %861 = vmatpush2.bf16.msra.mxu0 0
  %862 = vmatprep.subr.bf16.mxu0 0
  %863 = vmatpush2.bf16.msra.mxu0 0
  %864 = vmatprep.subr.bf16.mxu0 0
  %865 = vmatpush2.bf16.msra.mxu0 0
  %866 = vmatprep.subr.bf16.mxu0 0
  %867 = vmatpush2.bf16.msra.mxu0 0
  %868 = vmatprep.subr.bf16.mxu0 0
  %869 = vmatpush2.bf16.msra.mxu0 0
  %870 = vmatprep.subr.bf16.mxu0 0
  %871 = vmatpush2.bf16.msra.mxu0 0
  %872 = vmatprep.subr.bf16.mxu0 0
  %873 = vmatpush2.bf16.msra.mxu0 0
  %874 = vmatprep.subr.bf16.mxu0 0
  %875 = vmatpush2.bf16.msra.mxu0 0
  %876 = vmatprep.mubr.bf16.mxu0 0
  %877 = vmatmul.mubr.bf16.gmra.mxu0 %v839
  %v878 = vpop.f32.mrf.mxu0
  %v879 = vadd.f32 %v824, %v878
  %v880 = vpop.f32.mrf.mxu0
  %v881 = vpop.f32.mrf.mxu0
  %v882 = vadd.f32 %v824, %v881
  %v883 = vpop.f32.mrf.mxu0
  %884 = vmatprep.mubr.bf16.mxu0 0
  %885 = vmatmul.mubr.bf16.gmra.mxu0 %v842
  %v886 = vpop.f32.mrf.mxu0
  %v887 = vadd.f32 %v824, %v886
  %v888 = vpop.f32.mrf.mxu0
  %v889 = vpop.f32.mrf.mxu0
  %v890 = vadd.f32 %v824, %v889
  %v891 = vpop.f32.mrf.mxu0
  %892 = vdwg.mxu0
  %v893 = vxor.u32 %v879, 2147483648
  %v894 = vxor.u32 %v882, 2147483648
  %v895 = vxor.u32 %v887, 2147483648
  %v896 = vxor.u32 %v890, 2147483648
  %v897 = vmul.f32 %v893, 1.442695
  %v898 = vpow.pop %v897
  %v899 = vmul.f32 %v894, 1.442695
  %v900 = vpow.pop %v899
  %v901 = vmul.f32 %v895, 1.442695
  %v902 = vpow.pop %v901
  %v903 = vmul.f32 %v896, 1.442695
  %v904 = vpow.pop %v903
  %v905 = vadd.f32 %v898, 1.0
  %v906 = vadd.f32 %v900, 1.0
  %v907 = vadd.f32 %v902, 1.0
  %v908 = vadd.f32 %v904, 1.0
  %v909 = vrcp.pop %v905
  %v910 = vmul.f32 1.0, %v909
  %v911 = vrcp.pop %v906
  %v912 = vmul.f32 1.0, %v911
  %v913 = vrcp.pop %v907
  %v914 = vmul.f32 1.0, %v913
  %v915 = vrcp.pop %v908
  %v916 = vmul.f32 1.0, %v915
  %v917 = vmul.f32 %v879, %v910
  %v918 = vmul.f32 %v882, %v912
  %v919 = vmul.f32 %v887, %v914
  %v920 = vmul.f32 %v890, %v916
  %v921 = vpack.c.bf16 %v918, %v917
  %v922 = vpack.c.bf16 %v920, %v919
  %v923 = vld [vmem:[%s4 + $0x20] sm:$0xf]
  %v924 = vld [vmem:[%s4 + $0x24] sm:$0xf]
  %v925 = vld [vmem:[%s4 + $0x28] sm:$0xf]
  %v926 = vld [vmem:[%s4 + $0x2c] sm:$0xf]
  %v927 = vld [vmem:[%s4 + $0x30] sm:$0xf]
  %v928 = vld [vmem:[%s4 + $0x34] sm:$0xf]
  %v929 = vld [vmem:[%s4 + $0x38] sm:$0xf]
  %v930 = vld [vmem:[%s4 + $0x3c] sm:$0xf]
  %v931 = vld [vmem:[%s4 + $0x40] sm:$0xf]
  %v932 = vld [vmem:[%s4 + $0x44] sm:$0xf]
  %v933 = vld [vmem:[%s4 + $0x48] sm:$0xf]
  %v934 = vld [vmem:[%s4 + $0x4c] sm:$0xf]
  %v935 = vld [vmem:[%s4 + $0x50] sm:$0xf]
  %v936 = vld [vmem:[%s4 + $0x54] sm:$0xf]
  %v937 = vld [vmem:[%s4 + $0x58] sm:$0xf]
  %v938 = vld [vmem:[%s4 + $0x5c] sm:$0xf]
  %v939 = vld [vmem:[%s5 + $0x5] sm:$0x1]
  %v941 = vlaneseq
  %v942 = vshrl.u32 %v941, 7
  %v943 = vsub.s32 0, %v942
  %v944 = vrot.slane %v939, %v943
  %v962 = vunpack.c.l.b16 %v923
  %v963 = vunpack.c.l.b16 %v924
  %v964 = vunpack.c.l.b16 %v925
  %v965 = vunpack.c.l.b16 %v926
  %v966 = vunpack.c.l.b16 %v927
  %v967 = vunpack.c.l.b16 %v928
  %v968 = vunpack.c.l.b16 %v929
  %v969 = vunpack.c.l.b16 %v930
  %v970 = vunpack.c.l.b16 %v931
  %v971 = vunpack.c.l.b16 %v932
  %v972 = vunpack.c.l.b16 %v933
  %v973 = vunpack.c.l.b16 %v934
  %v974 = vunpack.c.l.b16 %v935
  %v975 = vunpack.c.l.b16 %v936
  %v976 = vunpack.c.l.b16 %v937
  %v977 = vunpack.c.l.b16 %v938
  %v978 = vpack.c.b16 %v963, %v962
  %v979 = vpack.c.b16 %v965, %v964
  %v980 = vpack.c.b16 %v967, %v966
  %v981 = vpack.c.b16 %v969, %v968
  %v982 = vpack.c.b16 %v971, %v970
  %v983 = vpack.c.b16 %v973, %v972
  %v984 = vpack.c.b16 %v975, %v974
  %v985 = vpack.c.b16 %v977, %v976
  %994 = vmatprep.subr.bf16.mxu0 0
  %995 = vmatpush1.bf16.msra.mxu0 %v985
  %996 = vmatprep.subr.bf16.mxu0 0
  %997 = vmatpush1.bf16.msra.mxu0 %v984
  %998 = vmatprep.subr.bf16.mxu0 0
  %999 = vmatpush1.bf16.msra.mxu0 %v983
  %1000 = vmatprep.subr.bf16.mxu0 0
  %1001 = vmatpush1.bf16.msra.mxu0 %v982
  %1002 = vmatprep.subr.bf16.mxu0 0
  %1003 = vmatpush1.bf16.msra.mxu0 %v981
  %1004 = vmatprep.subr.bf16.mxu0 0
  %1005 = vmatpush1.bf16.msra.mxu0 %v980
  %1006 = vmatprep.subr.bf16.mxu0 0
  %1007 = vmatpush1.bf16.msra.mxu0 %v979
  %1008 = vmatprep.subr.bf16.mxu0 0
  %1009 = vmatpush1.bf16.msra.mxu0 %v978
  %1010 = vmatprep.subr.bf16.mxu0 0
  %1011 = vmatpush2.bf16.msra.mxu0 0
  %1012 = vmatprep.subr.bf16.mxu0 0
  %1013 = vmatpush2.bf16.msra.mxu0 0
  %1014 = vmatprep.subr.bf16.mxu0 0
  %1015 = vmatpush2.bf16.msra.mxu0 0
  %1016 = vmatprep.subr.bf16.mxu0 0
  %1017 = vmatpush2.bf16.msra.mxu0 0
  %1018 = vmatprep.subr.bf16.mxu0 0
  %1019 = vmatpush2.bf16.msra.mxu0 0
  %1020 = vmatprep.subr.bf16.mxu0 0
  %1021 = vmatpush2.bf16.msra.mxu0 0
  %1022 = vmatprep.subr.bf16.mxu0 0
  %1023 = vmatpush2.bf16.msra.mxu0 0
  %1024 = vmatprep.subr.bf16.mxu0 0
  %1025 = vmatpush2.bf16.msra.mxu0 0
  %1026 = vmatprep.mubr.bf16.mxu0 0
  %1027 = vmatmul.mubr.bf16.gmra.mxu0 %v921
  %v1028 = vpop.f32.mrf.mxu0
  %v1029 = vadd.f32 %v944, %v1028
  %v1030 = vpop.f32.mrf.mxu0
  %v1031 = vpop.f32.mrf.mxu0
  %v1032 = vadd.f32 %v944, %v1031
  %v1033 = vpop.f32.mrf.mxu0
  %1034 = vmatprep.mubr.bf16.mxu0 0
  %1035 = vmatmul.mubr.bf16.gmra.mxu0 %v922
  %v1036 = vpop.f32.mrf.mxu0
  %v1037 = vadd.f32 %v944, %v1036
  %v1038 = vpop.f32.mrf.mxu0
  %v1039 = vpop.f32.mrf.mxu0
  %v1040 = vadd.f32 %v944, %v1039
  %v1041 = vpop.f32.mrf.mxu0
  %1042 = vdwg.mxu0
  %v1043 = vadd.f32 %v1029, %v799
  %v1044 = vadd.f32 %v1032, %v802
  %v1045 = vadd.f32 %v1037, %v807
  %v1046 = vadd.f32 %v1040, %v810
  %v1047 = vld [vmem:[%s5 + $0x6] sm:$0x1]
  %v1048 = vld [vmem:[%s5 + $0x7] sm:$0x1]
  %v1049 = vsel %vm362, %v1043, 0.0
  %1050 = vadd.xlane.f32.xlu0 %v1049
  %v1051 = vpop.xlane.xlu0 %1050
  %v1052 = vsel %vm362, %v1044, 0.0
  %1053 = vadd.xlane.f32.xlu0 %v1052
  %v1054 = vpop.xlane.xlu0 %1053
  %v1055 = vsel %vm362, %v1045, 0.0
  %1056 = vadd.xlane.f32.xlu0 %v1055
  %v1057 = vpop.xlane.xlu0 %1056
  %v1058 = vsel %vm362, %v1046, 0.0
  %1059 = vadd.xlane.f32.xlu0 %v1058
  %v1060 = vpop.xlane.xlu0 %1059
  %v1061 = vmul.f32 %v1051, %v540
  %v1062 = vmul.f32 %v1054, %v540
  %v1063 = vmul.f32 %v1057, %v540
  %v1064 = vmul.f32 %v1060, %v540
  %v1065 = vsub.f32 %v1043, %v1061
  %v1066 = vsub.f32 %v1044, %v1062
  %v1067 = vsub.f32 %v1045, %v1063
  %v1068 = vsub.f32 %v1046, %v1064
  %v1069 = vmul.f32 %v1065, %v1065
  %v1070 = vmul.f32 %v1066, %v1066
  %v1071 = vmul.f32 %v1067, %v1067
  %v1072 = vmul.f32 %v1068, %v1068
  %v1073 = vsel %vm362, %v1069, 0.0
  %1074 = vadd.xlane.f32.xlu0 %v1073
  %v1075 = vpop.xlane.xlu0 %1074
  %v1076 = vsel %vm362, %v1070, 0.0
  %1077 = vadd.xlane.f32.xlu0 %v1076
  %v1078 = vpop.xlane.xlu0 %1077
  %v1079 = vsel %vm362, %v1071, 0.0
  %1080 = vadd.xlane.f32.xlu0 %v1079
  %v1081 = vpop.xlane.xlu0 %1080
  %v1082 = vsel %vm362, %v1072, 0.0
  %1083 = vadd.xlane.f32.xlu0 %v1082
  %v1084 = vpop.xlane.xlu0 %1083
  %v1085 = vmul.f32 %v1075, %v540
  %v1086 = vmul.f32 %v1078, %v540
  %v1087 = vmul.f32 %v1081, %v540
  %v1088 = vmul.f32 %v1084, %v540
  %v1089 = vadd.f32 %v1085, 1e-05
  %v1090 = vadd.f32 %v1086, 1e-05
  %v1091 = vadd.f32 %v1087, 1e-05
  %v1092 = vadd.f32 %v1088, 1e-05
  %v1093 = vrsqrt.pop %v1089
  %v1094 = vrsqrt.pop %v1090
  %v1095 = vrsqrt.pop %v1091
  %v1096 = vrsqrt.pop %v1092
  %v1097 = vmul.f32 %v1065, %v1093
  %v1098 = vmul.f32 %v1066, %v1094
  %v1099 = vmul.f32 %v1067, %v1095
  %v1100 = vmul.f32 %v1068, %v1096
  %v1102 = vlaneseq
  %v1103 = vshrl.u32 %v1102, 7
  %v1104 = vsub.s32 0, %v1103
  %v1105 = vrot.slane %v1047, %v1104
  %v1107 = vmul.f32 %v1097, %v1105
  %v1108 = vmul.f32 %v1098, %v1105
  %v1109 = vmul.f32 %v1099, %v1105
  %v1110 = vmul.f32 %v1100, %v1105
  %v1112 = vlaneseq
  %v1113 = vshrl.u32 %v1112, 7
  %v1114 = vsub.s32 0, %v1113
  %v1115 = vrot.slane %v1048, %v1114
  %v1117 = vadd.f32 %v1107, %v1115
  %v1118 = vadd.f32 %v1108, %v1115
  %v1119 = vadd.f32 %v1109, %v1115
  %v1120 = vadd.f32 %v1110, %v1115
  %v1121 = vpack.c.bf16 %v1118, %v1117
  %v1122 = vpack.c.bf16 %v1120, %v1119
  %v1123 = vld [vmem:[%s4 + $0xb0] sm:$0xf]
  %v1124 = vld [vmem:[%s4 + $0xb4] sm:$0xf]
  %v1125 = vld [vmem:[%s4 + $0xb8] sm:$0xf]
  %v1126 = vld [vmem:[%s4 + $0xbc] sm:$0xf]
  %v1131 = vunpack.c.l.b16 %v1123
  %v1132 = vunpack.c.l.b16 %v1124
  %v1133 = vunpack.c.l.b16 %v1125
  %v1134 = vunpack.c.l.b16 %v1126
  %v1135 = vpack.c.b16 %v1132, %v1131
  %v1136 = vpack.c.b16 %v1134, %v1133
  %v1140 = vsel %vm362, %v1121, 0
  %v1143 = vsel %vm362, %v1122, 0
  %1145 = vmatprep.subr.bf16.mxu0 0
  %1146 = vmatpush1.bf16.msra.mxu0 0
  %1147 = vmatprep.subr.bf16.mxu0 0
  %1148 = vmatpush1.bf16.msra.mxu0 0
  %1149 = vmatprep.subr.bf16.mxu0 0
  %1150 = vmatpush1.bf16.msra.mxu0 0
  %1151 = vmatprep.subr.bf16.mxu0 0
  %1152 = vmatpush1.bf16.msra.mxu0 0
  %1153 = vmatprep.subr.bf16.mxu0 0
  %1154 = vmatpush1.bf16.msra.mxu0 0
  %1155 = vmatprep.subr.bf16.mxu0 0
  %1156 = vmatpush1.bf16.msra.mxu0 0
  %1157 = vmatprep.subr.bf16.mxu0 0
  %1158 = vmatpush1.bf16.msra.mxu0 %v1136
  %1159 = vmatprep.subr.bf16.mxu0 0
  %1160 = vmatpush1.bf16.msra.mxu0 %v1135
  %1161 = vmatprep.subr.bf16.mxu0 0
  %1162 = vmatpush2.bf16.msra.mxu0 0
  %1163 = vmatprep.subr.bf16.mxu0 0
  %1164 = vmatpush2.bf16.msra.mxu0 0
  %1165 = vmatprep.subr.bf16.mxu0 0
  %1166 = vmatpush2.bf16.msra.mxu0 0
  %1167 = vmatprep.subr.bf16.mxu0 0
  %1168 = vmatpush2.bf16.msra.mxu0 0
  %1169 = vmatprep.subr.bf16.mxu0 0
  %1170 = vmatpush2.bf16.msra.mxu0 0
  %1171 = vmatprep.subr.bf16.mxu0 0
  %1172 = vmatpush2.bf16.msra.mxu0 0
  %1173 = vmatprep.subr.bf16.mxu0 0
  %1174 = vmatpush2.bf16.msra.mxu0 0
  %1175 = vmatprep.subr.bf16.mxu0 0
  %1176 = vmatpush2.bf16.msra.mxu0 0
  %1177 = vmatprep.mubr.bf16.mxu0 0
  %1178 = vmatmul.mubr.bf16.gmra.mxu0 %v1140
  %v1179 = vpop.f32.mrf.mxu0
  %v1180 = vadd.f32 0.0, %v1179
  %v1181 = vpop.f32.mrf.mxu0
  %v1182 = vpop.f32.mrf.mxu0
  %v1183 = vadd.f32 0.0, %v1182
  %v1184 = vpop.f32.mrf.mxu0
  %1185 = vmatprep.mubr.bf16.mxu0 0
  %1186 = vmatmul.mubr.bf16.gmra.mxu0 %v1143
  %v1187 = vpop.f32.mrf.mxu0
  %v1188 = vadd.f32 0.0, %v1187
  %v1189 = vpop.f32.mrf.mxu0
  %v1190 = vpop.f32.mrf.mxu0
  %v1191 = vadd.f32 0.0, %v1190
  %v1192 = vpop.f32.mrf.mxu0
  %1193 = vdwg.mxu0
  %v1194 = vpack.c.bf16 %v564, %v564
  %v1195 = vld [vmem:[%s4 + $0x120] sm:$0xf]
  %v1196 = vld [vmem:[%s4 + $0x124] sm:$0xf]
  %v1197 = vld [vmem:[%s4 + $0x128] sm:$0xf]
  %v1198 = vld [vmem:[%s4 + $0x12c] sm:$0xf]
  %v1199 = vld [vmem:[%s5 + $0xe] sm:$0x1]
  %v1201 = vlaneseq
  %v1202 = vshrl.u32 %v1201, 7
  %v1203 = vsub.s32 0, %v1202
  %v1204 = vrot.slane %v1199, %v1203
  %v1210 = vunpack.c.l.b16 %v1195
  %v1211 = vunpack.c.l.b16 %v1196
  %v1212 = vunpack.c.l.b16 %v1197
  %v1213 = vunpack.c.l.b16 %v1198
  %v1214 = vpack.c.b16 %v1211, %v1210
  %v1215 = vpack.c.b16 %v1213, %v1212
  %v1219 = vsel %vm362, %v1194, 0
  %1221 = vmatprep.subr.bf16.mxu0 0
  %1222 = vmatpush1.bf16.msra.mxu0 0
  %1223 = vmatprep.subr.bf16.mxu0 0
  %1224 = vmatpush1.bf16.msra.mxu0 0
  %1225 = vmatprep.subr.bf16.mxu0 0
  %1226 = vmatpush1.bf16.msra.mxu0 0
  %1227 = vmatprep.subr.bf16.mxu0 0
  %1228 = vmatpush1.bf16.msra.mxu0 0
  %1229 = vmatprep.subr.bf16.mxu0 0
  %1230 = vmatpush1.bf16.msra.mxu0 0
  %1231 = vmatprep.subr.bf16.mxu0 0
  %1232 = vmatpush1.bf16.msra.mxu0 0
  %1233 = vmatprep.subr.bf16.mxu0 0
  %1234 = vmatpush1.bf16.msra.mxu0 %v1215
  %1235 = vmatprep.subr.bf16.mxu0 0
  %1236 = vmatpush1.bf16.msra.mxu0 %v1214
  %1237 = vmatprep.subr.bf16.mxu0 0
  %1238 = vmatpush2.bf16.msra.mxu0 0
  %1239 = vmatprep.subr.bf16.mxu0 0
  %1240 = vmatpush2.bf16.msra.mxu0 0
  %1241 = vmatprep.subr.bf16.mxu0 0
  %1242 = vmatpush2.bf16.msra.mxu0 0
  %1243 = vmatprep.subr.bf16.mxu0 0
  %1244 = vmatpush2.bf16.msra.mxu0 0
  %1245 = vmatprep.subr.bf16.mxu0 0
  %1246 = vmatpush2.bf16.msra.mxu0 0
  %1247 = vmatprep.subr.bf16.mxu0 0
  %1248 = vmatpush2.bf16.msra.mxu0 0
  %1249 = vmatprep.subr.bf16.mxu0 0
  %1250 = vmatpush2.bf16.msra.mxu0 0
  %1251 = vmatprep.subr.bf16.mxu0 0
  %1252 = vmatpush2.bf16.msra.mxu0 0
  %1253 = vmatprep.mubr.bf16.mxu0 0
  %1254 = vmatmul.mubr.bf16.gmra.mxu0 %v1219
  %v1255 = vpop.f32.mrf.mxu0
  %v1256 = vadd.f32 %v1204, %v1255
  %v1257 = vpop.f32.mrf.mxu0
  %v1258 = vpop.f32.mrf.mxu0
  %v1259 = vpop.f32.mrf.mxu0
  %1260 = vdwg.mxu0
  %v1263 = vunpack.c.l.s4 1966171168
  %v1264 = vunpack.c.0.s8 %v1263
  %v1265 = vlaneseq
  %v1266 = vshrl.u32 %v1265, 7
  %v1267 = vsub.s32 %v1264, %v1266
  %v1268 = vrot.slane %v1256, %v1267
  %v1269 = vcombine.high %v1268, %v1268
  %v1271 = vunpack.c.l.s4 1966171168
  %v1272 = vunpack.c.0.s8 %v1271
  %v1273 = vlaneseq
  %v1274 = vshrl.u32 %v1273, 7
  %v1275 = vsub.s32 %v1272, %v1274
  %v1276 = vrot.slane %v1268, %v1275
  %v1278 = vunpack.c.l.s4 1966171168
  %v1279 = vunpack.c.0.s8 %v1278
  %v1280 = vlaneseq
  %v1281 = vshrl.u32 %v1280, 7
  %v1282 = vsub.s32 %v1279, %v1281
  %v1283 = vrot.slane %v1269, %v1282
  %v1284 = vlaneseq
  %v1285 = vshrl.u32 %v1284, 7
  %v1286 = vsub.s32 0, %v1285
  %v1287 = vrot.slane %v1276, %v1286
  %v1288 = vlaneseq
  %v1289 = vshrl.u32 %v1288, 7
  %v1290 = vsub.s32 0, %v1289
  %v1291 = vrot.slane %v1283, %v1290
  %v1294 = vld [vmem:[%s5 + $0xd] sm:$0x1]
  %v1295 = vadd.f32 %v733, %v1287
  %v1296 = vadd.f32 %v734, %v1287
  %v1297 = vadd.f32 %v735, %v1291
  %v1298 = vadd.f32 %v736, %v1291
  %vm1299 = vcmp.ge.s32.totalorder %v285, 2
  %vm1300 = vcmp.ge.s32.totalorder %v286, 2
  %v1301 = vrot.slane %v1295, 6
  %v1302 = vrot.slane %v1296, 6
  %v1303 = vrot.slane %v1297, 6
  %v1304 = vrot.slane %v1298, 6
  %vm1305 = vcmp.lt.s32.totalorder %v285, 2
  %v1306 = vsel %vm1305, %v1303, %v1304
  %v1307 = vsel %vm1305, %v1302, %v1303
  %v1308 = vsel %vm1305, %v1301, %v1302
  %v1309 = vsel %vm1305, %v1304, %v1301
  %v1310 = vsel %vm1299, 1, 0
  %v1311 = vsel %vm1300, 1, 0
  %vm1312 = vcmp.eq.s32.totalorder %v1310, 1
  %vm1313 = vcmp.eq.s32.totalorder %v1311, 1
  %v1314 = vsel %vm1312, %v1309, 0.0
  %v1315 = vsel %vm1313, %v1308, 0.0
  %v1316 = vsel %vm1312, %v1307, 0.0
  %v1317 = vsel %vm1313, %v1306, 0.0
  %vm1318 = vcmp.lt.s32.totalorder %v285, 14
  %vm1319 = vcmp.lt.s32.totalorder %v286, 14
  %v1320 = vrot.slane %v1295, 2
  %v1321 = vrot.slane %v1296, 2
  %v1322 = vrot.slane %v1297, 2
  %v1323 = vrot.slane %v1298, 2
  %vm1324 = vcmp.lt.s32.totalorder %v285, 6
  %v1325 = vsel %vm1324, %v1322, %v1323
  %v1326 = vsel %vm1324, %v1321, %v1322
  %v1327 = vsel %vm1324, %v1320, %v1321
  %v1328 = vsel %vm1324, %v1323, %v1320
  %v1329 = vsel %vm1318, 1, 0
  %v1330 = vsel %vm1319, 1, 0
  %vm1331 = vcmp.eq.s32.totalorder %v1329, 1
  %vm1332 = vcmp.eq.s32.totalorder %v1330, 1
  %v1333 = vsel %vm1331, %v1327, 0.0
  %v1334 = vsel %vm1332, %v1326, 0.0
  %v1335 = vsel %vm1331, %v1325, 0.0
  %v1336 = vsel %vm1332, %v1328, 0.0
  %1341 = vrot.lane.b32.xlu0 %v1295, 32
  %v1342 = vpop.permute.xlu0 %1341
  %1343 = vrot.lane.b32.xlu0 %v1296, 32
  %v1344 = vpop.permute.xlu0 %1343
  %1345 = vrot.lane.b32.xlu0 %v1297, 32
  %v1346 = vpop.permute.xlu0 %1345
  %1347 = vrot.lane.b32.xlu0 %v1298, 32
  %v1348 = vpop.permute.xlu0 %1347
  %1357 = vrot.lane.b32.xlu0 %v1333, 64
  %v1358 = vpop.permute.xlu0 %1357
  %1359 = vrot.lane.b32.xlu0 %v1334, 64
  %v1360 = vpop.permute.xlu0 %1359
  %1361 = vrot.lane.b32.xlu0 %v1335, 64
  %v1362 = vpop.permute.xlu0 %1361
  %1363 = vrot.lane.b32.xlu0 %v1336, 64
  %v1364 = vpop.permute.xlu0 %1363
  %v1369 = vsel %vm362, %v1314, %v1342
  %v1370 = vsel %vm362, %v1315, %v1344
  %v1371 = vsel %vm362, %v1316, %v1346
  %v1372 = vsel %vm362, %v1317, %v1348
  %vm1373 = vcmask 523264
  %v1374 = vsel %vm1373, %v1369, %v1358
  %v1375 = vsel %vm1373, %v1370, %v1360
  %v1376 = vsel %vm1373, %v1371, %v1362
  %v1377 = vsel %vm1373, %v1372, %v1364
  %v1378 = vpack.c.bf16 %v1375, %v1374
  %v1379 = vpack.c.bf16 %v1377, %v1376
  %v1380 = vld [vmem:[%s4 + $0xc0] sm:$0xf]
  %v1381 = vld [vmem:[%s4 + $0xc4] sm:$0xf]
  %v1382 = vld [vmem:[%s4 + $0xc8] sm:$0xf]
  %v1383 = vld [vmem:[%s4 + $0xcc] sm:$0xf]
  %v1384 = vld [vmem:[%s4 + $0xd0] sm:$0xf]
  %v1385 = vld [vmem:[%s4 + $0xd4] sm:$0xf]
  %v1386 = vld [vmem:[%s4 + $0xd8] sm:$0xf]
  %v1387 = vld [vmem:[%s4 + $0xdc] sm:$0xf]
  %v1388 = vld [vmem:[%s4 + $0xe0] sm:$0xf]
  %v1389 = vld [vmem:[%s4 + $0xe4] sm:$0xf]
  %v1390 = vld [vmem:[%s4 + $0xe8] sm:$0xf]
  %v1391 = vld [vmem:[%s4 + $0xec] sm:$0xf]
  %v1404 = vunpack.c.l.b16 %v1380
  %v1405 = vunpack.c.l.b16 %v1381
  %v1406 = vunpack.c.l.b16 %v1382
  %v1407 = vunpack.c.l.b16 %v1383
  %v1408 = vunpack.c.l.b16 %v1384
  %v1409 = vunpack.c.l.b16 %v1385
  %v1410 = vunpack.c.l.b16 %v1386
  %v1411 = vunpack.c.l.b16 %v1387
  %v1412 = vunpack.c.l.b16 %v1388
  %v1413 = vunpack.c.l.b16 %v1389
  %v1414 = vunpack.c.l.b16 %v1390
  %v1415 = vunpack.c.l.b16 %v1391
  %v1416 = vpack.c.b16 %v1405, %v1404
  %v1417 = vpack.c.b16 %v1407, %v1406
  %v1418 = vpack.c.b16 %v1409, %v1408
  %v1419 = vpack.c.b16 %v1411, %v1410
  %v1420 = vpack.c.b16 %v1413, %v1412
  %v1421 = vpack.c.b16 %v1415, %v1414
  %vm1428 = vcmask 785408
  %v1430 = vsel %vm1428, %v1378, 0
  %v1433 = vsel %vm1428, %v1379, 0
  %1435 = vmatprep.subr.bf16.mxu0 0
  %1436 = vmatpush1.bf16.msra.mxu0 0
  %1437 = vmatprep.subr.bf16.mxu0 0
  %1438 = vmatpush1.bf16.msra.mxu0 0
  %1439 = vmatprep.subr.bf16.mxu0 0
  %1440 = vmatpush1.bf16.msra.mxu0 %v1421
  %1441 = vmatprep.subr.bf16.mxu0 0
  %1442 = vmatpush1.bf16.msra.mxu0 %v1420
  %1443 = vmatprep.subr.bf16.mxu0 0
  %1444 = vmatpush1.bf16.msra.mxu0 %v1419
  %1445 = vmatprep.subr.bf16.mxu0 0
  %1446 = vmatpush1.bf16.msra.mxu0 %v1418
  %1447 = vmatprep.subr.bf16.mxu0 0
  %1448 = vmatpush1.bf16.msra.mxu0 %v1417
  %1449 = vmatprep.subr.bf16.mxu0 0
  %1450 = vmatpush1.bf16.msra.mxu0 %v1416
  %1451 = vmatprep.subr.bf16.mxu0 0
  %1452 = vmatpush2.bf16.msra.mxu0 0
  %1453 = vmatprep.subr.bf16.mxu0 0
  %1454 = vmatpush2.bf16.msra.mxu0 0
  %1455 = vmatprep.subr.bf16.mxu0 0
  %1456 = vmatpush2.bf16.msra.mxu0 0
  %1457 = vmatprep.subr.bf16.mxu0 0
  %1458 = vmatpush2.bf16.msra.mxu0 0
  %1459 = vmatprep.subr.bf16.mxu0 0
  %1460 = vmatpush2.bf16.msra.mxu0 0
  %1461 = vmatprep.subr.bf16.mxu0 0
  %1462 = vmatpush2.bf16.msra.mxu0 0
  %1463 = vmatprep.subr.bf16.mxu0 0
  %1464 = vmatpush2.bf16.msra.mxu0 0
  %1465 = vmatprep.subr.bf16.mxu0 0
  %1466 = vmatpush2.bf16.msra.mxu0 0
  %1467 = vmatprep.mubr.bf16.mxu0 0
  %1468 = vmatmul.mubr.bf16.gmra.mxu0 %v1430
  %v1469 = vpop.f32.mrf.mxu0
  %v1470 = vadd.f32 %v1180, %v1469
  %v1471 = vpop.f32.mrf.mxu0
  %v1472 = vpop.f32.mrf.mxu0
  %v1473 = vadd.f32 %v1183, %v1472
  %v1474 = vpop.f32.mrf.mxu0
  %1475 = vmatprep.mubr.bf16.mxu0 0
  %1476 = vmatmul.mubr.bf16.gmra.mxu0 %v1433
  %v1477 = vpop.f32.mrf.mxu0
  %v1478 = vadd.f32 %v1188, %v1477
  %v1479 = vpop.f32.mrf.mxu0
  %v1480 = vpop.f32.mrf.mxu0
  %v1481 = vadd.f32 %v1191, %v1480
  %v1482 = vpop.f32.mrf.mxu0
  %1483 = vdwg.mxu0
  %v1485 = vlaneseq
  %v1486 = vshrl.u32 %v1485, 7
  %v1487 = vsub.s32 0, %v1486
  %v1488 = vrot.slane %v1294, %v1487
  %v1490 = vadd.f32 %v1470, %v1488
  %v1491 = vadd.f32 %v1473, %v1488
  %v1492 = vadd.f32 %v1478, %v1488
  %v1493 = vadd.f32 %v1481, %v1488
  %v1494 = vtanh.pop %v1490
  %v1495 = vtanh.pop %v1491
  %v1496 = vtanh.pop %v1492
  %v1497 = vtanh.pop %v1493
  %v1498 = vxor.u32 %v1490, 2147483648
  %v1499 = vxor.u32 %v1491, 2147483648
  %v1500 = vxor.u32 %v1492, 2147483648
  %v1501 = vxor.u32 %v1493, 2147483648
  %v1502 = vmul.f32 %v1498, 1.442695
  %v1503 = vpow.pop %v1502
  %v1504 = vmul.f32 %v1499, 1.442695
  %v1505 = vpow.pop %v1504
  %v1506 = vmul.f32 %v1500, 1.442695
  %v1507 = vpow.pop %v1506
  %v1508 = vmul.f32 %v1501, 1.442695
  %v1509 = vpow.pop %v1508
  %v1510 = vadd.f32 %v1503, 1.0
  %v1511 = vadd.f32 %v1505, 1.0
  %v1512 = vadd.f32 %v1507, 1.0
  %v1513 = vadd.f32 %v1509, 1.0
  %v1514 = vrcp.pop %v1510
  %v1515 = vmul.f32 1.0, %v1514
  %v1516 = vrcp.pop %v1511
  %v1517 = vmul.f32 1.0, %v1516
  %v1518 = vrcp.pop %v1512
  %v1519 = vmul.f32 1.0, %v1518
  %v1520 = vrcp.pop %v1513
  %v1521 = vmul.f32 1.0, %v1520
  %1526 = vrot.lane.b32.xlu0 %v1515, 96
  %v1527 = vpop.permute.xlu0 %1526
  %1528 = vrot.lane.b32.xlu0 %v1517, 96
  %v1529 = vpop.permute.xlu0 %1528
  %1530 = vrot.lane.b32.xlu0 %v1519, 96
  %v1531 = vpop.permute.xlu0 %1530
  %1532 = vrot.lane.b32.xlu0 %v1521, 96
  %v1533 = vpop.permute.xlu0 %1532
  %v1538 = vmul.f32 %v1494, %v1527
  %v1539 = vmul.f32 %v1495, %v1529
  %v1540 = vmul.f32 %v1496, %v1531
  %v1541 = vmul.f32 %v1497, %v1533
  %1543 = vset.pattern.permute.xlu0 5
  %1544 = vperm.xlu0 %1543, %v297
  %v1545 = vpop.permute.xlu0 %1544
  %1548 = vset.pattern.permute.xlu0 5
  %1549 = vperm.xlu0 %1548, %v298
  %v1550 = vpop.permute.xlu0 %1549
  %1553 = vset.pattern.permute.xlu0 5
  %1554 = vperm.xlu0 %1553, %v299
  %v1555 = vpop.permute.xlu0 %1554
  %1558 = vset.pattern.permute.xlu0 5
  %1559 = vperm.xlu0 %1558, %v300
  %v1560 = vpop.permute.xlu0 %1559
  %v1562 = vmul.f32 %v1538, %v1545
  %v1563 = vmul.f32 %v1539, %v1550
  %v1564 = vmul.f32 %v1540, %v1555
  %v1565 = vmul.f32 %v1541, %v1560
  %v1566 = vadd.f32 %v733, %v1562
  %v1567 = vadd.f32 %v734, %v1563
  %v1568 = vadd.f32 %v735, %v1564
  %v1569 = vadd.f32 %v736, %v1565
  %v1570 = vadd.f32 %v1562, 0.0
  %v1571 = vadd.f32 %v1563, 0.0
  %v1572 = vadd.f32 %v1564, 0.0
  %v1573 = vadd.f32 %v1565, 0.0
  %1574 = vrot.lane.b32.xlu0 %v1287, 96
  %v1575 = vpop.permute.xlu0 %1574
  %1576 = vrot.lane.b32.xlu0 %v1291, 96
  %v1577 = vpop.permute.xlu0 %1576
  %v1580 = vadd.f32 %v1566, %v1575
  %v1581 = vadd.f32 %v1567, %v1575
  %v1582 = vadd.f32 %v1568, %v1577
  %v1583 = vadd.f32 %v1569, %v1577
  %v1584 = vrot.slane %v1580, 6
  %v1585 = vrot.slane %v1581, 6
  %v1586 = vrot.slane %v1582, 6
  %v1587 = vrot.slane %v1583, 6
  %v1588 = vsel %vm1305, %v1586, %v1587
  %v1589 = vsel %vm1305, %v1585, %v1586
  %v1590 = vsel %vm1305, %v1584, %v1585
  %v1591 = vsel %vm1305, %v1587, %v1584
  %v1592 = vsel %vm1312, %v1591, 0.0
  %v1593 = vsel %vm1313, %v1590, 0.0
  %v1594 = vsel %vm1312, %v1589, 0.0
  %v1595 = vsel %vm1313, %v1588, 0.0
  %v1596 = vrot.slane %v1580, 2
  %v1597 = vrot.slane %v1581, 2
  %v1598 = vrot.slane %v1582, 2
  %v1599 = vrot.slane %v1583, 2
  %v1600 = vsel %vm1324, %v1598, %v1599
  %v1601 = vsel %vm1324, %v1597, %v1598
  %v1602 = vsel %vm1324, %v1596, %v1597
  %v1603 = vsel %vm1324, %v1599, %v1596
  %v1604 = vsel %vm1331, %v1602, 0.0
  %v1605 = vsel %vm1332, %v1601, 0.0
  %v1606 = vsel %vm1331, %v1600, 0.0
  %v1607 = vsel %vm1332, %v1603, 0.0
  %1612 = vrot.lane.b32.xlu0 %v1580, 32
  %v1613 = vpop.permute.xlu0 %1612
  %1614 = vrot.lane.b32.xlu0 %v1581, 32
  %v1615 = vpop.permute.xlu0 %1614
  %1616 = vrot.lane.b32.xlu0 %v1582, 32
  %v1617 = vpop.permute.xlu0 %1616
  %1618 = vrot.lane.b32.xlu0 %v1583, 32
  %v1619 = vpop.permute.xlu0 %1618
  %1628 = vrot.lane.b32.xlu0 %v1604, 64
  %v1629 = vpop.permute.xlu0 %1628
  %1630 = vrot.lane.b32.xlu0 %v1605, 64
  %v1631 = vpop.permute.xlu0 %1630
  %1632 = vrot.lane.b32.xlu0 %v1606, 64
  %v1633 = vpop.permute.xlu0 %1632
  %1634 = vrot.lane.b32.xlu0 %v1607, 64
  %v1635 = vpop.permute.xlu0 %1634
  %v1640 = vsel %vm362, %v1592, %v1613
  %v1641 = vsel %vm362, %v1593, %v1615
  %v1642 = vsel %vm362, %v1594, %v1617
  %v1643 = vsel %vm362, %v1595, %v1619
  %v1644 = vsel %vm1373, %v1640, %v1629
  %v1645 = vsel %vm1373, %v1641, %v1631
  %v1646 = vsel %vm1373, %v1642, %v1633
  %v1647 = vsel %vm1373, %v1643, %v1635
  %v1648 = vpack.c.bf16 %v1645, %v1644
  %v1649 = vpack.c.bf16 %v1647, %v1646
  %v1650 = vld [vmem:[%s4 + $0xf0] sm:$0xf]
  %v1651 = vld [vmem:[%s4 + $0xf4] sm:$0xf]
  %v1652 = vld [vmem:[%s4 + $0xf8] sm:$0xf]
  %v1653 = vld [vmem:[%s4 + $0xfc] sm:$0xf]
  %v1654 = vld [vmem:[%s4 + $0x100] sm:$0xf]
  %v1655 = vld [vmem:[%s4 + $0x104] sm:$0xf]
  %v1656 = vld [vmem:[%s4 + $0x108] sm:$0xf]
  %v1657 = vld [vmem:[%s4 + $0x10c] sm:$0xf]
  %v1658 = vld [vmem:[%s4 + $0x110] sm:$0xf]
  %v1659 = vld [vmem:[%s4 + $0x114] sm:$0xf]
  %v1660 = vld [vmem:[%s4 + $0x118] sm:$0xf]
  %v1661 = vld [vmem:[%s4 + $0x11c] sm:$0xf]
  %v1674 = vunpack.c.l.b16 %v1650
  %v1675 = vunpack.c.l.b16 %v1651
  %v1676 = vunpack.c.l.b16 %v1652
  %v1677 = vunpack.c.l.b16 %v1653
  %v1678 = vunpack.c.l.b16 %v1654
  %v1679 = vunpack.c.l.b16 %v1655
  %v1680 = vunpack.c.l.b16 %v1656
  %v1681 = vunpack.c.l.b16 %v1657
  %v1682 = vunpack.c.l.b16 %v1658
  %v1683 = vunpack.c.l.b16 %v1659
  %v1684 = vunpack.c.l.b16 %v1660
  %v1685 = vunpack.c.l.b16 %v1661
  %v1686 = vpack.c.b16 %v1675, %v1674
  %v1687 = vpack.c.b16 %v1677, %v1676
  %v1688 = vpack.c.b16 %v1679, %v1678
  %v1689 = vpack.c.b16 %v1681, %v1680
  %v1690 = vpack.c.b16 %v1683, %v1682
  %v1691 = vpack.c.b16 %v1685, %v1684
  %1702 = vrot.lane.b32.xlu0 %v1180, 64
  %v1703 = vpop.permute.xlu0 %1702
  %1704 = vrot.lane.b32.xlu0 %v1183, 64
  %v1705 = vpop.permute.xlu0 %1704
  %1706 = vrot.lane.b32.xlu0 %v1188, 64
  %v1707 = vpop.permute.xlu0 %1706
  %1708 = vrot.lane.b32.xlu0 %v1191, 64
  %v1709 = vpop.permute.xlu0 %1708
  %v1715 = vsel %vm1428, %v1648, 0
  %v1718 = vsel %vm1428, %v1649, 0
  %1720 = vmatprep.subr.bf16.mxu0 0
  %1721 = vmatpush1.bf16.msra.mxu0 0
  %1722 = vmatprep.subr.bf16.mxu0 0
  %1723 = vmatpush1.bf16.msra.mxu0 0
  %1724 = vmatprep.subr.bf16.mxu0 0
  %1725 = vmatpush1.bf16.msra.mxu0 %v1691
  %1726 = vmatprep.subr.bf16.mxu0 0
  %1727 = vmatpush1.bf16.msra.mxu0 %v1690
  %1728 = vmatprep.subr.bf16.mxu0 0
  %1729 = vmatpush1.bf16.msra.mxu0 %v1689
  %1730 = vmatprep.subr.bf16.mxu0 0
  %1731 = vmatpush1.bf16.msra.mxu0 %v1688
  %1732 = vmatprep.subr.bf16.mxu0 0
  %1733 = vmatpush1.bf16.msra.mxu0 %v1687
  %1734 = vmatprep.subr.bf16.mxu0 0
  %1735 = vmatpush1.bf16.msra.mxu0 %v1686
  %1736 = vmatprep.subr.bf16.mxu0 0
  %1737 = vmatpush2.bf16.msra.mxu0 0
  %1738 = vmatprep.subr.bf16.mxu0 0
  %1739 = vmatpush2.bf16.msra.mxu0 0
  %1740 = vmatprep.subr.bf16.mxu0 0
  %1741 = vmatpush2.bf16.msra.mxu0 0
  %1742 = vmatprep.subr.bf16.mxu0 0
  %1743 = vmatpush2.bf16.msra.mxu0 0
  %1744 = vmatprep.subr.bf16.mxu0 0
  %1745 = vmatpush2.bf16.msra.mxu0 0
  %1746 = vmatprep.subr.bf16.mxu0 0
  %1747 = vmatpush2.bf16.msra.mxu0 0
  %1748 = vmatprep.subr.bf16.mxu0 0
  %1749 = vmatpush2.bf16.msra.mxu0 0
  %1750 = vmatprep.subr.bf16.mxu0 0
  %1751 = vmatpush2.bf16.msra.mxu0 0
  %1752 = vmatprep.mubr.bf16.mxu0 0
  %1753 = vmatmul.mubr.bf16.gmra.mxu0 %v1715
  %v1754 = vpop.f32.mrf.mxu0
  %v1755 = vadd.f32 %v1703, %v1754
  %v1756 = vpop.f32.mrf.mxu0
  %v1757 = vpop.f32.mrf.mxu0
  %v1758 = vadd.f32 %v1705, %v1757
  %v1759 = vpop.f32.mrf.mxu0
  %1760 = vmatprep.mubr.bf16.mxu0 0
  %1761 = vmatmul.mubr.bf16.gmra.mxu0 %v1718
  %v1762 = vpop.f32.mrf.mxu0
  %v1763 = vadd.f32 %v1707, %v1762
  %v1764 = vpop.f32.mrf.mxu0
  %v1765 = vpop.f32.mrf.mxu0
  %v1766 = vadd.f32 %v1709, %v1765
  %v1767 = vpop.f32.mrf.mxu0
  %1768 = vdwg.mxu0
  %1769 = vrot.lane.b32.xlu0 %v1488, 64
  %v1770 = vpop.permute.xlu0 %1769
  %v1772 = vadd.f32 %v1755, %v1770
  %v1773 = vadd.f32 %v1758, %v1770
  %v1774 = vadd.f32 %v1763, %v1770
  %v1775 = vadd.f32 %v1766, %v1770
  %v1776 = vtanh.pop %v1772
  %v1777 = vtanh.pop %v1773
  %v1778 = vtanh.pop %v1774
  %v1779 = vtanh.pop %v1775
  %v1780 = vxor.u32 %v1772, 2147483648
  %v1781 = vxor.u32 %v1773, 2147483648
  %v1782 = vxor.u32 %v1774, 2147483648
  %v1783 = vxor.u32 %v1775, 2147483648
  %v1784 = vmul.f32 %v1780, 1.442695
  %v1785 = vpow.pop %v1784
  %v1786 = vmul.f32 %v1781, 1.442695
  %v1787 = vpow.pop %v1786
  %v1788 = vmul.f32 %v1782, 1.442695
  %v1789 = vpow.pop %v1788
  %v1790 = vmul.f32 %v1783, 1.442695
  %v1791 = vpow.pop %v1790
  %v1792 = vadd.f32 %v1785, 1.0
  %v1793 = vadd.f32 %v1787, 1.0
  %v1794 = vadd.f32 %v1789, 1.0
  %v1795 = vadd.f32 %v1791, 1.0
  %v1796 = vrcp.pop %v1792
  %v1797 = vmul.f32 1.0, %v1796
  %v1798 = vrcp.pop %v1793
  %v1799 = vmul.f32 1.0, %v1798
  %v1800 = vrcp.pop %v1794
  %v1801 = vmul.f32 1.0, %v1800
  %v1802 = vrcp.pop %v1795
  %v1803 = vmul.f32 1.0, %v1802
  %1808 = vrot.lane.b32.xlu0 %v1797, 96
  %v1809 = vpop.permute.xlu0 %1808
  %1810 = vrot.lane.b32.xlu0 %v1799, 96
  %v1811 = vpop.permute.xlu0 %1810
  %1812 = vrot.lane.b32.xlu0 %v1801, 96
  %v1813 = vpop.permute.xlu0 %1812
  %1814 = vrot.lane.b32.xlu0 %v1803, 96
  %v1815 = vpop.permute.xlu0 %1814
  %v1820 = vmul.f32 %v1776, %v1809
  %v1821 = vmul.f32 %v1777, %v1811
  %v1822 = vmul.f32 %v1778, %v1813
  %v1823 = vmul.f32 %v1779, %v1815
  %v1824 = vmul.f32 %v1820, %v1545
  %v1825 = vmul.f32 %v1821, %v1550
  %v1826 = vmul.f32 %v1822, %v1555
  %v1827 = vmul.f32 %v1823, %v1560
  %v1828 = vadd.f32 %v1570, %v1824
  %v1829 = vadd.f32 %v1571, %v1825
  %v1830 = vadd.f32 %v1572, %v1826
  %v1831 = vadd.f32 %v1573, %v1827
  %v1832 = vmul.f32 %v1828, 0.70710677
  %v1833 = vmul.f32 %v1829, 0.70710677
  %v1834 = vmul.f32 %v1830, 0.70710677
  %v1835 = vmul.f32 %v1831, 0.70710677
  %v1836 = vxor.u32 %v1832, 2147483648
  %v1837 = vxor.u32 %v1833, 2147483648
  %v1838 = vxor.u32 %v1834, 2147483648
  %v1839 = vxor.u32 %v1835, 2147483648
  %v1840 = vmul.f32 %v1836, 1.442695
  %v1841 = vpow.pop %v1840
  %v1842 = vmul.f32 %v1837, 1.442695
  %v1843 = vpow.pop %v1842
  %v1844 = vmul.f32 %v1838, 1.442695
  %v1845 = vpow.pop %v1844
  %v1846 = vmul.f32 %v1839, 1.442695
  %v1847 = vpow.pop %v1846
  %v1848 = vadd.f32 %v1841, 1.0
  %v1849 = vadd.f32 %v1843, 1.0
  %v1850 = vadd.f32 %v1845, 1.0
  %v1851 = vadd.f32 %v1847, 1.0
  %v1852 = vrcp.pop %v1848
  %v1853 = vmul.f32 1.0, %v1852
  %v1854 = vrcp.pop %v1849
  %v1855 = vmul.f32 1.0, %v1854
  %v1856 = vrcp.pop %v1850
  %v1857 = vmul.f32 1.0, %v1856
  %v1858 = vrcp.pop %v1851
  %v1859 = vmul.f32 1.0, %v1858
  %v1860 = vmul.f32 %v1832, %v1853
  %v1861 = vmul.f32 %v1833, %v1855
  %v1862 = vmul.f32 %v1834, %v1857
  %v1863 = vmul.f32 %v1835, %v1859
  %v1864 = vpack.c.bf16 %v1861, %v1860
  %v1865 = vpack.c.bf16 %v1863, %v1862
  %v1866 = vld [vmem:[%s4 + $0x130] sm:$0xf]
  %v1867 = vld [vmem:[%s4 + $0x134] sm:$0xf]
  %v1868 = vld [vmem:[%s4 + $0x138] sm:$0xf]
  %v1869 = vld [vmem:[%s4 + $0x13c] sm:$0xf]
  %v1870 = vld [vmem:[%s5 + $0xf] sm:$0x1]
  %v1872 = vlaneseq
  %v1873 = vshrl.u32 %v1872, 7
  %v1874 = vsub.s32 0, %v1873
  %v1875 = vrot.slane %v1870, %v1874
  %v1881 = vunpack.c.l.b16 %v1866
  %v1882 = vunpack.c.l.b16 %v1867
  %v1883 = vunpack.c.l.b16 %v1868
  %v1884 = vunpack.c.l.b16 %v1869
  %v1885 = vpack.c.b16 %v1882, %v1881
  %v1886 = vpack.c.b16 %v1884, %v1883
  %v1890 = vsel %vm362, %v1864, 0
  %v1893 = vsel %vm362, %v1865, 0
  %1895 = vmatprep.subr.bf16.mxu0 0
  %1896 = vmatpush1.bf16.msra.mxu0 0
  %1897 = vmatprep.subr.bf16.mxu0 0
  %1898 = vmatpush1.bf16.msra.mxu0 0
  %1899 = vmatprep.subr.bf16.mxu0 0
  %1900 = vmatpush1.bf16.msra.mxu0 0
  %1901 = vmatprep.subr.bf16.mxu0 0
  %1902 = vmatpush1.bf16.msra.mxu0 0
  %1903 = vmatprep.subr.bf16.mxu0 0
  %1904 = vmatpush1.bf16.msra.mxu0 0
  %1905 = vmatprep.subr.bf16.mxu0 0
  %1906 = vmatpush1.bf16.msra.mxu0 0
  %1907 = vmatprep.subr.bf16.mxu0 0
  %1908 = vmatpush1.bf16.msra.mxu0 %v1886
  %1909 = vmatprep.subr.bf16.mxu0 0
  %1910 = vmatpush1.bf16.msra.mxu0 %v1885
  %1911 = vmatprep.subr.bf16.mxu0 0
  %1912 = vmatpush2.bf16.msra.mxu0 0
  %1913 = vmatprep.subr.bf16.mxu0 0
  %1914 = vmatpush2.bf16.msra.mxu0 0
  %1915 = vmatprep.subr.bf16.mxu0 0
  %1916 = vmatpush2.bf16.msra.mxu0 0
  %1917 = vmatprep.subr.bf16.mxu0 0
  %1918 = vmatpush2.bf16.msra.mxu0 0
  %1919 = vmatprep.subr.bf16.mxu0 0
  %1920 = vmatpush2.bf16.msra.mxu0 0
  %1921 = vmatprep.subr.bf16.mxu0 0
  %1922 = vmatpush2.bf16.msra.mxu0 0
  %1923 = vmatprep.subr.bf16.mxu0 0
  %1924 = vmatpush2.bf16.msra.mxu0 0
  %1925 = vmatprep.subr.bf16.mxu0 0
  %1926 = vmatpush2.bf16.msra.mxu0 0
  %1927 = vmatprep.mubr.bf16.mxu0 0
  %1928 = vmatmul.mubr.bf16.gmra.mxu0 %v1890
  %v1929 = vpop.f32.mrf.mxu0
  %v1930 = vadd.f32 %v1875, %v1929
  %v1931 = vpop.f32.mrf.mxu0
  %v1932 = vpop.f32.mrf.mxu0
  %v1933 = vadd.f32 %v1875, %v1932
  %v1934 = vpop.f32.mrf.mxu0
  %1935 = vmatprep.mubr.bf16.mxu0 0
  %1936 = vmatmul.mubr.bf16.gmra.mxu0 %v1893
  %v1937 = vpop.f32.mrf.mxu0
  %v1938 = vadd.f32 %v1875, %v1937
  %v1939 = vpop.f32.mrf.mxu0
  %v1940 = vpop.f32.mrf.mxu0
  %v1941 = vadd.f32 %v1875, %v1940
  %v1942 = vpop.f32.mrf.mxu0
  %1943 = vdwg.mxu0
  %v1944 = vmul.f32 %v1930, %v1545
  %v1945 = vmul.f32 %v1933, %v1550
  %v1946 = vmul.f32 %v1938, %v1555
  %v1947 = vmul.f32 %v1941, %v1560
  %1948 = vset.pattern.permute.xlu0 3
  %1949 = vperm.xlu0 %1948, %v277
  %v1950 = vpop.permute.xlu0 %1949
  %1952 = vset.pattern.permute.xlu0 3
  %1953 = vperm.xlu0 %1952, %v281
  %v1954 = vpop.permute.xlu0 %1953
  %v1956 = vmul.f32 %v333, %v1950
  %v1957 = vmul.f32 %v334, %v1950
  %v1958 = vmul.f32 %v335, %v1954
  %v1959 = vmul.f32 %v336, %v1954
  %1960 = vset.pattern.permute.xlu0 4
  %1961 = vperm.xlu0 %1960, %v277
  %v1962 = vpop.permute.xlu0 %1961
  %1964 = vset.pattern.permute.xlu0 4
  %1965 = vperm.xlu0 %1964, %v281
  %v1966 = vpop.permute.xlu0 %1965
  %v1968 = vmul.f32 %v1944, %v1962
  %v1969 = vmul.f32 %v1945, %v1962
  %v1970 = vmul.f32 %v1946, %v1966
  %v1971 = vmul.f32 %v1947, %v1966
  %v1972 = vsub.f32 %v1956, %v1968
  %v1973 = vsub.f32 %v1957, %v1969
  %v1974 = vsub.f32 %v1958, %v1970
  %v1975 = vsub.f32 %v1959, %v1971
  %v1978 = vrot.slane %v1946, 7
  %vm1979 = vcmask 1041409
  %v1980 = vsel %vm1979, %v1978, %v1944
  %v1982 = vrot.slane %v1944, 1
  %v1983 = vsel %vm1979, %v1946, %v1982
  %1984 = vrot.lane.b32.xlu0 %v1983, 8
  %v1985 = vpop.permute.xlu0 %1984
  %v1987 = vrot.slane %v1944, 2
  %v1988 = vrot.slane %v1946, 1
  %v1989 = vsel %vm1979, %v1988, %v1987
  %1990 = vrot.lane.b32.xlu0 %v1989, 16
  %v1991 = vpop.permute.xlu0 %1990
  %v1993 = vrot.slane %v1944, 3
  %v1994 = vrot.slane %v1946, 2
  %v1995 = vsel %vm1979, %v1994, %v1993
  %1996 = vrot.lane.b32.xlu0 %v1995, 24
  %v1997 = vpop.permute.xlu0 %1996
  %v1999 = vrot.slane %v1944, 4
  %v2000 = vrot.slane %v1946, 3
  %v2001 = vsel %vm1979, %v2000, %v1999
  %2002 = vrot.lane.b32.xlu0 %v2001, 32
  %v2003 = vpop.permute.xlu0 %2002
  %v2005 = vrot.slane %v1944, 5
  %v2006 = vrot.slane %v1946, 4
  %v2007 = vsel %vm1979, %v2006, %v2005
  %2008 = vrot.lane.b32.xlu0 %v2007, 40
  %v2009 = vpop.permute.xlu0 %2008
  %v2011 = vrot.slane %v1944, 6
  %v2012 = vrot.slane %v1946, 5
  %v2013 = vsel %vm1979, %v2012, %v2011
  %2014 = vrot.lane.b32.xlu0 %v2013, 48
  %v2015 = vpop.permute.xlu0 %2014
  %v2017 = vrot.slane %v1944, 7
  %v2018 = vrot.slane %v1946, 6
  %v2019 = vsel %vm1979, %v2018, %v2017
  %2020 = vrot.lane.b32.xlu0 %v2019, 56
  %v2021 = vpop.permute.xlu0 %2020
  %v2025 = vrot.slane %v1947, 7
  %v2026 = vsel %vm1979, %v2025, %v1945
  %2027 = vrot.lane.b32.xlu0 %v2026, 64
  %v2028 = vpop.permute.xlu0 %2027
  %v2030 = vrot.slane %v1945, 1
  %v2031 = vsel %vm1979, %v1947, %v2030
  %2032 = vrot.lane.b32.xlu0 %v2031, 72
  %v2033 = vpop.permute.xlu0 %2032
  %v2035 = vrot.slane %v1945, 2
  %v2036 = vrot.slane %v1947, 1
  %v2037 = vsel %vm1979, %v2036, %v2035
  %2038 = vrot.lane.b32.xlu0 %v2037, 80
  %v2039 = vpop.permute.xlu0 %2038
  %v2041 = vrot.slane %v1945, 3
  %v2042 = vrot.slane %v1947, 2
  %v2043 = vsel %vm1979, %v2042, %v2041
  %2044 = vrot.lane.b32.xlu0 %v2043, 88
  %v2045 = vpop.permute.xlu0 %2044
  %v2047 = vrot.slane %v1945, 4
  %v2048 = vrot.slane %v1947, 3
  %v2049 = vsel %vm1979, %v2048, %v2047
  %2050 = vrot.lane.b32.xlu0 %v2049, 96
  %v2051 = vpop.permute.xlu0 %2050
  %v2053 = vrot.slane %v1945, 5
  %v2054 = vrot.slane %v1947, 4
  %v2055 = vsel %vm1979, %v2054, %v2053
  %2056 = vrot.lane.b32.xlu0 %v2055, 104
  %v2057 = vpop.permute.xlu0 %2056
  %v2059 = vrot.slane %v1945, 6
  %v2060 = vrot.slane %v1947, 5
  %v2061 = vsel %vm1979, %v2060, %v2059
  %2062 = vrot.lane.b32.xlu0 %v2061, 112
  %v2063 = vpop.permute.xlu0 %2062
  %v2065 = vrot.slane %v1945, 7
  %v2066 = vrot.slane %v1947, 6
  %v2067 = vsel %vm1979, %v2066, %v2065
  %2068 = vrot.lane.b32.xlu0 %v2067, 120
  %v2069 = vpop.permute.xlu0 %2068
  %v2071 = vsel %vm575, %v1980, %v1985
  %v2072 = vsel %vm250, %v2071, %v1991
  %vm2073 = vcmask 195584
  %v2074 = vsel %vm2073, %v2072, %v1997
  %v2075 = vsel %vm362, %v2074, %v2003
  %vm2076 = vcmask 326656
  %v2077 = vsel %vm2076, %v2075, %v2009
  %vm2078 = vcmask 392192
  %v2079 = vsel %vm2078, %v2077, %v2015
  %vm2080 = vcmask 457728
  %v2081 = vsel %vm2080, %v2079, %v2021
  %v2082 = vsel %vm1373, %v2081, %v2028
  %vm2083 = vcmask 588800
  %v2084 = vsel %vm2083, %v2082, %v2033
  %vm2085 = vcmask 654336
  %v2086 = vsel %vm2085, %v2084, %v2039
  %vm2087 = vcmask 719872
  %v2088 = vsel %vm2087, %v2086, %v2045
  %v2089 = vsel %vm1428, %v2088, %v2051
  %vm2090 = vcmask 850944
  %v2091 = vsel %vm2090, %v2089, %v2057
  %vm2092 = vcmask 916480
  %v2093 = vsel %vm2092, %v2091, %v2063
  %vm2094 = vcmask 982016
  %v2095 = vsel %vm2094, %v2093, %v2069
  %v2098 = vrot.slane %v1974, 7
  %v2099 = vsel %vm1979, %v2098, %v1972
  %v2101 = vrot.slane %v1972, 1
  %v2102 = vsel %vm1979, %v1974, %v2101
  %2103 = vrot.lane.b32.xlu0 %v2102, 8
  %v2104 = vpop.permute.xlu0 %2103
  %v2106 = vrot.slane %v1972, 2
  %v2107 = vrot.slane %v1974, 1
  %v2108 = vsel %vm1979, %v2107, %v2106
  %2109 = vrot.lane.b32.xlu0 %v2108, 16
  %v2110 = vpop.permute.xlu0 %2109
  %v2112 = vrot.slane %v1972, 3
  %v2113 = vrot.slane %v1974, 2
  %v2114 = vsel %vm1979, %v2113, %v2112
  %2115 = vrot.lane.b32.xlu0 %v2114, 24
  %v2116 = vpop.permute.xlu0 %2115
  %v2118 = vrot.slane %v1972, 4
  %v2119 = vrot.slane %v1974, 3
  %v2120 = vsel %vm1979, %v2119, %v2118
  %2121 = vrot.lane.b32.xlu0 %v2120, 32
  %v2122 = vpop.permute.xlu0 %2121
  %v2124 = vrot.slane %v1972, 5
  %v2125 = vrot.slane %v1974, 4
  %v2126 = vsel %vm1979, %v2125, %v2124
  %2127 = vrot.lane.b32.xlu0 %v2126, 40
  %v2128 = vpop.permute.xlu0 %2127
  %v2130 = vrot.slane %v1972, 6
  %v2131 = vrot.slane %v1974, 5
  %v2132 = vsel %vm1979, %v2131, %v2130
  %2133 = vrot.lane.b32.xlu0 %v2132, 48
  %v2134 = vpop.permute.xlu0 %2133
  %v2136 = vrot.slane %v1972, 7
  %v2137 = vrot.slane %v1974, 6
  %v2138 = vsel %vm1979, %v2137, %v2136
  %2139 = vrot.lane.b32.xlu0 %v2138, 56
  %v2140 = vpop.permute.xlu0 %2139
  %v2144 = vrot.slane %v1975, 7
  %v2145 = vsel %vm1979, %v2144, %v1973
  %2146 = vrot.lane.b32.xlu0 %v2145, 64
  %v2147 = vpop.permute.xlu0 %2146
  %v2149 = vrot.slane %v1973, 1
  %v2150 = vsel %vm1979, %v1975, %v2149
  %2151 = vrot.lane.b32.xlu0 %v2150, 72
  %v2152 = vpop.permute.xlu0 %2151
  %v2154 = vrot.slane %v1973, 2
  %v2155 = vrot.slane %v1975, 1
  %v2156 = vsel %vm1979, %v2155, %v2154
  %2157 = vrot.lane.b32.xlu0 %v2156, 80
  %v2158 = vpop.permute.xlu0 %2157
  %v2160 = vrot.slane %v1973, 3
  %v2161 = vrot.slane %v1975, 2
  %v2162 = vsel %vm1979, %v2161, %v2160
  %2163 = vrot.lane.b32.xlu0 %v2162, 88
  %v2164 = vpop.permute.xlu0 %2163
  %v2166 = vrot.slane %v1973, 4
  %v2167 = vrot.slane %v1975, 3
  %v2168 = vsel %vm1979, %v2167, %v2166
  %2169 = vrot.lane.b32.xlu0 %v2168, 96
  %v2170 = vpop.permute.xlu0 %2169
  %v2172 = vrot.slane %v1973, 5
  %v2173 = vrot.slane %v1975, 4
  %v2174 = vsel %vm1979, %v2173, %v2172
  %2175 = vrot.lane.b32.xlu0 %v2174, 104
  %v2176 = vpop.permute.xlu0 %2175
  %v2178 = vrot.slane %v1973, 6
  %v2179 = vrot.slane %v1975, 5
  %v2180 = vsel %vm1979, %v2179, %v2178
  %2181 = vrot.lane.b32.xlu0 %v2180, 112
  %v2182 = vpop.permute.xlu0 %2181
  %v2184 = vrot.slane %v1973, 7
  %v2185 = vrot.slane %v1975, 6
  %v2186 = vsel %vm1979, %v2185, %v2184
  %2187 = vrot.lane.b32.xlu0 %v2186, 120
  %v2188 = vpop.permute.xlu0 %2187
  %v2190 = vsel %vm575, %v2099, %v2104
  %v2191 = vsel %vm250, %v2190, %v2110
  %v2192 = vsel %vm2073, %v2191, %v2116
  %v2193 = vsel %vm362, %v2192, %v2122
  %v2194 = vsel %vm2076, %v2193, %v2128
  %v2195 = vsel %vm2078, %v2194, %v2134
  %v2196 = vsel %vm2080, %v2195, %v2140
  %v2197 = vsel %vm1373, %v2196, %v2147
  %v2198 = vsel %vm2083, %v2197, %v2152
  %v2199 = vsel %vm2085, %v2198, %v2158
  %v2200 = vsel %vm2087, %v2199, %v2164
  %v2201 = vsel %vm1428, %v2200, %v2170
  %v2202 = vsel %vm2090, %v2201, %v2176
  %v2203 = vsel %vm2092, %v2202, %v2182
  %v2204 = vsel %vm2094, %v2203, %v2188
  %v2207 = vcombine.low %v2095, %v2204
  %v2209 = vunpack.c.l.s4 1983009808
  %v2210 = vunpack.c.0.s8 %v2209
  %v2211 = vlaneseq
  %v2212 = vshrl.u32 %v2211, 7
  %v2213 = vsub.s32 %v2210, %v2212
  %v2214 = vrot.slane %v2207, %v2213
  %2216 = vst [vmem:[%s6] sm:$0xf] %v2214
  // Predicated region
  $region26: #{diffusion_forward.1} parent=0 // pred_check
    _
  $region27: #{diffusion_forward.1} parent=0 // pred_check_branch
    %2218 = sbr.rel (0) target = $region29
  $region28: #{diffusion_forward.1} parent=0 // pred_region
    _
  $region29: #{diffusion_forward.1} parent=0 // pred_fallthru
    _
  // Predicated region
  $region30: #{diffusion_forward.1} parent=0 // pred_check
    _
  $region31: #{diffusion_forward.1} parent=0 // pred_check_branch
    %2220 = sbr.rel (0) target = $region33
  $region32: #{diffusion_forward.1} parent=0 // pred_region
    _
  $region33: #{diffusion_forward.1} parent=0 // pred_fallthru
    _

// kernel: diffusion_forward.1
$region0: #{diffusion_forward.1}
  #allocation0 [shape = 'u32[]', space=smem, size = 0x4, offset = 0x4, fixed_abs, tag = 'smem constant byte address 0x4 - core index']
  #allocation1 [shape = 'u32[144,128]{1,0:T(1,128)}', space=vmem, size = 0x12000, scoped, tag = 'internal scratch']
  %s0 = inlined_call_operand.vmem [shape: f32[2,32], index: 0, kind: input, shape index: {}]
  %s1 = inlined_call_operand.vmem [shape: f32[2,8], index: 1, kind: input, shape index: {}]
  %s2 = inlined_call_operand.vmem [shape: f32[2,16,8], index: 2, kind: input, shape index: {}]
  %s3 = inlined_call_operand.vmem [shape: f32[2,16,8], index: 3, kind: input, shape index: {}]
  %s4 = inlined_call_operand.vmem [shape: f32[2,16,16], index: 4, kind: input, shape index: {}]
  %s5 = inlined_call_operand.vmem [shape: bf16[640,128], index: 5, kind: input, shape index: {}]
  %s6 = inlined_call_operand.vmem [shape: f32[1,2176], index: 6, kind: input, shape index: {}]
  %s7 = inlined_call_operand.vmem [shape: f32[2,256], index: 7, kind: output, shape index: {}]
  %s8 = sld [smem:[#allocation0]]
  $region38: #{diffusion_forward.1} parent=0
    _
  %s10 = ssub.s32 1, %s8
  %s11 = scalar_select 0, %s10, %s8
  // Predicated region
  $region2: #{diffusion_forward.1} parent=0 // pred_check
    _
  $region3: #{diffusion_forward.1} parent=0 // pred_check_branch
    %13 = sbr.rel (0) target = $region5
  $region4: #{diffusion_forward.1} parent=0 // pred_region
    _
  $region5: #{diffusion_forward.1} parent=0 // pred_fallthru
    _
  // Predicated region
  $region6: #{diffusion_forward.1} parent=0 // pred_check
    _
  $region7: #{diffusion_forward.1} parent=0 // pred_check_branch
    %15 = sbr.rel (0) target = $region9
  $region8: #{diffusion_forward.1} parent=0 // pred_region
    _
  $region9: #{diffusion_forward.1} parent=0 // pred_fallthru
    _
  // Predicated region
  $region10: #{diffusion_forward.1} parent=0 // pred_check
    _
  $region11: #{diffusion_forward.1} parent=0 // pred_check_branch
    %17 = sbr.rel (0) target = $region13
  $region12: #{diffusion_forward.1} parent=0 // pred_region
    _
  $region13: #{diffusion_forward.1} parent=0 // pred_fallthru
    _
  // Predicated region
  $region14: #{diffusion_forward.1} parent=0 // pred_check
    _
  $region15: #{diffusion_forward.1} parent=0 // pred_check_branch
    %19 = sbr.rel (0) target = $region17
  $region16: #{diffusion_forward.1} parent=0 // pred_region
    _
  $region17: #{diffusion_forward.1} parent=0 // pred_fallthru
    _
  // Predicated region
  $region18: #{diffusion_forward.1} parent=0 // pred_check
    _
  $region19: #{diffusion_forward.1} parent=0 // pred_check_branch
    %21 = sbr.rel (0) target = $region21
  $region20: #{diffusion_forward.1} parent=0 // pred_region
    _
  $region21: #{diffusion_forward.1} parent=0 // pred_fallthru
    _
  // Predicated region
  $region22: #{diffusion_forward.1} parent=0 // pred_check
    _
  $region23: #{diffusion_forward.1} parent=0 // pred_check_branch
    %23 = sbr.rel (0) target = $region25
  $region24: #{diffusion_forward.1} parent=0 // pred_region
    _
  $region25: #{diffusion_forward.1} parent=0 // pred_fallthru
    _
  // Predicated region
  $region26: #{diffusion_forward.1} parent=0 // pred_check
    _
  $region27: #{diffusion_forward.1} parent=0 // pred_check_branch
    %25 = sbr.rel (0) target = $region29
  $region28: #{diffusion_forward.1} parent=0 // pred_region
    _
  $region29: #{diffusion_forward.1} parent=0 // pred_fallthru
    _
  %v27 = vld [vmem:[%s0] sm:$0x3]
  %v28 = vld [vmem:[%s1] sm:$0x3]
  %v31 = vunpack.c.l.s4 1966171168
  %v32 = vunpack.c.0.s8 %v31
  %v33 = vlaneseq
  %v34 = vshrl.u32 %v33, 7
  %v35 = vsub.s32 %v32, %v34
  %v36 = vrot.slane %v28, %v35
  %v37 = vcombine.high %v36, %v36
  %v39 = vunpack.c.l.s4 1966171168
  %v40 = vunpack.c.0.s8 %v39
  %v41 = vlaneseq
  %v42 = vshrl.u32 %v41, 7
  %v43 = vsub.s32 %v40, %v42
  %v44 = vrot.slane %v36, %v43
  %v46 = vunpack.c.l.s4 1966171168
  %v47 = vunpack.c.0.s8 %v46
  %v48 = vlaneseq
  %v49 = vshrl.u32 %v48, 7
  %v50 = vsub.s32 %v47, %v49
  %v51 = vrot.slane %v37, %v50
  %v52 = vlaneseq
  %v53 = vshrl.u32 %v52, 7
  %v54 = vsub.s32 0, %v53
  %v55 = vrot.slane %v44, %v54
  %v56 = vlaneseq
  %v57 = vshrl.u32 %v56, 7
  %v58 = vsub.s32 0, %v57
  %v59 = vrot.slane %v51, %v58
  %v62 = vlaneseq
  %v63 = vshrl.u32 %v62, 7
  %v64 = vadd.s32 %v63, 8
  %v65 = vcvt.s32.f32 %v63
  %v66 = vcvt.s32.f32 %v64
  %vm67 = vcmp.lt.f32.partialorder %v65, %v55
  %vm68 = vcmp.lt.f32.partialorder %v66, %v55
  %vm69 = vcmp.lt.f32.partialorder %v65, %v59
  %vm70 = vcmp.lt.f32.partialorder %v66, %v59
  %v71 = vsel %vm67, 1, 0
  %v72 = vsel %vm68, 1, 0
  %v73 = vsel %vm69, 1, 0
  %v74 = vsel %vm70, 1, 0
  %v75 = vcvt.s32.f32 %v71
  %v76 = vcvt.s32.f32 %v72
  %v77 = vcvt.s32.f32 %v73
  %v78 = vcvt.s32.f32 %v74
  %v79 = vld [vmem:[%s2] sm:$0xff]
  %v80 = vld [vmem:[%s2 + $0x8] sm:$0xff]
  %v81 = vld [vmem:[%s2 + $0x10] sm:$0xff]
  %v82 = vld [vmem:[%s2 + $0x18] sm:$0xff]
  %v83 = vld [vmem:[%s3] sm:$0xff]
  %v84 = vld [vmem:[%s3 + $0x8] sm:$0xff]
  %v85 = vld [vmem:[%s3 + $0x10] sm:$0xff]
  %v86 = vld [vmem:[%s3 + $0x18] sm:$0xff]
  %87 = vset.pattern.permute.xlu0 1
  %88 = vperm.xlu0 %87, %v55
  %v89 = vpop.permute.xlu0 %88
  %91 = vset.pattern.permute.xlu0 1
  %92 = vperm.xlu0 %91, %v59
  %v93 = vpop.permute.xlu0 %92
  %v95 = vmul.f32 %v79, %v89
  %v96 = vmul.f32 %v80, %v89
  %v97 = vmul.f32 %v81, %v93
  %v98 = vmul.f32 %v82, %v93
  %99 = vset.pattern.permute.xlu0 2
  %100 = vperm.xlu0 %99, %v55
  %v101 = vpop.permute.xlu0 %100
  %103 = vset.pattern.permute.xlu0 2
  %104 = vperm.xlu0 %103, %v59
  %v105 = vpop.permute.xlu0 %104
  %v107 = vmul.f32 %v83, %v101
  %v108 = vmul.f32 %v84, %v101
  %v109 = vmul.f32 %v85, %v105
  %v110 = vmul.f32 %v86, %v105
  %v111 = vadd.f32 %v95, %v107
  %v112 = vadd.f32 %v96, %v108
  %v113 = vadd.f32 %v97, %v109
  %v114 = vadd.f32 %v98, %v110
  %v115 = vpack.c.bf16 %v27, %v27
  %v116 = vld [vmem:[%s5 + $0x60] sm:$0xf]
  %v117 = vld [vmem:[%s5 + $0x64] sm:$0xf]
  %v118 = vld [vmem:[%s5 + $0x68] sm:$0xf]
  %v119 = vld [vmem:[%s5 + $0x6c] sm:$0xf]
  %v120 = vld [vmem:[%s6 + $0x8] sm:$0x1]
  %121 = vset.pattern.permute.xlu0 0
  %122 = vperm.xlu0 %121, %v28
  %v123 = vpop.permute.xlu0 %122
  %v126 = vlaneseq
  %v127 = vshrl.u32 %v126, 7
  %v128 = vsub.s32 0, %v127
  %v129 = vrot.slane %v120, %v128
  %v131 = vmul.f32 %v123, %v129
  %v136 = vunpack.c.l.b16 %v116
  %v137 = vunpack.c.l.b16 %v117
  %v138 = vunpack.c.l.b16 %v118
  %v139 = vunpack.c.l.b16 %v119
  %v140 = vpack.c.b16 %v137, %v136
  %v141 = vpack.c.b16 %v139, %v138
  %vm144 = vcmask 261120
  %v146 = vsel %vm144, %v115, 0
  %148 = vmatprep.subr.bf16.mxu0 0
  %149 = vmatpush1.bf16.msra.mxu0 0
  %150 = vmatprep.subr.bf16.mxu0 0
  %151 = vmatpush1.bf16.msra.mxu0 0
  %152 = vmatprep.subr.bf16.mxu0 0
  %153 = vmatpush1.bf16.msra.mxu0 0
  %154 = vmatprep.subr.bf16.mxu0 0
  %155 = vmatpush1.bf16.msra.mxu0 0
  %156 = vmatprep.subr.bf16.mxu0 0
  %157 = vmatpush1.bf16.msra.mxu0 0
  %158 = vmatprep.subr.bf16.mxu0 0
  %159 = vmatpush1.bf16.msra.mxu0 0
  %160 = vmatprep.subr.bf16.mxu0 0
  %161 = vmatpush1.bf16.msra.mxu0 %v141
  %162 = vmatprep.subr.bf16.mxu0 0
  %163 = vmatpush1.bf16.msra.mxu0 %v140
  %164 = vmatprep.subr.bf16.mxu0 0
  %165 = vmatpush2.bf16.msra.mxu0 0
  %166 = vmatprep.subr.bf16.mxu0 0
  %167 = vmatpush2.bf16.msra.mxu0 0
  %168 = vmatprep.subr.bf16.mxu0 0
  %169 = vmatpush2.bf16.msra.mxu0 0
  %170 = vmatprep.subr.bf16.mxu0 0
  %171 = vmatpush2.bf16.msra.mxu0 0
  %172 = vmatprep.subr.bf16.mxu0 0
  %173 = vmatpush2.bf16.msra.mxu0 0
  %174 = vmatprep.subr.bf16.mxu0 0
  %175 = vmatpush2.bf16.msra.mxu0 0
  %176 = vmatprep.subr.bf16.mxu0 0
  %177 = vmatpush2.bf16.msra.mxu0 0
  %178 = vmatprep.subr.bf16.mxu0 0
  %179 = vmatpush2.bf16.msra.mxu0 0
  %180 = vmatprep.mubr.bf16.mxu0 0
  %181 = vmatmul.mubr.bf16.gmra.mxu0 %v146
  %v182 = vpop.f32.mrf.mxu0
  %v183 = vadd.f32 %v131, %v182
  %v184 = vpop.f32.mrf.mxu0
  %v185 = vpop.f32.mrf.mxu0
  %v186 = vpop.f32.mrf.mxu0
  %187 = vdwg.mxu0
  %v188 = vld [vmem:[%s6 + $0x9] sm:$0x1]
  %v190 = vlaneseq
  %v191 = vshrl.u32 %v190, 7
  %v192 = vsub.s32 0, %v191
  %v193 = vrot.slane %v188, %v192
  %v195 = vadd.f32 %v183, %v193
  %v196 = vxor.u32 %v195, 2147483648
  %v197 = vmul.f32 %v196, 1.442695
  %v198 = vpow.pop %v197
  %v199 = vadd.f32 %v198, 1.0
  %v200 = vrcp.pop %v199
  %v201 = vmul.f32 1.0, %v200
  %v202 = vmul.f32 %v195, %v201
  %v203 = vpack.c.bf16 %v202, %v202
  %v204 = vld [vmem:[%s5 + $0x70] sm:$0xf]
  %v205 = vld [vmem:[%s5 + $0x74] sm:$0xf]
  %v206 = vld [vmem:[%s5 + $0x78] sm:$0xf]
  %v207 = vld [vmem:[%s5 + $0x7c] sm:$0xf]
  %v208 = vld [vmem:[%s5 + $0x80] sm:$0xf]
  %v209 = vld [vmem:[%s5 + $0x84] sm:$0xf]
  %v210 = vld [vmem:[%s5 + $0x88] sm:$0xf]
  %v211 = vld [vmem:[%s5 + $0x8c] sm:$0xf]
  %v212 = vld [vmem:[%s5 + $0x90] sm:$0xf]
  %v213 = vld [vmem:[%s5 + $0x94] sm:$0xf]
  %v214 = vld [vmem:[%s5 + $0x98] sm:$0xf]
  %v215 = vld [vmem:[%s5 + $0x9c] sm:$0xf]
  %v216 = vld [vmem:[%s5 + $0xa0] sm:$0xf]
  %v217 = vld [vmem:[%s5 + $0xa4] sm:$0xf]
  %v218 = vld [vmem:[%s5 + $0xa8] sm:$0xf]
  %v219 = vld [vmem:[%s5 + $0xac] sm:$0xf]
  %v220 = vld [vmem:[%s6 + $0xa] sm:$0x1]
  %v222 = vlaneseq
  %v223 = vshrl.u32 %v222, 7
  %v224 = vsub.s32 0, %v223
  %v225 = vrot.slane %v220, %v224
  %v243 = vunpack.c.l.b16 %v204
  %v244 = vunpack.c.l.b16 %v205
  %v245 = vunpack.c.l.b16 %v206
  %v246 = vunpack.c.l.b16 %v207
  %v247 = vunpack.c.l.b16 %v208
  %v248 = vunpack.c.l.b16 %v209
  %v249 = vunpack.c.l.b16 %v210
  %v250 = vunpack.c.l.b16 %v211
  %v251 = vunpack.c.l.b16 %v212
  %v252 = vunpack.c.l.b16 %v213
  %v253 = vunpack.c.l.b16 %v214
  %v254 = vunpack.c.l.b16 %v215
  %v255 = vunpack.c.l.b16 %v216
  %v256 = vunpack.c.l.b16 %v217
  %v257 = vunpack.c.l.b16 %v218
  %v258 = vunpack.c.l.b16 %v219
  %v259 = vpack.c.b16 %v244, %v243
  %v260 = vpack.c.b16 %v246, %v245
  %v261 = vpack.c.b16 %v248, %v247
  %v262 = vpack.c.b16 %v250, %v249
  %v263 = vpack.c.b16 %v252, %v251
  %v264 = vpack.c.b16 %v254, %v253
  %v265 = vpack.c.b16 %v256, %v255
  %v266 = vpack.c.b16 %v258, %v257
  %275 = vmatprep.subr.bf16.mxu0 0
  %276 = vmatpush1.bf16.msra.mxu0 %v266
  %277 = vmatprep.subr.bf16.mxu0 0
  %278 = vmatpush1.bf16.msra.mxu0 %v265
  %279 = vmatprep.subr.bf16.mxu0 0
  %280 = vmatpush1.bf16.msra.mxu0 %v264
  %281 = vmatprep.subr.bf16.mxu0 0
  %282 = vmatpush1.bf16.msra.mxu0 %v263
  %283 = vmatprep.subr.bf16.mxu0 0
  %284 = vmatpush1.bf16.msra.mxu0 %v262
  %285 = vmatprep.subr.bf16.mxu0 0
  %286 = vmatpush1.bf16.msra.mxu0 %v261
  %287 = vmatprep.subr.bf16.mxu0 0
  %288 = vmatpush1.bf16.msra.mxu0 %v260
  %289 = vmatprep.subr.bf16.mxu0 0
  %290 = vmatpush1.bf16.msra.mxu0 %v259
  %291 = vmatprep.subr.bf16.mxu0 0
  %292 = vmatpush2.bf16.msra.mxu0 0
  %293 = vmatprep.subr.bf16.mxu0 0
  %294 = vmatpush2.bf16.msra.mxu0 0
  %295 = vmatprep.subr.bf16.mxu0 0
  %296 = vmatpush2.bf16.msra.mxu0 0
  %297 = vmatprep.subr.bf16.mxu0 0
  %298 = vmatpush2.bf16.msra.mxu0 0
  %299 = vmatprep.subr.bf16.mxu0 0
  %300 = vmatpush2.bf16.msra.mxu0 0
  %301 = vmatprep.subr.bf16.mxu0 0
  %302 = vmatpush2.bf16.msra.mxu0 0
  %303 = vmatprep.subr.bf16.mxu0 0
  %304 = vmatpush2.bf16.msra.mxu0 0
  %305 = vmatprep.subr.bf16.mxu0 0
  %306 = vmatpush2.bf16.msra.mxu0 0
  %307 = vmatprep.mubr.bf16.mxu0 0
  %308 = vmatmul.mubr.bf16.gmra.mxu0 %v203
  %v309 = vpop.f32.mrf.mxu0
  %v310 = vadd.f32 %v225, %v309
  %v311 = vpop.f32.mrf.mxu0
  %v312 = vpop.f32.mrf.mxu0
  %v313 = vpop.f32.mrf.mxu0
  %314 = vdwg.mxu0
  %v315 = vadd.f32 %v310, %v27
  %v316 = vld [vmem:[%s6 + $0xb] sm:$0x1]
  %v317 = vld [vmem:[%s6 + $0xc] sm:$0x1]
  %vm318 = vcmask 254976
  %v319 = vsel %vm318, %v315, 0.0
  %320 = vadd.xlane.f32.xlu0 %v319
  %v321 = vpop.xlane.xlu0 %320
  %v322 = vrcp.pop 32.0
  %v323 = vmul.f32 %v321, %v322
  %v324 = vsub.f32 %v315, %v323
  %v325 = vmul.f32 %v324, %v324
  %v326 = vsel %vm318, %v325, 0.0
  %327 = vadd.xlane.f32.xlu0 %v326
  %v328 = vpop.xlane.xlu0 %327
  %v329 = vmul.f32 %v328, %v322
  %v330 = vadd.f32 %v329, 1e-05
  %v331 = vrsqrt.pop %v330
  %v332 = vmul.f32 %v324, %v331
  %v334 = vlaneseq
  %v335 = vshrl.u32 %v334, 7
  %v336 = vsub.s32 0, %v335
  %v337 = vrot.slane %v316, %v336
  %v339 = vmul.f32 %v332, %v337
  %v341 = vlaneseq
  %v342 = vshrl.u32 %v341, 7
  %v343 = vsub.s32 0, %v342
  %v344 = vrot.slane %v317, %v343
  %v346 = vadd.f32 %v339, %v344
  %v347 = vpack.c.bf16 %v112, %v111
  %v348 = vpack.c.bf16 %v114, %v113
  %v349 = vld [vmem:[%s5] sm:$0xf]
  %v350 = vld [vmem:[%s6] sm:$0x1]
  %v352 = vlaneseq
  %v353 = vshrl.u32 %v352, 7
  %v354 = vsub.s32 0, %v353
  %v355 = vrot.slane %v350, %v354
  %vm357 = vcmask 64512
  %v359 = vsel %vm357, %v347, 0
  %v362 = vsel %vm357, %v348, 0
  %vm364 = vcmask 1043456
  %v366 = vsel %vm364, %v349, 0
  %368 = vmatprep.subr.bf16.mxu0 0
  %369 = vmatpush1.bf16.msra.mxu0 0
  %370 = vmatprep.subr.bf16.mxu0 0
  %371 = vmatpush1.bf16.msra.mxu0 0
  %372 = vmatprep.subr.bf16.mxu0 0
  %373 = vmatpush1.bf16.msra.mxu0 0
  %374 = vmatprep.subr.bf16.mxu0 0
  %375 = vmatpush1.bf16.msra.mxu0 0
  %376 = vmatprep.subr.bf16.mxu0 0
  %377 = vmatpush1.bf16.msra.mxu0 0
  %378 = vmatprep.subr.bf16.mxu0 0
  %379 = vmatpush1.bf16.msra.mxu0 0
  %380 = vmatprep.subr.bf16.mxu0 0
  %381 = vmatpush1.bf16.msra.mxu0 0
  %382 = vmatprep.subr.bf16.mxu0 0
  %383 = vmatpush1.bf16.msra.mxu0 %v366
  %384 = vmatprep.subr.bf16.mxu0 0
  %385 = vmatpush2.bf16.msra.mxu0 0
  %386 = vmatprep.subr.bf16.mxu0 0
  %387 = vmatpush2.bf16.msra.mxu0 0
  %388 = vmatprep.subr.bf16.mxu0 0
  %389 = vmatpush2.bf16.msra.mxu0 0
  %390 = vmatprep.subr.bf16.mxu0 0
  %391 = vmatpush2.bf16.msra.mxu0 0
  %392 = vmatprep.subr.bf16.mxu0 0
  %393 = vmatpush2.bf16.msra.mxu0 0
  %394 = vmatprep.subr.bf16.mxu0 0
  %395 = vmatpush2.bf16.msra.mxu0 0
  %396 = vmatprep.subr.bf16.mxu0 0
  %397 = vmatpush2.bf16.msra.mxu0 0
  %398 = vmatprep.subr.bf16.mxu0 0
  %399 = vmatpush2.bf16.msra.mxu0 0
  %400 = vmatprep.mubr.bf16.mxu0 0
  %401 = vmatmul.mubr.bf16.gmra.mxu0 %v359
  %v402 = vpop.f32.mrf.mxu0
  %v403 = vadd.f32 %v355, %v402
  %v404 = vpop.f32.mrf.mxu0
  %v405 = vpop.f32.mrf.mxu0
  %v406 = vadd.f32 %v355, %v405
  %v407 = vpop.f32.mrf.mxu0
  %408 = vmatprep.mubr.bf16.mxu0 0
  %409 = vmatmul.mubr.bf16.gmra.mxu0 %v362
  %v410 = vpop.f32.mrf.mxu0
  %v411 = vadd.f32 %v355, %v410
  %v412 = vpop.f32.mrf.mxu0
  %v413 = vpop.f32.mrf.mxu0
  %v414 = vadd.f32 %v355, %v413
  %v415 = vpop.f32.mrf.mxu0
  %416 = vdwg.mxu0
  %v417 = vld [vmem:[%s6 + $0x1] sm:$0x1]
  %v418 = vld [vmem:[%s6 + $0x2] sm:$0x1]
  %v419 = vsel %vm144, %v403, 0.0
  %420 = vadd.xlane.f32.xlu0 %v419
  %v421 = vpop.xlane.xlu0 %420
  %v422 = vsel %vm144, %v406, 0.0
  %423 = vadd.xlane.f32.xlu0 %v422
  %v424 = vpop.xlane.xlu0 %423
  %v425 = vsel %vm144, %v411, 0.0
  %426 = vadd.xlane.f32.xlu0 %v425
  %v427 = vpop.xlane.xlu0 %426
  %v428 = vsel %vm144, %v414, 0.0
  %429 = vadd.xlane.f32.xlu0 %v428
  %v430 = vpop.xlane.xlu0 %429
  %v431 = vmul.f32 %v421, %v322
  %v432 = vmul.f32 %v424, %v322
  %v433 = vmul.f32 %v427, %v322
  %v434 = vmul.f32 %v430, %v322
  %v435 = vsub.f32 %v403, %v431
  %v436 = vsub.f32 %v406, %v432
  %v437 = vsub.f32 %v411, %v433
  %v438 = vsub.f32 %v414, %v434
  %v439 = vmul.f32 %v435, %v435
  %v440 = vmul.f32 %v436, %v436
  %v441 = vmul.f32 %v437, %v437
  %v442 = vmul.f32 %v438, %v438
  %v443 = vsel %vm144, %v439, 0.0
  %444 = vadd.xlane.f32.xlu0 %v443
  %v445 = vpop.xlane.xlu0 %444
  %v446 = vsel %vm144, %v440, 0.0
  %447 = vadd.xlane.f32.xlu0 %v446
  %v448 = vpop.xlane.xlu0 %447
  %v449 = vsel %vm144, %v441, 0.0
  %450 = vadd.xlane.f32.xlu0 %v449
  %v451 = vpop.xlane.xlu0 %450
  %v452 = vsel %vm144, %v442, 0.0
  %453 = vadd.xlane.f32.xlu0 %v452
  %v454 = vpop.xlane.xlu0 %453
  %v455 = vmul.f32 %v445, %v322
  %v456 = vmul.f32 %v448, %v322
  %v457 = vmul.f32 %v451, %v322
  %v458 = vmul.f32 %v454, %v322
  %v459 = vadd.f32 %v455, 1e-05
  %v460 = vadd.f32 %v456, 1e-05
  %v461 = vadd.f32 %v457, 1e-05
  %v462 = vadd.f32 %v458, 1e-05
  %v463 = vrsqrt.pop %v459
  %v464 = vrsqrt.pop %v460
  %v465 = vrsqrt.pop %v461
  %v466 = vrsqrt.pop %v462
  %v467 = vmul.f32 %v435, %v463
  %v468 = vmul.f32 %v436, %v464
  %v469 = vmul.f32 %v437, %v465
  %v470 = vmul.f32 %v438, %v466
  %v472 = vlaneseq
  %v473 = vshrl.u32 %v472, 7
  %v474 = vsub.s32 0, %v473
  %v475 = vrot.slane %v417, %v474
  %v477 = vmul.f32 %v467, %v475
  %v478 = vmul.f32 %v468, %v475
  %v479 = vmul.f32 %v469, %v475
  %v480 = vmul.f32 %v470, %v475
  %v482 = vlaneseq
  %v483 = vshrl.u32 %v482, 7
  %v484 = vsub.s32 0, %v483
  %v485 = vrot.slane %v418, %v484
  %v487 = vadd.f32 %v477, %v485
  %v488 = vadd.f32 %v478, %v485
  %v489 = vadd.f32 %v479, %v485
  %v490 = vadd.f32 %v480, %v485
  %v491 = vxor.u32 %v487, 2147483648
  %v492 = vxor.u32 %v488, 2147483648
  %v493 = vxor.u32 %v489, 2147483648
  %v494 = vxor.u32 %v490, 2147483648
  %v495 = vmul.f32 %v491, 1.442695
  %v496 = vpow.pop %v495
  %v497 = vmul.f32 %v492, 1.442695
  %v498 = vpow.pop %v497
  %v499 = vmul.f32 %v493, 1.442695
  %v500 = vpow.pop %v499
  %v501 = vmul.f32 %v494, 1.442695
  %v502 = vpow.pop %v501
  %v503 = vadd.f32 %v496, 1.0
  %v504 = vadd.f32 %v498, 1.0
  %v505 = vadd.f32 %v500, 1.0
  %v506 = vadd.f32 %v502, 1.0
  %v507 = vrcp.pop %v503
  %v508 = vmul.f32 1.0, %v507
  %v509 = vrcp.pop %v504
  %v510 = vmul.f32 1.0, %v509
  %v511 = vrcp.pop %v505
  %v512 = vmul.f32 1.0, %v511
  %v513 = vrcp.pop %v506
  %v514 = vmul.f32 1.0, %v513
  %v515 = vmul.f32 %v487, %v508
  %v516 = vmul.f32 %v488, %v510
  %v517 = vmul.f32 %v489, %v512
  %v518 = vmul.f32 %v490, %v514
  %v519 = vld [vmem:[%s4] sm:$0xff]
  %v520 = vld [vmem:[%s4 + $0x8] sm:$0xff]
  %v521 = vld [vmem:[%s4 + $0x10] sm:$0xff]
  %v522 = vld [vmem:[%s4 + $0x18] sm:$0xff]
  %v523 = vpack.c.bf16 %v520, %v519
  %v524 = vpack.c.bf16 %v522, %v521
  %v525 = vld [vmem:[%s5 + $0x8] sm:$0xf]
  %v526 = vld [vmem:[%s5 + $0xc] sm:$0xf]
  %v527 = vld [vmem:[%s6 + $0x3] sm:$0x1]
  %v529 = vlaneseq
  %v530 = vshrl.u32 %v529, 7
  %v531 = vsub.s32 0, %v530
  %v532 = vrot.slane %v527, %v531
  %v536 = vunpack.c.l.b16 %v525
  %v537 = vunpack.c.l.b16 %v526
  %v538 = vpack.c.b16 %v537, %v536
  %vm540 = vcmask 130048
  %v542 = vsel %vm540, %v523, 0
  %v545 = vsel %vm540, %v524, 0
  %547 = vmatprep.subr.bf16.mxu0 0
  %548 = vmatpush1.bf16.msra.mxu0 0
  %549 = vmatprep.subr.bf16.mxu0 0
  %550 = vmatpush1.bf16.msra.mxu0 0
  %551 = vmatprep.subr.bf16.mxu0 0
  %552 = vmatpush1.bf16.msra.mxu0 0
  %553 = vmatprep.subr.bf16.mxu0 0
  %554 = vmatpush1.bf16.msra.mxu0 0
  %555 = vmatprep.subr.bf16.mxu0 0
  %556 = vmatpush1.bf16.msra.mxu0 0
  %557 = vmatprep.subr.bf16.mxu0 0
  %558 = vmatpush1.bf16.msra.mxu0 0
  %559 = vmatprep.subr.bf16.mxu0 0
  %560 = vmatpush1.bf16.msra.mxu0 0
  %561 = vmatprep.subr.bf16.mxu0 0
  %562 = vmatpush1.bf16.msra.mxu0 %v538
  %563 = vmatprep.subr.bf16.mxu0 0
  %564 = vmatpush2.bf16.msra.mxu0 0
  %565 = vmatprep.subr.bf16.mxu0 0
  %566 = vmatpush2.bf16.msra.mxu0 0
  %567 = vmatprep.subr.bf16.mxu0 0
  %568 = vmatpush2.bf16.msra.mxu0 0
  %569 = vmatprep.subr.bf16.mxu0 0
  %570 = vmatpush2.bf16.msra.mxu0 0
  %571 = vmatprep.subr.bf16.mxu0 0
  %572 = vmatpush2.bf16.msra.mxu0 0
  %573 = vmatprep.subr.bf16.mxu0 0
  %574 = vmatpush2.bf16.msra.mxu0 0
  %575 = vmatprep.subr.bf16.mxu0 0
  %576 = vmatpush2.bf16.msra.mxu0 0
  %577 = vmatprep.subr.bf16.mxu0 0
  %578 = vmatpush2.bf16.msra.mxu0 0
  %579 = vmatprep.mubr.bf16.mxu0 0
  %580 = vmatmul.mubr.bf16.gmra.mxu0 %v542
  %v581 = vpop.f32.mrf.mxu0
  %v582 = vadd.f32 %v532, %v581
  %v583 = vpop.f32.mrf.mxu0
  %v584 = vpop.f32.mrf.mxu0
  %v585 = vadd.f32 %v532, %v584
  %v586 = vpop.f32.mrf.mxu0
  %587 = vmatprep.mubr.bf16.mxu0 0
  %588 = vmatmul.mubr.bf16.gmra.mxu0 %v545
  %v589 = vpop.f32.mrf.mxu0
  %v590 = vadd.f32 %v532, %v589
  %v591 = vpop.f32.mrf.mxu0
  %v592 = vpop.f32.mrf.mxu0
  %v593 = vadd.f32 %v532, %v592
  %v594 = vpop.f32.mrf.mxu0
  %595 = vdwg.mxu0
  %v596 = vpack.c.bf16 %v585, %v582
  %v597 = vpack.c.bf16 %v593, %v590
  %v598 = vld [vmem:[%s5 + $0x10] sm:$0xf]
  %v599 = vld [vmem:[%s5 + $0x14] sm:$0xf]
  %v600 = vld [vmem:[%s5 + $0x18] sm:$0xf]
  %v601 = vld [vmem:[%s5 + $0x1c] sm:$0xf]
  %v602 = vld [vmem:[%s6 + $0x4] sm:$0x1]
  %v604 = vlaneseq
  %v605 = vshrl.u32 %v604, 7
  %v606 = vsub.s32 0, %v605
  %v607 = vrot.slane %v602, %v606
  %v613 = vunpack.c.l.b16 %v598
  %v614 = vunpack.c.l.b16 %v599
  %v615 = vunpack.c.l.b16 %v600
  %v616 = vunpack.c.l.b16 %v601
  %v617 = vpack.c.b16 %v614, %v613
  %v618 = vpack.c.b16 %v616, %v615
  %v622 = vsel %vm144, %v596, 0
  %v625 = vsel %vm144, %v597, 0
  %627 = vmatprep.subr.bf16.mxu0 0
  %628 = vmatpush1.bf16.msra.mxu0 0
  %629 = vmatprep.subr.bf16.mxu0 0
  %630 = vmatpush1.bf16.msra.mxu0 0
  %631 = vmatprep.subr.bf16.mxu0 0
  %632 = vmatpush1.bf16.msra.mxu0 0
  %633 = vmatprep.subr.bf16.mxu0 0
  %634 = vmatpush1.bf16.msra.mxu0 0
  %635 = vmatprep.subr.bf16.mxu0 0
  %636 = vmatpush1.bf16.msra.mxu0 0
  %637 = vmatprep.subr.bf16.mxu0 0
  %638 = vmatpush1.bf16.msra.mxu0 0
  %639 = vmatprep.subr.bf16.mxu0 0
  %640 = vmatpush1.bf16.msra.mxu0 %v618
  %641 = vmatprep.subr.bf16.mxu0 0
  %642 = vmatpush1.bf16.msra.mxu0 %v617
  %643 = vmatprep.subr.bf16.mxu0 0
  %644 = vmatpush2.bf16.msra.mxu0 0
  %645 = vmatprep.subr.bf16.mxu0 0
  %646 = vmatpush2.bf16.msra.mxu0 0
  %647 = vmatprep.subr.bf16.mxu0 0
  %648 = vmatpush2.bf16.msra.mxu0 0
  %649 = vmatprep.subr.bf16.mxu0 0
  %650 = vmatpush2.bf16.msra.mxu0 0
  %651 = vmatprep.subr.bf16.mxu0 0
  %652 = vmatpush2.bf16.msra.mxu0 0
  %653 = vmatprep.subr.bf16.mxu0 0
  %654 = vmatpush2.bf16.msra.mxu0 0
  %655 = vmatprep.subr.bf16.mxu0 0
  %656 = vmatpush2.bf16.msra.mxu0 0
  %657 = vmatprep.subr.bf16.mxu0 0
  %658 = vmatpush2.bf16.msra.mxu0 0
  %659 = vmatprep.mubr.bf16.mxu0 0
  %660 = vmatmul.mubr.bf16.gmra.mxu0 %v622
  %v661 = vpop.f32.mrf.mxu0
  %v662 = vadd.f32 %v607, %v661
  %v663 = vpop.f32.mrf.mxu0
  %v664 = vpop.f32.mrf.mxu0
  %v665 = vadd.f32 %v607, %v664
  %v666 = vpop.f32.mrf.mxu0
  %667 = vmatprep.mubr.bf16.mxu0 0
  %668 = vmatmul.mubr.bf16.gmra.mxu0 %v625
  %v669 = vpop.f32.mrf.mxu0
  %v670 = vadd.f32 %v607, %v669
  %v671 = vpop.f32.mrf.mxu0
  %v672 = vpop.f32.mrf.mxu0
  %v673 = vadd.f32 %v607, %v672
  %v674 = vpop.f32.mrf.mxu0
  %675 = vdwg.mxu0
  %v676 = vxor.u32 %v662, 2147483648
  %v677 = vxor.u32 %v665, 2147483648
  %v678 = vxor.u32 %v670, 2147483648
  %v679 = vxor.u32 %v673, 2147483648
  %v680 = vmul.f32 %v676, 1.442695
  %v681 = vpow.pop %v680
  %v682 = vmul.f32 %v677, 1.442695
  %v683 = vpow.pop %v682
  %v684 = vmul.f32 %v678, 1.442695
  %v685 = vpow.pop %v684
  %v686 = vmul.f32 %v679, 1.442695
  %v687 = vpow.pop %v686
  %v688 = vadd.f32 %v681, 1.0
  %v689 = vadd.f32 %v683, 1.0
  %v690 = vadd.f32 %v685, 1.0
  %v691 = vadd.f32 %v687, 1.0
  %v692 = vrcp.pop %v688
  %v693 = vmul.f32 1.0, %v692
  %v694 = vrcp.pop %v689
  %v695 = vmul.f32 1.0, %v694
  %v696 = vrcp.pop %v690
  %v697 = vmul.f32 1.0, %v696
  %v698 = vrcp.pop %v691
  %v699 = vmul.f32 1.0, %v698
  %v700 = vmul.f32 %v662, %v693
  %v701 = vmul.f32 %v665, %v695
  %v702 = vmul.f32 %v670, %v697
  %v703 = vmul.f32 %v673, %v699
  %v704 = vpack.c.bf16 %v701, %v700
  %v705 = vpack.c.bf16 %v703, %v702
  %v706 = vld [vmem:[%s5 + $0x20] sm:$0xf]
  %v707 = vld [vmem:[%s5 + $0x24] sm:$0xf]
  %v708 = vld [vmem:[%s5 + $0x28] sm:$0xf]
  %v709 = vld [vmem:[%s5 + $0x2c] sm:$0xf]
  %v710 = vld [vmem:[%s5 + $0x30] sm:$0xf]
  %v711 = vld [vmem:[%s5 + $0x34] sm:$0xf]
  %v712 = vld [vmem:[%s5 + $0x38] sm:$0xf]
  %v713 = vld [vmem:[%s5 + $0x3c] sm:$0xf]
  %v714 = vld [vmem:[%s5 + $0x40] sm:$0xf]
  %v715 = vld [vmem:[%s5 + $0x44] sm:$0xf]
  %v716 = vld [vmem:[%s5 + $0x48] sm:$0xf]
  %v717 = vld [vmem:[%s5 + $0x4c] sm:$0xf]
  %v718 = vld [vmem:[%s5 + $0x50] sm:$0xf]
  %v719 = vld [vmem:[%s5 + $0x54] sm:$0xf]
  %v720 = vld [vmem:[%s5 + $0x58] sm:$0xf]
  %v721 = vld [vmem:[%s5 + $0x5c] sm:$0xf]
  %v722 = vld [vmem:[%s6 + $0x5] sm:$0x1]
  %v724 = vlaneseq
  %v725 = vshrl.u32 %v724, 7
  %v726 = vsub.s32 0, %v725
  %v727 = vrot.slane %v722, %v726
  %v745 = vunpack.c.l.b16 %v706
  %v746 = vunpack.c.l.b16 %v707
  %v747 = vunpack.c.l.b16 %v708
  %v748 = vunpack.c.l.b16 %v709
  %v749 = vunpack.c.l.b16 %v710
  %v750 = vunpack.c.l.b16 %v711
  %v751 = vunpack.c.l.b16 %v712
  %v752 = vunpack.c.l.b16 %v713
  %v753 = vunpack.c.l.b16 %v714
  %v754 = vunpack.c.l.b16 %v715
  %v755 = vunpack.c.l.b16 %v716
  %v756 = vunpack.c.l.b16 %v717
  %v757 = vunpack.c.l.b16 %v718
  %v758 = vunpack.c.l.b16 %v719
  %v759 = vunpack.c.l.b16 %v720
  %v760 = vunpack.c.l.b16 %v721
  %v761 = vpack.c.b16 %v746, %v745
  %v762 = vpack.c.b16 %v748, %v747
  %v763 = vpack.c.b16 %v750, %v749
  %v764 = vpack.c.b16 %v752, %v751
  %v765 = vpack.c.b16 %v754, %v753
  %v766 = vpack.c.b16 %v756, %v755
  %v767 = vpack.c.b16 %v758, %v757
  %v768 = vpack.c.b16 %v760, %v759
  %777 = vmatprep.subr.bf16.mxu0 0
  %778 = vmatpush1.bf16.msra.mxu0 %v768
  %779 = vmatprep.subr.bf16.mxu0 0
  %780 = vmatpush1.bf16.msra.mxu0 %v767
  %781 = vmatprep.subr.bf16.mxu0 0
  %782 = vmatpush1.bf16.msra.mxu0 %v766
  %783 = vmatprep.subr.bf16.mxu0 0
  %784 = vmatpush1.bf16.msra.mxu0 %v765
  %785 = vmatprep.subr.bf16.mxu0 0
  %786 = vmatpush1.bf16.msra.mxu0 %v764
  %787 = vmatprep.subr.bf16.mxu0 0
  %788 = vmatpush1.bf16.msra.mxu0 %v763
  %789 = vmatprep.subr.bf16.mxu0 0
  %790 = vmatpush1.bf16.msra.mxu0 %v762
  %791 = vmatprep.subr.bf16.mxu0 0
  %792 = vmatpush1.bf16.msra.mxu0 %v761
  %793 = vmatprep.subr.bf16.mxu0 0
  %794 = vmatpush2.bf16.msra.mxu0 0
  %795 = vmatprep.subr.bf16.mxu0 0
  %796 = vmatpush2.bf16.msra.mxu0 0
  %797 = vmatprep.subr.bf16.mxu0 0
  %798 = vmatpush2.bf16.msra.mxu0 0
  %799 = vmatprep.subr.bf16.mxu0 0
  %800 = vmatpush2.bf16.msra.mxu0 0
  %801 = vmatprep.subr.bf16.mxu0 0
  %802 = vmatpush2.bf16.msra.mxu0 0
  %803 = vmatprep.subr.bf16.mxu0 0
  %804 = vmatpush2.bf16.msra.mxu0 0
  %805 = vmatprep.subr.bf16.mxu0 0
  %806 = vmatpush2.bf16.msra.mxu0 0
  %807 = vmatprep.subr.bf16.mxu0 0
  %808 = vmatpush2.bf16.msra.mxu0 0
  %809 = vmatprep.mubr.bf16.mxu0 0
  %810 = vmatmul.mubr.bf16.gmra.mxu0 %v704
  %v811 = vpop.f32.mrf.mxu0
  %v812 = vadd.f32 %v727, %v811
  %v813 = vpop.f32.mrf.mxu0
  %v814 = vpop.f32.mrf.mxu0
  %v815 = vadd.f32 %v727, %v814
  %v816 = vpop.f32.mrf.mxu0
  %817 = vmatprep.mubr.bf16.mxu0 0
  %818 = vmatmul.mubr.bf16.gmra.mxu0 %v705
  %v819 = vpop.f32.mrf.mxu0
  %v820 = vadd.f32 %v727, %v819
  %v821 = vpop.f32.mrf.mxu0
  %v822 = vpop.f32.mrf.mxu0
  %v823 = vadd.f32 %v727, %v822
  %v824 = vpop.f32.mrf.mxu0
  %825 = vdwg.mxu0
  %v826 = vadd.f32 %v812, %v582
  %v827 = vadd.f32 %v815, %v585
  %v828 = vadd.f32 %v820, %v590
  %v829 = vadd.f32 %v823, %v593
  %v830 = vld [vmem:[%s6 + $0x6] sm:$0x1]
  %v831 = vld [vmem:[%s6 + $0x7] sm:$0x1]
  %v832 = vsel %vm144, %v826, 0.0
  %833 = vadd.xlane.f32.xlu0 %v832
  %v834 = vpop.xlane.xlu0 %833
  %v835 = vsel %vm144, %v827, 0.0
  %836 = vadd.xlane.f32.xlu0 %v835
  %v837 = vpop.xlane.xlu0 %836
  %v838 = vsel %vm144, %v828, 0.0
  %839 = vadd.xlane.f32.xlu0 %v838
  %v840 = vpop.xlane.xlu0 %839
  %v841 = vsel %vm144, %v829, 0.0
  %842 = vadd.xlane.f32.xlu0 %v841
  %v843 = vpop.xlane.xlu0 %842
  %v844 = vmul.f32 %v834, %v322
  %v845 = vmul.f32 %v837, %v322
  %v846 = vmul.f32 %v840, %v322
  %v847 = vmul.f32 %v843, %v322
  %v848 = vsub.f32 %v826, %v844
  %v849 = vsub.f32 %v827, %v845
  %v850 = vsub.f32 %v828, %v846
  %v851 = vsub.f32 %v829, %v847
  %v852 = vmul.f32 %v848, %v848
  %v853 = vmul.f32 %v849, %v849
  %v854 = vmul.f32 %v850, %v850
  %v855 = vmul.f32 %v851, %v851
  %v856 = vsel %vm144, %v852, 0.0
  %857 = vadd.xlane.f32.xlu0 %v856
  %v858 = vpop.xlane.xlu0 %857
  %v859 = vsel %vm144, %v853, 0.0
  %860 = vadd.xlane.f32.xlu0 %v859
  %v861 = vpop.xlane.xlu0 %860
  %v862 = vsel %vm144, %v854, 0.0
  %863 = vadd.xlane.f32.xlu0 %v862
  %v864 = vpop.xlane.xlu0 %863
  %v865 = vsel %vm144, %v855, 0.0
  %866 = vadd.xlane.f32.xlu0 %v865
  %v867 = vpop.xlane.xlu0 %866
  %v868 = vmul.f32 %v858, %v322
  %v869 = vmul.f32 %v861, %v322
  %v870 = vmul.f32 %v864, %v322
  %v871 = vmul.f32 %v867, %v322
  %v872 = vadd.f32 %v868, 1e-05
  %v873 = vadd.f32 %v869, 1e-05
  %v874 = vadd.f32 %v870, 1e-05
  %v875 = vadd.f32 %v871, 1e-05
  %v876 = vrsqrt.pop %v872
  %v877 = vrsqrt.pop %v873
  %v878 = vrsqrt.pop %v874
  %v879 = vrsqrt.pop %v875
  %v880 = vmul.f32 %v848, %v876
  %v881 = vmul.f32 %v849, %v877
  %v882 = vmul.f32 %v850, %v878
  %v883 = vmul.f32 %v851, %v879
  %v885 = vlaneseq
  %v886 = vshrl.u32 %v885, 7
  %v887 = vsub.s32 0, %v886
  %v888 = vrot.slane %v830, %v887
  %v890 = vmul.f32 %v880, %v888
  %v891 = vmul.f32 %v881, %v888
  %v892 = vmul.f32 %v882, %v888
  %v893 = vmul.f32 %v883, %v888
  %v895 = vlaneseq
  %v896 = vshrl.u32 %v895, 7
  %v897 = vsub.s32 0, %v896
  %v898 = vrot.slane %v831, %v897
  %v900 = vadd.f32 %v890, %v898
  %v901 = vadd.f32 %v891, %v898
  %v902 = vadd.f32 %v892, %v898
  %v903 = vadd.f32 %v893, %v898
  %v904 = vpack.c.bf16 %v901, %v900
  %v905 = vpack.c.bf16 %v903, %v902
  %v906 = vld [vmem:[%s5 + $0xb0] sm:$0xf]
  %v907 = vld [vmem:[%s5 + $0xb4] sm:$0xf]
  %v908 = vld [vmem:[%s5 + $0xb8] sm:$0xf]
  %v909 = vld [vmem:[%s5 + $0xbc] sm:$0xf]
  %v914 = vunpack.c.l.b16 %v906
  %v915 = vunpack.c.l.b16 %v907
  %v916 = vunpack.c.l.b16 %v908
  %v917 = vunpack.c.l.b16 %v909
  %v918 = vpack.c.b16 %v915, %v914
  %v919 = vpack.c.b16 %v917, %v916
  %v923 = vsel %vm144, %v904, 0
  %v926 = vsel %vm144, %v905, 0
  %928 = vmatprep.subr.bf16.mxu0 0
  %929 = vmatpush1.bf16.msra.mxu0 0
  %930 = vmatprep.subr.bf16.mxu0 0
  %931 = vmatpush1.bf16.msra.mxu0 0
  %932 = vmatprep.subr.bf16.mxu0 0
  %933 = vmatpush1.bf16.msra.mxu0 0
  %934 = vmatprep.subr.bf16.mxu0 0
  %935 = vmatpush1.bf16.msra.mxu0 0
  %936 = vmatprep.subr.bf16.mxu0 0
  %937 = vmatpush1.bf16.msra.mxu0 0
  %938 = vmatprep.subr.bf16.mxu0 0
  %939 = vmatpush1.bf16.msra.mxu0 0
  %940 = vmatprep.subr.bf16.mxu0 0
  %941 = vmatpush1.bf16.msra.mxu0 %v919
  %942 = vmatprep.subr.bf16.mxu0 0
  %943 = vmatpush1.bf16.msra.mxu0 %v918
  %944 = vmatprep.subr.bf16.mxu0 0
  %945 = vmatpush2.bf16.msra.mxu0 0
  %946 = vmatprep.subr.bf16.mxu0 0
  %947 = vmatpush2.bf16.msra.mxu0 0
  %948 = vmatprep.subr.bf16.mxu0 0
  %949 = vmatpush2.bf16.msra.mxu0 0
  %950 = vmatprep.subr.bf16.mxu0 0
  %951 = vmatpush2.bf16.msra.mxu0 0
  %952 = vmatprep.subr.bf16.mxu0 0
  %953 = vmatpush2.bf16.msra.mxu0 0
  %954 = vmatprep.subr.bf16.mxu0 0
  %955 = vmatpush2.bf16.msra.mxu0 0
  %956 = vmatprep.subr.bf16.mxu0 0
  %957 = vmatpush2.bf16.msra.mxu0 0
  %958 = vmatprep.subr.bf16.mxu0 0
  %959 = vmatpush2.bf16.msra.mxu0 0
  %960 = vmatprep.mubr.bf16.mxu0 0
  %961 = vmatmul.mubr.bf16.gmra.mxu0 %v923
  %v962 = vpop.f32.mrf.mxu0
  %v963 = vadd.f32 0.0, %v962
  %v964 = vpop.f32.mrf.mxu0
  %v965 = vpop.f32.mrf.mxu0
  %v966 = vadd.f32 0.0, %v965
  %v967 = vpop.f32.mrf.mxu0
  %968 = vmatprep.mubr.bf16.mxu0 0
  %969 = vmatmul.mubr.bf16.gmra.mxu0 %v926
  %v970 = vpop.f32.mrf.mxu0
  %v971 = vadd.f32 0.0, %v970
  %v972 = vpop.f32.mrf.mxu0
  %v973 = vpop.f32.mrf.mxu0
  %v974 = vadd.f32 0.0, %v973
  %v975 = vpop.f32.mrf.mxu0
  %976 = vdwg.mxu0
  %v977 = vpack.c.bf16 %v346, %v346
  %v978 = vld [vmem:[%s5 + $0x120] sm:$0xf]
  %v979 = vld [vmem:[%s5 + $0x124] sm:$0xf]
  %v980 = vld [vmem:[%s5 + $0x128] sm:$0xf]
  %v981 = vld [vmem:[%s5 + $0x12c] sm:$0xf]
  %v982 = vld [vmem:[%s6 + $0xe] sm:$0x1]
  %v984 = vlaneseq
  %v985 = vshrl.u32 %v984, 7
  %v986 = vsub.s32 0, %v985
  %v987 = vrot.slane %v982, %v986
  %v993 = vunpack.c.l.b16 %v978
  %v994 = vunpack.c.l.b16 %v979
  %v995 = vunpack.c.l.b16 %v980
  %v996 = vunpack.c.l.b16 %v981
  %v997 = vpack.c.b16 %v994, %v993
  %v998 = vpack.c.b16 %v996, %v995
  %v1002 = vsel %vm144, %v977, 0
  %1004 = vmatprep.subr.bf16.mxu0 0
  %1005 = vmatpush1.bf16.msra.mxu0 0
  %1006 = vmatprep.subr.bf16.mxu0 0
  %1007 = vmatpush1.bf16.msra.mxu0 0
  %1008 = vmatprep.subr.bf16.mxu0 0
  %1009 = vmatpush1.bf16.msra.mxu0 0
  %1010 = vmatprep.subr.bf16.mxu0 0
  %1011 = vmatpush1.bf16.msra.mxu0 0
  %1012 = vmatprep.subr.bf16.mxu0 0
  %1013 = vmatpush1.bf16.msra.mxu0 0
  %1014 = vmatprep.subr.bf16.mxu0 0
  %1015 = vmatpush1.bf16.msra.mxu0 0
  %1016 = vmatprep.subr.bf16.mxu0 0
  %1017 = vmatpush1.bf16.msra.mxu0 %v998
  %1018 = vmatprep.subr.bf16.mxu0 0
  %1019 = vmatpush1.bf16.msra.mxu0 %v997
  %1020 = vmatprep.subr.bf16.mxu0 0
  %1021 = vmatpush2.bf16.msra.mxu0 0
  %1022 = vmatprep.subr.bf16.mxu0 0
  %1023 = vmatpush2.bf16.msra.mxu0 0
  %1024 = vmatprep.subr.bf16.mxu0 0
  %1025 = vmatpush2.bf16.msra.mxu0 0
  %1026 = vmatprep.subr.bf16.mxu0 0
  %1027 = vmatpush2.bf16.msra.mxu0 0
  %1028 = vmatprep.subr.bf16.mxu0 0
  %1029 = vmatpush2.bf16.msra.mxu0 0
  %1030 = vmatprep.subr.bf16.mxu0 0
  %1031 = vmatpush2.bf16.msra.mxu0 0
  %1032 = vmatprep.subr.bf16.mxu0 0
  %1033 = vmatpush2.bf16.msra.mxu0 0
  %1034 = vmatprep.subr.bf16.mxu0 0
  %1035 = vmatpush2.bf16.msra.mxu0 0
  %1036 = vmatprep.mubr.bf16.mxu0 0
  %1037 = vmatmul.mubr.bf16.gmra.mxu0 %v1002
  %v1038 = vpop.f32.mrf.mxu0
  %v1039 = vadd.f32 %v987, %v1038
  %v1040 = vpop.f32.mrf.mxu0
  %v1041 = vpop.f32.mrf.mxu0
  %v1042 = vpop.f32.mrf.mxu0
  %1043 = vdwg.mxu0
  %v1046 = vunpack.c.l.s4 1966171168
  %v1047 = vunpack.c.0.s8 %v1046
  %v1048 = vlaneseq
  %v1049 = vshrl.u32 %v1048, 7
  %v1050 = vsub.s32 %v1047, %v1049
  %v1051 = vrot.slane %v1039, %v1050
  %v1052 = vcombine.high %v1051, %v1051
  %v1054 = vunpack.c.l.s4 1966171168
  %v1055 = vunpack.c.0.s8 %v1054
  %v1056 = vlaneseq
  %v1057 = vshrl.u32 %v1056, 7
  %v1058 = vsub.s32 %v1055, %v1057
  %v1059 = vrot.slane %v1051, %v1058
  %v1061 = vunpack.c.l.s4 1966171168
  %v1062 = vunpack.c.0.s8 %v1061
  %v1063 = vlaneseq
  %v1064 = vshrl.u32 %v1063, 7
  %v1065 = vsub.s32 %v1062, %v1064
  %v1066 = vrot.slane %v1052, %v1065
  %v1067 = vlaneseq
  %v1068 = vshrl.u32 %v1067, 7
  %v1069 = vsub.s32 0, %v1068
  %v1070 = vrot.slane %v1059, %v1069
  %v1071 = vlaneseq
  %v1072 = vshrl.u32 %v1071, 7
  %v1073 = vsub.s32 0, %v1072
  %v1074 = vrot.slane %v1066, %v1073
  %v1077 = vld [vmem:[%s6 + $0xd] sm:$0x1]
  %v1078 = vadd.f32 %v515, %v1070
  %v1079 = vadd.f32 %v516, %v1070
  %v1080 = vadd.f32 %v517, %v1074
  %v1081 = vadd.f32 %v518, %v1074
  %vm1082 = vcmp.ge.s32.totalorder %v63, 2
  %vm1083 = vcmp.ge.s32.totalorder %v64, 2
  %v1084 = vrot.slane %v1078, 6
  %v1085 = vrot.slane %v1079, 6
  %v1086 = vrot.slane %v1080, 6
  %v1087 = vrot.slane %v1081, 6
  %vm1088 = vcmp.lt.s32.totalorder %v63, 2
  %v1089 = vsel %vm1088, %v1086, %v1087
  %v1090 = vsel %vm1088, %v1085, %v1086
  %v1091 = vsel %vm1088, %v1084, %v1085
  %v1092 = vsel %vm1088, %v1087, %v1084
  %v1093 = vsel %vm1082, 1, 0
  %v1094 = vsel %vm1083, 1, 0
  %vm1095 = vcmp.eq.s32.totalorder %v1093, 1
  %vm1096 = vcmp.eq.s32.totalorder %v1094, 1
  %v1097 = vsel %vm1095, %v1092, 0.0
  %v1098 = vsel %vm1096, %v1091, 0.0
  %v1099 = vsel %vm1095, %v1090, 0.0
  %v1100 = vsel %vm1096, %v1089, 0.0
  %vm1101 = vcmp.lt.s32.totalorder %v63, 14
  %vm1102 = vcmp.lt.s32.totalorder %v64, 14
  %v1103 = vrot.slane %v1078, 2
  %v1104 = vrot.slane %v1079, 2
  %v1105 = vrot.slane %v1080, 2
  %v1106 = vrot.slane %v1081, 2
  %vm1107 = vcmp.lt.s32.totalorder %v63, 6
  %v1108 = vsel %vm1107, %v1105, %v1106
  %v1109 = vsel %vm1107, %v1104, %v1105
  %v1110 = vsel %vm1107, %v1103, %v1104
  %v1111 = vsel %vm1107, %v1106, %v1103
  %v1112 = vsel %vm1101, 1, 0
  %v1113 = vsel %vm1102, 1, 0
  %vm1114 = vcmp.eq.s32.totalorder %v1112, 1
  %vm1115 = vcmp.eq.s32.totalorder %v1113, 1
  %v1116 = vsel %vm1114, %v1110, 0.0
  %v1117 = vsel %vm1115, %v1109, 0.0
  %v1118 = vsel %vm1114, %v1108, 0.0
  %v1119 = vsel %vm1115, %v1111, 0.0
  %1124 = vrot.lane.b32.xlu0 %v1078, 32
  %v1125 = vpop.permute.xlu0 %1124
  %1126 = vrot.lane.b32.xlu0 %v1079, 32
  %v1127 = vpop.permute.xlu0 %1126
  %1128 = vrot.lane.b32.xlu0 %v1080, 32
  %v1129 = vpop.permute.xlu0 %1128
  %1130 = vrot.lane.b32.xlu0 %v1081, 32
  %v1131 = vpop.permute.xlu0 %1130
  %1140 = vrot.lane.b32.xlu0 %v1116, 64
  %v1141 = vpop.permute.xlu0 %1140
  %1142 = vrot.lane.b32.xlu0 %v1117, 64
  %v1143 = vpop.permute.xlu0 %1142
  %1144 = vrot.lane.b32.xlu0 %v1118, 64
  %v1145 = vpop.permute.xlu0 %1144
  %1146 = vrot.lane.b32.xlu0 %v1119, 64
  %v1147 = vpop.permute.xlu0 %1146
  %v1152 = vsel %vm144, %v1097, %v1125
  %v1153 = vsel %vm144, %v1098, %v1127
  %v1154 = vsel %vm144, %v1099, %v1129
  %v1155 = vsel %vm144, %v1100, %v1131
  %vm1156 = vcmask 523264
  %v1157 = vsel %vm1156, %v1152, %v1141
  %v1158 = vsel %vm1156, %v1153, %v1143
  %v1159 = vsel %vm1156, %v1154, %v1145
  %v1160 = vsel %vm1156, %v1155, %v1147
  %v1161 = vpack.c.bf16 %v1158, %v1157
  %v1162 = vpack.c.bf16 %v1160, %v1159
  %v1163 = vld [vmem:[%s5 + $0xc0] sm:$0xf]
  %v1164 = vld [vmem:[%s5 + $0xc4] sm:$0xf]
  %v1165 = vld [vmem:[%s5 + $0xc8] sm:$0xf]
  %v1166 = vld [vmem:[%s5 + $0xcc] sm:$0xf]
  %v1167 = vld [vmem:[%s5 + $0xd0] sm:$0xf]
  %v1168 = vld [vmem:[%s5 + $0xd4] sm:$0xf]
  %v1169 = vld [vmem:[%s5 + $0xd8] sm:$0xf]
  %v1170 = vld [vmem:[%s5 + $0xdc] sm:$0xf]
  %v1171 = vld [vmem:[%s5 + $0xe0] sm:$0xf]
  %v1172 = vld [vmem:[%s5 + $0xe4] sm:$0xf]
  %v1173 = vld [vmem:[%s5 + $0xe8] sm:$0xf]
  %v1174 = vld [vmem:[%s5 + $0xec] sm:$0xf]
  %v1187 = vunpack.c.l.b16 %v1163
  %v1188 = vunpack.c.l.b16 %v1164
  %v1189 = vunpack.c.l.b16 %v1165
  %v1190 = vunpack.c.l.b16 %v1166
  %v1191 = vunpack.c.l.b16 %v1167
  %v1192 = vunpack.c.l.b16 %v1168
  %v1193 = vunpack.c.l.b16 %v1169
  %v1194 = vunpack.c.l.b16 %v1170
  %v1195 = vunpack.c.l.b16 %v1171
  %v1196 = vunpack.c.l.b16 %v1172
  %v1197 = vunpack.c.l.b16 %v1173
  %v1198 = vunpack.c.l.b16 %v1174
  %v1199 = vpack.c.b16 %v1188, %v1187
  %v1200 = vpack.c.b16 %v1190, %v1189
  %v1201 = vpack.c.b16 %v1192, %v1191
  %v1202 = vpack.c.b16 %v1194, %v1193
  %v1203 = vpack.c.b16 %v1196, %v1195
  %v1204 = vpack.c.b16 %v1198, %v1197
  %vm1211 = vcmask 785408
  %v1213 = vsel %vm1211, %v1161, 0
  %v1216 = vsel %vm1211, %v1162, 0
  %1218 = vmatprep.subr.bf16.mxu0 0
  %1219 = vmatpush1.bf16.msra.mxu0 0
  %1220 = vmatprep.subr.bf16.mxu0 0
  %1221 = vmatpush1.bf16.msra.mxu0 0
  %1222 = vmatprep.subr.bf16.mxu0 0
  %1223 = vmatpush1.bf16.msra.mxu0 %v1204
  %1224 = vmatprep.subr.bf16.mxu0 0
  %1225 = vmatpush1.bf16.msra.mxu0 %v1203
  %1226 = vmatprep.subr.bf16.mxu0 0
  %1227 = vmatpush1.bf16.msra.mxu0 %v1202
  %1228 = vmatprep.subr.bf16.mxu0 0
  %1229 = vmatpush1.bf16.msra.mxu0 %v1201
  %1230 = vmatprep.subr.bf16.mxu0 0
  %1231 = vmatpush1.bf16.msra.mxu0 %v1200
  %1232 = vmatprep.subr.bf16.mxu0 0
  %1233 = vmatpush1.bf16.msra.mxu0 %v1199
  %1234 = vmatprep.subr.bf16.mxu0 0
  %1235 = vmatpush2.bf16.msra.mxu0 0
  %1236 = vmatprep.subr.bf16.mxu0 0
  %1237 = vmatpush2.bf16.msra.mxu0 0
  %1238 = vmatprep.subr.bf16.mxu0 0
  %1239 = vmatpush2.bf16.msra.mxu0 0
  %1240 = vmatprep.subr.bf16.mxu0 0
  %1241 = vmatpush2.bf16.msra.mxu0 0
  %1242 = vmatprep.subr.bf16.mxu0 0
  %1243 = vmatpush2.bf16.msra.mxu0 0
  %1244 = vmatprep.subr.bf16.mxu0 0
  %1245 = vmatpush2.bf16.msra.mxu0 0
  %1246 = vmatprep.subr.bf16.mxu0 0
  %1247 = vmatpush2.bf16.msra.mxu0 0
  %1248 = vmatprep.subr.bf16.mxu0 0
  %1249 = vmatpush2.bf16.msra.mxu0 0
  %1250 = vmatprep.mubr.bf16.mxu0 0
  %1251 = vmatmul.mubr.bf16.gmra.mxu0 %v1213
  %v1252 = vpop.f32.mrf.mxu0
  %v1253 = vadd.f32 %v963, %v1252
  %v1254 = vpop.f32.mrf.mxu0
  %v1255 = vpop.f32.mrf.mxu0
  %v1256 = vadd.f32 %v966, %v1255
  %v1257 = vpop.f32.mrf.mxu0
  %1258 = vmatprep.mubr.bf16.mxu0 0
  %1259 = vmatmul.mubr.bf16.gmra.mxu0 %v1216
  %v1260 = vpop.f32.mrf.mxu0
  %v1261 = vadd.f32 %v971, %v1260
  %v1262 = vpop.f32.mrf.mxu0
  %v1263 = vpop.f32.mrf.mxu0
  %v1264 = vadd.f32 %v974, %v1263
  %v1265 = vpop.f32.mrf.mxu0
  %1266 = vdwg.mxu0
  %v1268 = vlaneseq
  %v1269 = vshrl.u32 %v1268, 7
  %v1270 = vsub.s32 0, %v1269
  %v1271 = vrot.slane %v1077, %v1270
  %v1273 = vadd.f32 %v1253, %v1271
  %v1274 = vadd.f32 %v1256, %v1271
  %v1275 = vadd.f32 %v1261, %v1271
  %v1276 = vadd.f32 %v1264, %v1271
  %v1277 = vtanh.pop %v1273
  %v1278 = vtanh.pop %v1274
  %v1279 = vtanh.pop %v1275
  %v1280 = vtanh.pop %v1276
  %v1281 = vxor.u32 %v1273, 2147483648
  %v1282 = vxor.u32 %v1274, 2147483648
  %v1283 = vxor.u32 %v1275, 2147483648
  %v1284 = vxor.u32 %v1276, 2147483648
  %v1285 = vmul.f32 %v1281, 1.442695
  %v1286 = vpow.pop %v1285
  %v1287 = vmul.f32 %v1282, 1.442695
  %v1288 = vpow.pop %v1287
  %v1289 = vmul.f32 %v1283, 1.442695
  %v1290 = vpow.pop %v1289
  %v1291 = vmul.f32 %v1284, 1.442695
  %v1292 = vpow.pop %v1291
  %v1293 = vadd.f32 %v1286, 1.0
  %v1294 = vadd.f32 %v1288, 1.0
  %v1295 = vadd.f32 %v1290, 1.0
  %v1296 = vadd.f32 %v1292, 1.0
  %v1297 = vrcp.pop %v1293
  %v1298 = vmul.f32 1.0, %v1297
  %v1299 = vrcp.pop %v1294
  %v1300 = vmul.f32 1.0, %v1299
  %v1301 = vrcp.pop %v1295
  %v1302 = vmul.f32 1.0, %v1301
  %v1303 = vrcp.pop %v1296
  %v1304 = vmul.f32 1.0, %v1303
  %1309 = vrot.lane.b32.xlu0 %v1298, 96
  %v1310 = vpop.permute.xlu0 %1309
  %1311 = vrot.lane.b32.xlu0 %v1300, 96
  %v1312 = vpop.permute.xlu0 %1311
  %1313 = vrot.lane.b32.xlu0 %v1302, 96
  %v1314 = vpop.permute.xlu0 %1313
  %1315 = vrot.lane.b32.xlu0 %v1304, 96
  %v1316 = vpop.permute.xlu0 %1315
  %v1321 = vmul.f32 %v1277, %v1310
  %v1322 = vmul.f32 %v1278, %v1312
  %v1323 = vmul.f32 %v1279, %v1314
  %v1324 = vmul.f32 %v1280, %v1316
  %1326 = vset.pattern.permute.xlu0 5
  %1327 = vperm.xlu0 %1326, %v75
  %v1328 = vpop.permute.xlu0 %1327
  %1331 = vset.pattern.permute.xlu0 5
  %1332 = vperm.xlu0 %1331, %v76
  %v1333 = vpop.permute.xlu0 %1332
  %1336 = vset.pattern.permute.xlu0 5
  %1337 = vperm.xlu0 %1336, %v77
  %v1338 = vpop.permute.xlu0 %1337
  %1341 = vset.pattern.permute.xlu0 5
  %1342 = vperm.xlu0 %1341, %v78
  %v1343 = vpop.permute.xlu0 %1342
  %v1345 = vmul.f32 %v1321, %v1328
  %v1346 = vmul.f32 %v1322, %v1333
  %v1347 = vmul.f32 %v1323, %v1338
  %v1348 = vmul.f32 %v1324, %v1343
  %v1349 = vadd.f32 %v515, %v1345
  %v1350 = vadd.f32 %v516, %v1346
  %v1351 = vadd.f32 %v517, %v1347
  %v1352 = vadd.f32 %v518, %v1348
  %v1353 = vadd.f32 %v1345, 0.0
  %v1354 = vadd.f32 %v1346, 0.0
  %v1355 = vadd.f32 %v1347, 0.0
  %v1356 = vadd.f32 %v1348, 0.0
  %1357 = vrot.lane.b32.xlu0 %v1070, 96
  %v1358 = vpop.permute.xlu0 %1357
  %1359 = vrot.lane.b32.xlu0 %v1074, 96
  %v1360 = vpop.permute.xlu0 %1359
  %v1363 = vadd.f32 %v1349, %v1358
  %v1364 = vadd.f32 %v1350, %v1358
  %v1365 = vadd.f32 %v1351, %v1360
  %v1366 = vadd.f32 %v1352, %v1360
  %v1367 = vrot.slane %v1363, 6
  %v1368 = vrot.slane %v1364, 6
  %v1369 = vrot.slane %v1365, 6
  %v1370 = vrot.slane %v1366, 6
  %v1371 = vsel %vm1088, %v1369, %v1370
  %v1372 = vsel %vm1088, %v1368, %v1369
  %v1373 = vsel %vm1088, %v1367, %v1368
  %v1374 = vsel %vm1088, %v1370, %v1367
  %v1375 = vsel %vm1095, %v1374, 0.0
  %v1376 = vsel %vm1096, %v1373, 0.0
  %v1377 = vsel %vm1095, %v1372, 0.0
  %v1378 = vsel %vm1096, %v1371, 0.0
  %v1379 = vrot.slane %v1363, 2
  %v1380 = vrot.slane %v1364, 2
  %v1381 = vrot.slane %v1365, 2
  %v1382 = vrot.slane %v1366, 2
  %v1383 = vsel %vm1107, %v1381, %v1382
  %v1384 = vsel %vm1107, %v1380, %v1381
  %v1385 = vsel %vm1107, %v1379, %v1380
  %v1386 = vsel %vm1107, %v1382, %v1379
  %v1387 = vsel %vm1114, %v1385, 0.0
  %v1388 = vsel %vm1115, %v1384, 0.0
  %v1389 = vsel %vm1114, %v1383, 0.0
  %v1390 = vsel %vm1115, %v1386, 0.0
  %1395 = vrot.lane.b32.xlu0 %v1363, 32
  %v1396 = vpop.permute.xlu0 %1395
  %1397 = vrot.lane.b32.xlu0 %v1364, 32
  %v1398 = vpop.permute.xlu0 %1397
  %1399 = vrot.lane.b32.xlu0 %v1365, 32
  %v1400 = vpop.permute.xlu0 %1399
  %1401 = vrot.lane.b32.xlu0 %v1366, 32
  %v1402 = vpop.permute.xlu0 %1401
  %1411 = vrot.lane.b32.xlu0 %v1387, 64
  %v1412 = vpop.permute.xlu0 %1411
  %1413 = vrot.lane.b32.xlu0 %v1388, 64
  %v1414 = vpop.permute.xlu0 %1413
  %1415 = vrot.lane.b32.xlu0 %v1389, 64
  %v1416 = vpop.permute.xlu0 %1415
  %1417 = vrot.lane.b32.xlu0 %v1390, 64
  %v1418 = vpop.permute.xlu0 %1417
  %v1423 = vsel %vm144, %v1375, %v1396
  %v1424 = vsel %vm144, %v1376, %v1398
  %v1425 = vsel %vm144, %v1377, %v1400
  %v1426 = vsel %vm144, %v1378, %v1402
  %v1427 = vsel %vm1156, %v1423, %v1412
  %v1428 = vsel %vm1156, %v1424, %v1414
  %v1429 = vsel %vm1156, %v1425, %v1416
  %v1430 = vsel %vm1156, %v1426, %v1418
  %v1431 = vpack.c.bf16 %v1428, %v1427
  %v1432 = vpack.c.bf16 %v1430, %v1429
  %v1433 = vld [vmem:[%s5 + $0xf0] sm:$0xf]
  %v1434 = vld [vmem:[%s5 + $0xf4] sm:$0xf]
  %v1435 = vld [vmem:[%s5 + $0xf8] sm:$0xf]
  %v1436 = vld [vmem:[%s5 + $0xfc] sm:$0xf]
  %v1437 = vld [vmem:[%s5 + $0x100] sm:$0xf]
  %v1438 = vld [vmem:[%s5 + $0x104] sm:$0xf]
  %v1439 = vld [vmem:[%s5 + $0x108] sm:$0xf]
  %v1440 = vld [vmem:[%s5 + $0x10c] sm:$0xf]
  %v1441 = vld [vmem:[%s5 + $0x110] sm:$0xf]
  %v1442 = vld [vmem:[%s5 + $0x114] sm:$0xf]
  %v1443 = vld [vmem:[%s5 + $0x118] sm:$0xf]
  %v1444 = vld [vmem:[%s5 + $0x11c] sm:$0xf]
  %v1457 = vunpack.c.l.b16 %v1433
  %v1458 = vunpack.c.l.b16 %v1434
  %v1459 = vunpack.c.l.b16 %v1435
  %v1460 = vunpack.c.l.b16 %v1436
  %v1461 = vunpack.c.l.b16 %v1437
  %v1462 = vunpack.c.l.b16 %v1438
  %v1463 = vunpack.c.l.b16 %v1439
  %v1464 = vunpack.c.l.b16 %v1440
  %v1465 = vunpack.c.l.b16 %v1441
  %v1466 = vunpack.c.l.b16 %v1442
  %v1467 = vunpack.c.l.b16 %v1443
  %v1468 = vunpack.c.l.b16 %v1444
  %v1469 = vpack.c.b16 %v1458, %v1457
  %v1470 = vpack.c.b16 %v1460, %v1459
  %v1471 = vpack.c.b16 %v1462, %v1461
  %v1472 = vpack.c.b16 %v1464, %v1463
  %v1473 = vpack.c.b16 %v1466, %v1465
  %v1474 = vpack.c.b16 %v1468, %v1467
  %1485 = vrot.lane.b32.xlu0 %v963, 64
  %v1486 = vpop.permute.xlu0 %1485
  %1487 = vrot.lane.b32.xlu0 %v966, 64
  %v1488 = vpop.permute.xlu0 %1487
  %1489 = vrot.lane.b32.xlu0 %v971, 64
  %v1490 = vpop.permute.xlu0 %1489
  %1491 = vrot.lane.b32.xlu0 %v974, 64
  %v1492 = vpop.permute.xlu0 %1491
  %v1498 = vsel %vm1211, %v1431, 0
  %v1501 = vsel %vm1211, %v1432, 0
  %1503 = vmatprep.subr.bf16.mxu0 0
  %1504 = vmatpush1.bf16.msra.mxu0 0
  %1505 = vmatprep.subr.bf16.mxu0 0
  %1506 = vmatpush1.bf16.msra.mxu0 0
  %1507 = vmatprep.subr.bf16.mxu0 0
  %1508 = vmatpush1.bf16.msra.mxu0 %v1474
  %1509 = vmatprep.subr.bf16.mxu0 0
  %1510 = vmatpush1.bf16.msra.mxu0 %v1473
  %1511 = vmatprep.subr.bf16.mxu0 0
  %1512 = vmatpush1.bf16.msra.mxu0 %v1472
  %1513 = vmatprep.subr.bf16.mxu0 0
  %1514 = vmatpush1.bf16.msra.mxu0 %v1471
  %1515 = vmatprep.subr.bf16.mxu0 0
  %1516 = vmatpush1.bf16.msra.mxu0 %v1470
  %1517 = vmatprep.subr.bf16.mxu0 0
  %1518 = vmatpush1.bf16.msra.mxu0 %v1469
  %1519 = vmatprep.subr.bf16.mxu0 0
  %1520 = vmatpush2.bf16.msra.mxu0 0
  %1521 = vmatprep.subr.bf16.mxu0 0
  %1522 = vmatpush2.bf16.msra.mxu0 0
  %1523 = vmatprep.subr.bf16.mxu0 0
  %1524 = vmatpush2.bf16.msra.mxu0 0
  %1525 = vmatprep.subr.bf16.mxu0 0
  %1526 = vmatpush2.bf16.msra.mxu0 0
  %1527 = vmatprep.subr.bf16.mxu0 0
  %1528 = vmatpush2.bf16.msra.mxu0 0
  %1529 = vmatprep.subr.bf16.mxu0 0
  %1530 = vmatpush2.bf16.msra.mxu0 0
  %1531 = vmatprep.subr.bf16.mxu0 0
  %1532 = vmatpush2.bf16.msra.mxu0 0
  %1533 = vmatprep.subr.bf16.mxu0 0
  %1534 = vmatpush2.bf16.msra.mxu0 0
  %1535 = vmatprep.mubr.bf16.mxu0 0
  %1536 = vmatmul.mubr.bf16.gmra.mxu0 %v1498
  %v1537 = vpop.f32.mrf.mxu0
  %v1538 = vadd.f32 %v1486, %v1537
  %v1539 = vpop.f32.mrf.mxu0
  %v1540 = vpop.f32.mrf.mxu0
  %v1541 = vadd.f32 %v1488, %v1540
  %v1542 = vpop.f32.mrf.mxu0
  %1543 = vmatprep.mubr.bf16.mxu0 0
  %1544 = vmatmul.mubr.bf16.gmra.mxu0 %v1501
  %v1545 = vpop.f32.mrf.mxu0
  %v1546 = vadd.f32 %v1490, %v1545
  %v1547 = vpop.f32.mrf.mxu0
  %v1548 = vpop.f32.mrf.mxu0
  %v1549 = vadd.f32 %v1492, %v1548
  %v1550 = vpop.f32.mrf.mxu0
  %1551 = vdwg.mxu0
  %1552 = vrot.lane.b32.xlu0 %v1271, 64
  %v1553 = vpop.permute.xlu0 %1552
  %v1555 = vadd.f32 %v1538, %v1553
  %v1556 = vadd.f32 %v1541, %v1553
  %v1557 = vadd.f32 %v1546, %v1553
  %v1558 = vadd.f32 %v1549, %v1553
  %v1559 = vtanh.pop %v1555
  %v1560 = vtanh.pop %v1556
  %v1561 = vtanh.pop %v1557
  %v1562 = vtanh.pop %v1558
  %v1563 = vxor.u32 %v1555, 2147483648
  %v1564 = vxor.u32 %v1556, 2147483648
  %v1565 = vxor.u32 %v1557, 2147483648
  %v1566 = vxor.u32 %v1558, 2147483648
  %v1567 = vmul.f32 %v1563, 1.442695
  %v1568 = vpow.pop %v1567
  %v1569 = vmul.f32 %v1564, 1.442695
  %v1570 = vpow.pop %v1569
  %v1571 = vmul.f32 %v1565, 1.442695
  %v1572 = vpow.pop %v1571
  %v1573 = vmul.f32 %v1566, 1.442695
  %v1574 = vpow.pop %v1573
  %v1575 = vadd.f32 %v1568, 1.0
  %v1576 = vadd.f32 %v1570, 1.0
  %v1577 = vadd.f32 %v1572, 1.0
  %v1578 = vadd.f32 %v1574, 1.0
  %v1579 = vrcp.pop %v1575
  %v1580 = vmul.f32 1.0, %v1579
  %v1581 = vrcp.pop %v1576
  %v1582 = vmul.f32 1.0, %v1581
  %v1583 = vrcp.pop %v1577
  %v1584 = vmul.f32 1.0, %v1583
  %v1585 = vrcp.pop %v1578
  %v1586 = vmul.f32 1.0, %v1585
  %1591 = vrot.lane.b32.xlu0 %v1580, 96
  %v1592 = vpop.permute.xlu0 %1591
  %1593 = vrot.lane.b32.xlu0 %v1582, 96
  %v1594 = vpop.permute.xlu0 %1593
  %1595 = vrot.lane.b32.xlu0 %v1584, 96
  %v1596 = vpop.permute.xlu0 %1595
  %1597 = vrot.lane.b32.xlu0 %v1586, 96
  %v1598 = vpop.permute.xlu0 %1597
  %v1603 = vmul.f32 %v1559, %v1592
  %v1604 = vmul.f32 %v1560, %v1594
  %v1605 = vmul.f32 %v1561, %v1596
  %v1606 = vmul.f32 %v1562, %v1598
  %v1607 = vmul.f32 %v1603, %v1328
  %v1608 = vmul.f32 %v1604, %v1333
  %v1609 = vmul.f32 %v1605, %v1338
  %v1610 = vmul.f32 %v1606, %v1343
  %v1611 = vadd.f32 %v1353, %v1607
  %v1612 = vadd.f32 %v1354, %v1608
  %v1613 = vadd.f32 %v1355, %v1609
  %v1614 = vadd.f32 %v1356, %v1610
  %v1615 = vmul.f32 %v1611, 0.70710677
  %v1616 = vmul.f32 %v1612, 0.70710677
  %v1617 = vmul.f32 %v1613, 0.70710677
  %v1618 = vmul.f32 %v1614, 0.70710677
  %v1619 = vxor.u32 %v1615, 2147483648
  %v1620 = vxor.u32 %v1616, 2147483648
  %v1621 = vxor.u32 %v1617, 2147483648
  %v1622 = vxor.u32 %v1618, 2147483648
  %v1623 = vmul.f32 %v1619, 1.442695
  %v1624 = vpow.pop %v1623
  %v1625 = vmul.f32 %v1620, 1.442695
  %v1626 = vpow.pop %v1625
  %v1627 = vmul.f32 %v1621, 1.442695
  %v1628 = vpow.pop %v1627
  %v1629 = vmul.f32 %v1622, 1.442695
  %v1630 = vpow.pop %v1629
  %v1631 = vadd.f32 %v1624, 1.0
  %v1632 = vadd.f32 %v1626, 1.0
  %v1633 = vadd.f32 %v1628, 1.0
  %v1634 = vadd.f32 %v1630, 1.0
  %v1635 = vrcp.pop %v1631
  %v1636 = vmul.f32 1.0, %v1635
  %v1637 = vrcp.pop %v1632
  %v1638 = vmul.f32 1.0, %v1637
  %v1639 = vrcp.pop %v1633
  %v1640 = vmul.f32 1.0, %v1639
  %v1641 = vrcp.pop %v1634
  %v1642 = vmul.f32 1.0, %v1641
  %v1643 = vmul.f32 %v1615, %v1636
  %v1644 = vmul.f32 %v1616, %v1638
  %v1645 = vmul.f32 %v1617, %v1640
  %v1646 = vmul.f32 %v1618, %v1642
  %v1647 = vpack.c.bf16 %v1644, %v1643
  %v1648 = vpack.c.bf16 %v1646, %v1645
  %v1649 = vld [vmem:[%s5 + $0x130] sm:$0xf]
  %v1650 = vld [vmem:[%s5 + $0x134] sm:$0xf]
  %v1651 = vld [vmem:[%s5 + $0x138] sm:$0xf]
  %v1652 = vld [vmem:[%s5 + $0x13c] sm:$0xf]
  %v1653 = vld [vmem:[%s6 + $0xf] sm:$0x1]
  %v1655 = vlaneseq
  %v1656 = vshrl.u32 %v1655, 7
  %v1657 = vsub.s32 0, %v1656
  %v1658 = vrot.slane %v1653, %v1657
  %v1664 = vunpack.c.l.b16 %v1649
  %v1665 = vunpack.c.l.b16 %v1650
  %v1666 = vunpack.c.l.b16 %v1651
  %v1667 = vunpack.c.l.b16 %v1652
  %v1668 = vpack.c.b16 %v1665, %v1664
  %v1669 = vpack.c.b16 %v1667, %v1666
  %v1673 = vsel %vm144, %v1647, 0
  %v1676 = vsel %vm144, %v1648, 0
  %1678 = vmatprep.subr.bf16.mxu0 0
  %1679 = vmatpush1.bf16.msra.mxu0 0
  %1680 = vmatprep.subr.bf16.mxu0 0
  %1681 = vmatpush1.bf16.msra.mxu0 0
  %1682 = vmatprep.subr.bf16.mxu0 0
  %1683 = vmatpush1.bf16.msra.mxu0 0
  %1684 = vmatprep.subr.bf16.mxu0 0
  %1685 = vmatpush1.bf16.msra.mxu0 0
  %1686 = vmatprep.subr.bf16.mxu0 0
  %1687 = vmatpush1.bf16.msra.mxu0 0
  %1688 = vmatprep.subr.bf16.mxu0 0
  %1689 = vmatpush1.bf16.msra.mxu0 0
  %1690 = vmatprep.subr.bf16.mxu0 0
  %1691 = vmatpush1.bf16.msra.mxu0 %v1669
  %1692 = vmatprep.subr.bf16.mxu0 0
  %1693 = vmatpush1.bf16.msra.mxu0 %v1668
  %1694 = vmatprep.subr.bf16.mxu0 0
  %1695 = vmatpush2.bf16.msra.mxu0 0
  %1696 = vmatprep.subr.bf16.mxu0 0
  %1697 = vmatpush2.bf16.msra.mxu0 0
  %1698 = vmatprep.subr.bf16.mxu0 0
  %1699 = vmatpush2.bf16.msra.mxu0 0
  %1700 = vmatprep.subr.bf16.mxu0 0
  %1701 = vmatpush2.bf16.msra.mxu0 0
  %1702 = vmatprep.subr.bf16.mxu0 0
  %1703 = vmatpush2.bf16.msra.mxu0 0
  %1704 = vmatprep.subr.bf16.mxu0 0
  %1705 = vmatpush2.bf16.msra.mxu0 0
  %1706 = vmatprep.subr.bf16.mxu0 0
  %1707 = vmatpush2.bf16.msra.mxu0 0
  %1708 = vmatprep.subr.bf16.mxu0 0
  %1709 = vmatpush2.bf16.msra.mxu0 0
  %1710 = vmatprep.mubr.bf16.mxu0 0
  %1711 = vmatmul.mubr.bf16.gmra.mxu0 %v1673
  %v1712 = vpop.f32.mrf.mxu0
  %v1713 = vadd.f32 %v1658, %v1712
  %v1714 = vpop.f32.mrf.mxu0
  %v1715 = vpop.f32.mrf.mxu0
  %v1716 = vadd.f32 %v1658, %v1715
  %v1717 = vpop.f32.mrf.mxu0
  %1718 = vmatprep.mubr.bf16.mxu0 0
  %1719 = vmatmul.mubr.bf16.gmra.mxu0 %v1676
  %v1720 = vpop.f32.mrf.mxu0
  %v1721 = vadd.f32 %v1658, %v1720
  %v1722 = vpop.f32.mrf.mxu0
  %v1723 = vpop.f32.mrf.mxu0
  %v1724 = vadd.f32 %v1658, %v1723
  %v1725 = vpop.f32.mrf.mxu0
  %1726 = vdwg.mxu0
  %v1727 = vmul.f32 %v1713, %v1328
  %v1728 = vmul.f32 %v1716, %v1333
  %v1729 = vmul.f32 %v1721, %v1338
  %v1730 = vmul.f32 %v1724, %v1343
  %1731 = vset.pattern.permute.xlu0 3
  %1732 = vperm.xlu0 %1731, %v55
  %v1733 = vpop.permute.xlu0 %1732
  %1735 = vset.pattern.permute.xlu0 3
  %1736 = vperm.xlu0 %1735, %v59
  %v1737 = vpop.permute.xlu0 %1736
  %v1739 = vmul.f32 %v111, %v1733
  %v1740 = vmul.f32 %v112, %v1733
  %v1741 = vmul.f32 %v113, %v1737
  %v1742 = vmul.f32 %v114, %v1737
  %1743 = vset.pattern.permute.xlu0 4
  %1744 = vperm.xlu0 %1743, %v55
  %v1745 = vpop.permute.xlu0 %1744
  %1747 = vset.pattern.permute.xlu0 4
  %1748 = vperm.xlu0 %1747, %v59
  %v1749 = vpop.permute.xlu0 %1748
  %v1751 = vmul.f32 %v1727, %v1745
  %v1752 = vmul.f32 %v1728, %v1745
  %v1753 = vmul.f32 %v1729, %v1749
  %v1754 = vmul.f32 %v1730, %v1749
  %v1755 = vsub.f32 %v1739, %v1751
  %v1756 = vsub.f32 %v1740, %v1752
  %v1757 = vsub.f32 %v1741, %v1753
  %v1758 = vsub.f32 %v1742, %v1754
  %v1761 = vrot.slane %v1729, 7
  %vm1762 = vcmask 1041409
  %v1763 = vsel %vm1762, %v1761, %v1727
  %v1765 = vrot.slane %v1727, 1
  %v1766 = vsel %vm1762, %v1729, %v1765
  %1767 = vrot.lane.b32.xlu0 %v1766, 8
  %v1768 = vpop.permute.xlu0 %1767
  %v1770 = vrot.slane %v1727, 2
  %v1771 = vrot.slane %v1729, 1
  %v1772 = vsel %vm1762, %v1771, %v1770
  %1773 = vrot.lane.b32.xlu0 %v1772, 16
  %v1774 = vpop.permute.xlu0 %1773
  %v1776 = vrot.slane %v1727, 3
  %v1777 = vrot.slane %v1729, 2
  %v1778 = vsel %vm1762, %v1777, %v1776
  %1779 = vrot.lane.b32.xlu0 %v1778, 24
  %v1780 = vpop.permute.xlu0 %1779
  %v1782 = vrot.slane %v1727, 4
  %v1783 = vrot.slane %v1729, 3
  %v1784 = vsel %vm1762, %v1783, %v1782
  %1785 = vrot.lane.b32.xlu0 %v1784, 32
  %v1786 = vpop.permute.xlu0 %1785
  %v1788 = vrot.slane %v1727, 5
  %v1789 = vrot.slane %v1729, 4
  %v1790 = vsel %vm1762, %v1789, %v1788
  %1791 = vrot.lane.b32.xlu0 %v1790, 40
  %v1792 = vpop.permute.xlu0 %1791
  %v1794 = vrot.slane %v1727, 6
  %v1795 = vrot.slane %v1729, 5
  %v1796 = vsel %vm1762, %v1795, %v1794
  %1797 = vrot.lane.b32.xlu0 %v1796, 48
  %v1798 = vpop.permute.xlu0 %1797
  %v1800 = vrot.slane %v1727, 7
  %v1801 = vrot.slane %v1729, 6
  %v1802 = vsel %vm1762, %v1801, %v1800
  %1803 = vrot.lane.b32.xlu0 %v1802, 56
  %v1804 = vpop.permute.xlu0 %1803
  %v1808 = vrot.slane %v1730, 7
  %v1809 = vsel %vm1762, %v1808, %v1728
  %1810 = vrot.lane.b32.xlu0 %v1809, 64
  %v1811 = vpop.permute.xlu0 %1810
  %v1813 = vrot.slane %v1728, 1
  %v1814 = vsel %vm1762, %v1730, %v1813
  %1815 = vrot.lane.b32.xlu0 %v1814, 72
  %v1816 = vpop.permute.xlu0 %1815
  %v1818 = vrot.slane %v1728, 2
  %v1819 = vrot.slane %v1730, 1
  %v1820 = vsel %vm1762, %v1819, %v1818
  %1821 = vrot.lane.b32.xlu0 %v1820, 80
  %v1822 = vpop.permute.xlu0 %1821
  %v1824 = vrot.slane %v1728, 3
  %v1825 = vrot.slane %v1730, 2
  %v1826 = vsel %vm1762, %v1825, %v1824
  %1827 = vrot.lane.b32.xlu0 %v1826, 88
  %v1828 = vpop.permute.xlu0 %1827
  %v1830 = vrot.slane %v1728, 4
  %v1831 = vrot.slane %v1730, 3
  %v1832 = vsel %vm1762, %v1831, %v1830
  %1833 = vrot.lane.b32.xlu0 %v1832, 96
  %v1834 = vpop.permute.xlu0 %1833
  %v1836 = vrot.slane %v1728, 5
  %v1837 = vrot.slane %v1730, 4
  %v1838 = vsel %vm1762, %v1837, %v1836
  %1839 = vrot.lane.b32.xlu0 %v1838, 104
  %v1840 = vpop.permute.xlu0 %1839
  %v1842 = vrot.slane %v1728, 6
  %v1843 = vrot.slane %v1730, 5
  %v1844 = vsel %vm1762, %v1843, %v1842
  %1845 = vrot.lane.b32.xlu0 %v1844, 112
  %v1846 = vpop.permute.xlu0 %1845
  %v1848 = vrot.slane %v1728, 7
  %v1849 = vrot.slane %v1730, 6
  %v1850 = vsel %vm1762, %v1849, %v1848
  %1851 = vrot.lane.b32.xlu0 %v1850, 120
  %v1852 = vpop.permute.xlu0 %1851
  %v1854 = vsel %vm357, %v1763, %v1768
  %v1855 = vsel %vm540, %v1854, %v1774
  %vm1856 = vcmask 195584
  %v1857 = vsel %vm1856, %v1855, %v1780
  %v1858 = vsel %vm144, %v1857, %v1786
  %vm1859 = vcmask 326656
  %v1860 = vsel %vm1859, %v1858, %v1792
  %vm1861 = vcmask 392192
  %v1862 = vsel %vm1861, %v1860, %v1798
  %vm1863 = vcmask 457728
  %v1864 = vsel %vm1863, %v1862, %v1804
  %v1865 = vsel %vm1156, %v1864, %v1811
  %vm1866 = vcmask 588800
  %v1867 = vsel %vm1866, %v1865, %v1816
  %vm1868 = vcmask 654336
  %v1869 = vsel %vm1868, %v1867, %v1822
  %vm1870 = vcmask 719872
  %v1871 = vsel %vm1870, %v1869, %v1828
  %v1872 = vsel %vm1211, %v1871, %v1834
  %vm1873 = vcmask 850944
  %v1874 = vsel %vm1873, %v1872, %v1840
  %vm1875 = vcmask 916480
  %v1876 = vsel %vm1875, %v1874, %v1846
  %vm1877 = vcmask 982016
  %v1878 = vsel %vm1877, %v1876, %v1852
  %v1881 = vrot.slane %v1757, 7
  %v1882 = vsel %vm1762, %v1881, %v1755
  %v1884 = vrot.slane %v1755, 1
  %v1885 = vsel %vm1762, %v1757, %v1884
  %1886 = vrot.lane.b32.xlu0 %v1885, 8
  %v1887 = vpop.permute.xlu0 %1886
  %v1889 = vrot.slane %v1755, 2
  %v1890 = vrot.slane %v1757, 1
  %v1891 = vsel %vm1762, %v1890, %v1889
  %1892 = vrot.lane.b32.xlu0 %v1891, 16
  %v1893 = vpop.permute.xlu0 %1892
  %v1895 = vrot.slane %v1755, 3
  %v1896 = vrot.slane %v1757, 2
  %v1897 = vsel %vm1762, %v1896, %v1895
  %1898 = vrot.lane.b32.xlu0 %v1897, 24
  %v1899 = vpop.permute.xlu0 %1898
  %v1901 = vrot.slane %v1755, 4
  %v1902 = vrot.slane %v1757, 3
  %v1903 = vsel %vm1762, %v1902, %v1901
  %1904 = vrot.lane.b32.xlu0 %v1903, 32
  %v1905 = vpop.permute.xlu0 %1904
  %v1907 = vrot.slane %v1755, 5
  %v1908 = vrot.slane %v1757, 4
  %v1909 = vsel %vm1762, %v1908, %v1907
  %1910 = vrot.lane.b32.xlu0 %v1909, 40
  %v1911 = vpop.permute.xlu0 %1910
  %v1913 = vrot.slane %v1755, 6
  %v1914 = vrot.slane %v1757, 5
  %v1915 = vsel %vm1762, %v1914, %v1913
  %1916 = vrot.lane.b32.xlu0 %v1915, 48
  %v1917 = vpop.permute.xlu0 %1916
  %v1919 = vrot.slane %v1755, 7
  %v1920 = vrot.slane %v1757, 6
  %v1921 = vsel %vm1762, %v1920, %v1919
  %1922 = vrot.lane.b32.xlu0 %v1921, 56
  %v1923 = vpop.permute.xlu0 %1922
  %v1927 = vrot.slane %v1758, 7
  %v1928 = vsel %vm1762, %v1927, %v1756
  %1929 = vrot.lane.b32.xlu0 %v1928, 64
  %v1930 = vpop.permute.xlu0 %1929
  %v1932 = vrot.slane %v1756, 1
  %v1933 = vsel %vm1762, %v1758, %v1932
  %1934 = vrot.lane.b32.xlu0 %v1933, 72
  %v1935 = vpop.permute.xlu0 %1934
  %v1937 = vrot.slane %v1756, 2
  %v1938 = vrot.slane %v1758, 1
  %v1939 = vsel %vm1762, %v1938, %v1937
  %1940 = vrot.lane.b32.xlu0 %v1939, 80
  %v1941 = vpop.permute.xlu0 %1940
  %v1943 = vrot.slane %v1756, 3
  %v1944 = vrot.slane %v1758, 2
  %v1945 = vsel %vm1762, %v1944, %v1943
  %1946 = vrot.lane.b32.xlu0 %v1945, 88
  %v1947 = vpop.permute.xlu0 %1946
  %v1949 = vrot.slane %v1756, 4
  %v1950 = vrot.slane %v1758, 3
  %v1951 = vsel %vm1762, %v1950, %v1949
  %1952 = vrot.lane.b32.xlu0 %v1951, 96
  %v1953 = vpop.permute.xlu0 %1952
  %v1955 = vrot.slane %v1756, 5
  %v1956 = vrot.slane %v1758, 4
  %v1957 = vsel %vm1762, %v1956, %v1955
  %1958 = vrot.lane.b32.xlu0 %v1957, 104
  %v1959 = vpop.permute.xlu0 %1958
  %v1961 = vrot.slane %v1756, 6
  %v1962 = vrot.slane %v1758, 5
  %v1963 = vsel %vm1762, %v1962, %v1961
  %1964 = vrot.lane.b32.xlu0 %v1963, 112
  %v1965 = vpop.permute.xlu0 %1964
  %v1967 = vrot.slane %v1756, 7
  %v1968 = vrot.slane %v1758, 6
  %v1969 = vsel %vm1762, %v1968, %v1967
  %1970 = vrot.lane.b32.xlu0 %v1969, 120
  %v1971 = vpop.permute.xlu0 %1970
  %v1973 = vsel %vm357, %v1882, %v1887
  %v1974 = vsel %vm540, %v1973, %v1893
  %v1975 = vsel %vm1856, %v1974, %v1899
  %v1976 = vsel %vm144, %v1975, %v1905
  %v1977 = vsel %vm1859, %v1976, %v1911
  %v1978 = vsel %vm1861, %v1977, %v1917
  %v1979 = vsel %vm1863, %v1978, %v1923
  %v1980 = vsel %vm1156, %v1979, %v1930
  %v1981 = vsel %vm1866, %v1980, %v1935
  %v1982 = vsel %vm1868, %v1981, %v1941
  %v1983 = vsel %vm1870, %v1982, %v1947
  %v1984 = vsel %vm1211, %v1983, %v1953
  %v1985 = vsel %vm1873, %v1984, %v1959
  %v1986 = vsel %vm1875, %v1985, %v1965
  %v1987 = vsel %vm1877, %v1986, %v1971
  %v1990 = vcombine.low %v1878, %v1987
  %v1992 = vunpack.c.l.s4 1983009808
  %v1993 = vunpack.c.0.s8 %v1992
  %v1994 = vlaneseq
  %v1995 = vshrl.u32 %v1994, 7
  %v1996 = vsub.s32 %v1993, %v1995
  %v1997 = vrot.slane %v1990, %v1996
  %1999 = vst [vmem:[%s7] sm:$0xf] %v1997
  // Predicated region
  $region30: #{diffusion_forward.1} parent=0 // pred_check
    _
  $region31: #{diffusion_forward.1} parent=0 // pred_check_branch
    %2001 = sbr.rel (0) target = $region33
  $region32: #{diffusion_forward.1} parent=0 // pred_region
    _
  $region33: #{diffusion_forward.1} parent=0 // pred_fallthru
    _
  // Predicated region
  $region34: #{diffusion_forward.1} parent=0 // pred_check
    _
  $region35: #{diffusion_forward.1} parent=0 // pred_check_branch
    %2003 = sbr.rel (0) target = $region37
  $region36: #{diffusion_forward.1} parent=0 // pred_region
    _
  $region37: #{diffusion_forward.1} parent=0 // pred_fallthru
    _

</llo_original>
